<compile_context>
chip_gen: v7x
topology: tpu7x:2x2x1
jax: 0.10.0
libtpu: 0.0.40
codegen_flags: <defaults>
</compile_context>

<pallas_src>
import math
import functools

import jax
import jax.numpy as jnp
from jax.experimental import pallas as pl
from jax.experimental.pallas import tpu as pltpu

NEG = -1e30      # stand-in for -inf in additive attention / logit masks
LN_EPS = 1e-5    # nn.LayerNorm default


def _round_up(x, m):
    return ((x + m - 1) // m) * m


# ------------------- fused decoder-stack (+heads) kernel --------------------
#
# One grid step = one (batch-tile, layer) pair.  Layer axis is the inner,
# sequential ("arbitrary") axis; activations live in the xs_ref VMEM scratch
# across it.  At the last layer the combined output-head matmul runs and the
# lane-dense logits tile is written out.

def _decoder_stack_kernel(
        x_ref, keyb_ref, memkv_ref, memb_ref,
        sa_wqkv_ref, sa_bqkv_ref, sa_wo_ref, sa_bo_ref, n1g_ref, n1b_ref,
        ca_wq_ref, ca_bq_ref, ca_wo_ref, ca_bo_ref, n2g_ref, n2b_ref,
        w1_ref, b1_ref, w2_ref, b2_ref, n3g_ref, n3b_ref,
        wheads_ref,
        headlog_ref,
        xs_ref,
        *, n_head):
    l = pl.program_id(1)
    n_layers = pl.num_programs(1)
    bm, S, D = xs_ref.shape
    R = bm * S
    Dh = D // n_head
    scale = 1.0 / math.sqrt(Dh)

    # Load the assembled embeddings into the resident activation scratch once.
    @pl.when(l == 0)
    def _():
        xs_ref[...] = x_ref[...]

    def mm(a2d, w_ref, b_ref=None):
        # a2d: f32 (R, Din); w_ref block: (1, Din, Dout) bf16.  bf16 MXU, f32 acc.
        r = jax.lax.dot_general(
            a2d.astype(jnp.bfloat16), w_ref[0],
            dimension_numbers=(((1,), (0,)), ((), ())),
            preferred_element_type=jnp.float32)
        if b_ref is not None:
            r = r + b_ref[0]
        return r

    def layernorm(v, g_ref, b_ref):
        mu = jnp.mean(v, axis=-1, keepdims=True)
        var = jnp.mean(jnp.square(v - mu), axis=-1, keepdims=True)
        return (v - mu) * jax.lax.rsqrt(var + LN_EPS) * g_ref[0] + b_ref[0]

    def softmax(s):
        s = s - jnp.max(s, axis=-1, keepdims=True)
        p = jnp.exp(s)
        return p * pl.reciprocal(jnp.sum(p, axis=-1, keepdims=True), approx=True)

    # Per-head lane-selection masks (block-diagonal trick: keep every matmul
    # 128-lane dense by zeroing the other heads' lanes of K/V).
    lane = jax.lax.broadcasted_iota(jnp.int32, (1, D), 1)
    hsels = [(lane >= h * Dh) & (lane < (h + 1) * Dh) for h in range(n_head)]

    x = xs_ref[...]                        # (bm, S, D) f32, resident
    xf = x.reshape(R, D)

    # ---------------- self-attention (fused QKV over all bm*S rows) --------
    qkv = mm(xf, sa_wqkv_ref, sa_bqkv_ref)                       # (R, 3D)
    q3 = qkv[:, :D].astype(jnp.bfloat16).reshape(bm, S, D)
    k2 = qkv[:, D:2 * D]
    v2 = qkv[:, 2 * D:]

    # Additive mask built in-kernel: structural "first 3 columns except the
    # 3x3 diagonal" pattern + per-batch key-padding bias (no (M,S,S) HBM I/O).
    rr = jax.lax.broadcasted_iota(jnp.int32, (S, S), 0)
    cc = jax.lax.broadcasted_iota(jnp.int32, (S, S), 1)
    struct = jnp.where((cc < 3) & (rr != cc), NEG, 0.0)          # (S, S)
    mask_add = struct[None, :, :] + keyb_ref[...][:, None, :]    # (bm, S, S)

    ctx = None
    for h in range(n_head):
        kh = jnp.where(hsels[h], k2, 0.0).astype(jnp.bfloat16).reshape(bm, S, D)
        vh = jnp.where(hsels[h], v2, 0.0).astype(jnp.bfloat16).reshape(bm, S, D)
        s = jnp.einsum('bqd,bkd->bqk', q3, kh,
                       preferred_element_type=jnp.float32) * scale
        p = softmax(s + mask_add)
        oh = jnp.einsum('bqk,bkd->bqd', p.astype(jnp.bfloat16), vh,
                        preferred_element_type=jnp.float32)
        ctx = oh if ctx is None else ctx + oh
    x1 = layernorm(xf + mm(ctx.reshape(R, D), sa_wo_ref, sa_bo_ref),
                   n1g_ref, n1b_ref)

    # ---------------- cross-attention (K/V precomputed per layer) ----------
    memkv = memkv_ref[0]                                         # (N, 2D) f32
    mk = memkv[:, :D]
    mv = memkv[:, D:]
    qc = mm(x1, ca_wq_ref, ca_bq_ref).astype(jnp.bfloat16)       # (R, D)
    ctx2 = None
    for h in range(n_head):
        kh = jnp.where(hsels[h], mk, 0.0).astype(jnp.bfloat16)   # (N, D)
        vh = jnp.where(hsels[h], mv, 0.0).astype(jnp.bfloat16)
        s = jax.lax.dot_general(
            qc, kh, dimension_numbers=(((1,), (1,)), ((), ())),
            preferred_element_type=jnp.float32) * scale          # (R, N)
        p = softmax(s + memb_ref[...])
        oh = jax.lax.dot_general(
            p.astype(jnp.bfloat16), vh,
            dimension_numbers=(((1,), (0,)), ((), ())),
            preferred_element_type=jnp.float32)                  # (R, D)
        ctx2 = oh if ctx2 is None else ctx2 + oh
    x2 = layernorm(x1 + mm(ctx2, ca_wo_ref, ca_bo_ref), n2g_ref, n2b_ref)

    # ---------------- feed-forward ------------------------------------------
    h1 = jnp.maximum(mm(x2, w1_ref, b1_ref), 0.0)
    x3 = layernorm(x2 + mm(h1, w2_ref, b2_ref), n3g_ref, n3b_ref)

    xs_ref[...] = x3.reshape(bm, S, D)

    # ---------------- output heads (last layer only) ------------------------
    # Single lane-dense combined matmul: columns [value | policy | index | 0].
    @pl.when(l == n_layers - 1)
    def _():
        K = wheads_ref.shape[1]
        logits = jax.lax.dot_general(
            x3.astype(jnp.bfloat16), wheads_ref[...],
            dimension_numbers=(((1,), (0,)), ((), ())),
            preferred_element_type=jnp.float32)                  # (R, K)
        headlog_ref[...] = logits.reshape(bm, S, K)


def decoder_stack(x, key_bias, mem_kv, mem_bias, prep, cfg):
    M, S_pad, D = x.shape
    n_layers = cfg["n_layers"]
    n_head = cfg["n_head"]
    K = prep["wheads"].shape[1]
    N_pad = mem_kv.shape[1]
    d_ff = prep["w1"].shape[2]
    bm = M  # TODO(synk): tile the batch (bm multiple of 8) for large M.

    lmap = lambda b, l: (l, 0, 0)       # per-layer stacked weights
    bmap3 = lambda b, l: (b, 0, 0)      # per-batch-tile 3D
    bmap2 = lambda b, l: (b, 0)         # per-batch-tile 2D
    cmap2 = lambda b, l: (0, 0)         # constant 2D

    in_specs = [
        pl.BlockSpec((bm, S_pad, D), bmap3),          # x (assembled embeddings)
        pl.BlockSpec((bm, S_pad), bmap2),             # key-padding bias
        pl.BlockSpec((1, N_pad, 2 * D), lmap),        # per-layer cross K/V
        pl.BlockSpec((1, N_pad), cmap2),              # memory padding bias
        pl.BlockSpec((1, D, 3 * D), lmap),            # sa_wqkv
        pl.BlockSpec((1, 1, 3 * D), lmap),            # sa_bqkv
        pl.BlockSpec((1, D, D), lmap),                # sa_wo
        pl.BlockSpec((1, 1, D), lmap),                # sa_bo
        pl.BlockSpec((1, 1, D), lmap),                # n1g
        pl.BlockSpec((1, 1, D), lmap),                # n1b
        pl.BlockSpec((1, D, D), lmap),                # ca_wq
        pl.BlockSpec((1, 1, D), lmap),                # ca_bq
        pl.BlockSpec((1, D, D), lmap),                # ca_wo
        pl.BlockSpec((1, 1, D), lmap),                # ca_bo
        pl.BlockSpec((1, 1, D), lmap),                # n2g
        pl.BlockSpec((1, 1, D), lmap),                # n2b
        pl.BlockSpec((1, D, d_ff), lmap),             # w1
        pl.BlockSpec((1, 1, d_ff), lmap),             # b1
        pl.BlockSpec((1, d_ff, D), lmap),             # w2
        pl.BlockSpec((1, 1, D), lmap),                # b2
        pl.BlockSpec((1, 1, D), lmap),                # n3g
        pl.BlockSpec((1, 1, D), lmap),                # n3b
        pl.BlockSpec((D, K), cmap2),                  # combined head weight
    ]
    args = (x, key_bias, mem_kv, mem_bias,
            prep["sa_wqkv"], prep["sa_bqkv"], prep["sa_wo"], prep["sa_bo"],
            prep["n1g"], prep["n1b"],
            prep["ca_wq"], prep["ca_bq"], prep["ca_wo"], prep["ca_bo"],
            prep["n2g"], prep["n2b"],
            prep["w1"], prep["b1"], prep["w2"], prep["b2"],
            prep["n3g"], prep["n3b"],
            prep["wheads"])

    return pl.pallas_call(
        functools.partial(_decoder_stack_kernel, n_head=n_head),
        out_shape=jax.ShapeDtypeStruct((M, S_pad, K), jnp.float32),
        grid_spec=pltpu.PrefetchScalarGridSpec(
            num_scalar_prefetch=0,
            grid=(M // bm, n_layers),
            in_specs=in_specs,
            out_specs=pl.BlockSpec((bm, S_pad, K), bmap3),
            scratch_shapes=[pltpu.VMEM((bm, S_pad, D), jnp.float32)]),
        compiler_params=pltpu.CompilerParams(
            dimension_semantics=("parallel", "arbitrary"),
            vmem_limit_bytes=32 * 1024 * 1024),
    )(*args)


# ------------------------------ model pieces -------------------------------

def sinusoidal_pe(max_len, d):
    pos = jnp.arange(max_len, dtype=jnp.float32)[:, None]
    div = jnp.exp(jnp.arange(0, d, 2, dtype=jnp.float32)
                  * (-math.log(10000.0) / d))
    pe = jnp.zeros((max_len, d), jnp.float32)
    pe = pe.at[:, 0::2].set(jnp.sin(pos * div))
    pe = pe.at[:, 1::2].set(jnp.cos(pos * div))
    return pe


def ndformer_forward(prep, cfg, data_emb, expr_ids, parents, types,
                     valid_policy=None):
    """Equivalent of NDformer.forward(..., data_emb=data_emb).

    data_emb: (N, d_emb); expr_ids/parents/types: (M, L) int32.
    Returns (value (M,), policy softmax (M, n_words), index softmax (M, max_seq_len)).
    """
    d = cfg["d_emb"]
    nw, ms = cfg["n_words"], cfg["max_seq_len"]
    M, L = expr_ids.shape
    S = L + 3
    S_pad = _round_up(S, 16)

    tok_w = prep["token_embedding"]     # (n_words, d) f32
    idx_w = prep["index_embedding"]     # (max_seq_len, d) f32

    # ----- Decoder input assembly (glue, plain JAX) -----
    q_ids = jnp.array([cfg["query_value"], cfg["query_policy"],
                       cfg["query_index"]], jnp.int32)
    expr_q = jnp.concatenate(
        [jnp.broadcast_to(q_ids[None, :], (M, 3)), expr_ids], axis=1)   # (M, S)

    head_emb = jnp.take(tok_w, expr_q[:, :3], axis=0)                   # (M,3,d)
    tail_emb = jnp.take(tok_w, expr_ids, axis=0)                        # (M,L,d)
    tail_emb = tail_emb + jnp.take(idx_w, parents, axis=0)              # aux: parents
    tail_emb = tail_emb + jnp.take(tok_w, types, axis=0)                # aux: types
    tail_emb = tail_emb + sinusoidal_pe(L, d)[None, :, :]               # PE on [:,3:]
    x = jnp.concatenate([head_emb, tail_emb], axis=1).astype(jnp.float32)
    x = jnp.pad(x, ((0, 0), (0, S_pad - S), (0, 0)))                    # (M,S_pad,d)

    # Key-padding additive bias only (full (M,S,S) mask is rebuilt in-kernel).
    kpm = jnp.pad(expr_q == cfg["pad_id"], ((0, 0), (0, S_pad - S)),
                  constant_values=True)
    key_bias = jnp.where(kpm, NEG, 0.0).astype(jnp.float32)             # (M,S_pad)

    # Memory (shared across the batch), padded + masked for the pad rows.
    N = data_emb.shape[0]
    N_pad = _round_up(N, 8)
    mem = jnp.pad(data_emb.astype(jnp.float32), ((0, N_pad - N), (0, 0)))
    mem_bias = jnp.where(jnp.arange(N_pad) >= N, NEG, 0.0
                         ).astype(jnp.float32)[None, :]                 # (1,N_pad)

    # Batch-invariant cross-attention K/V, precomputed once per layer.
    mem_kv = jnp.einsum('nd,lde->lne', mem.astype(jnp.bfloat16),
                        prep["ca_wkv"],
                        preferred_element_type=jnp.float32) + prep["ca_bkv"]

    # ----- one fused Pallas kernel: decoder stack + lane-dense head logits --
    headlog = decoder_stack(x, key_bias, mem_kv, mem_bias, prep, cfg)

    # ----- tiny epilogue: split combined logits, mask, softmax (plain JAX) --
    value = headlog[:, 0, 0] + prep["value_head_b"][0]                  # (M,)
    pol_logits = headlog[:, 1, 1:1 + nw]                                # (M,nw)
    idx_logits = headlog[:, 2, 1 + nw:1 + nw + ms]                      # (M,ms)

    if valid_policy is None:
        valid_policy = jnp.ones((M, nw), dtype=bool)
    valid_index = jnp.zeros((M, ms), dtype=bool)
    valid_index = valid_index.at[:, :L].set(
        (expr_ids == cfg["ph_node"]) | (expr_ids == cfg["ph_edge"]))

    # NOTE: a row with zero valid entries yields a uniform distribution over
    # the (invalid) positions rather than PyTorch's NaN.
    policy = jax.nn.softmax(jnp.where(valid_policy, pol_logits, NEG), axis=-1)
    index = jax.nn.softmax(jnp.where(valid_index, idx_logits, NEG), axis=-1)
    return value, policy, index


# ----------------------------- parameter init ------------------------------

def init_params(key, cfg):
    d = cfg["d_emb"]
    d_ff = 4 * d
    keys = iter(jax.random.split(key, 256))

    def rnd(shape, scale=0.02):
        return (scale * jax.random.normal(next(keys), shape)).astype(jnp.float32)

    def attn_params():
        return dict(in_proj_weight=rnd((3 * d, d)), in_proj_bias=rnd((3 * d,)),
                    out_proj_weight=rnd((d, d)), out_proj_bias=rnd((d,)))

    layers = []
    for _ in range(cfg["n_layers"]):
        layers.append(dict(
            self_attn=attn_params(),
            cross_attn=attn_params(),
            lin1_w=rnd((d_ff, d)), lin1_b=rnd((d_ff,)),
            lin2_w=rnd((d, d_ff)), lin2_b=rnd((d,)),
            norm1_w=jnp.ones((d,), jnp.float32), norm1_b=jnp.zeros((d,), jnp.float32),
            norm2_w=jnp.ones((d,), jnp.float32), norm2_b=jnp.zeros((d,), jnp.float32),
            norm3_w=jnp.ones((d,), jnp.float32), norm3_b=jnp.zeros((d,), jnp.float32),
        ))

    return dict(
        token_embedding=rnd((cfg["n_words"], d), 1.0),
        index_embedding=rnd((cfg["max_seq_len"], d), 1.0),
        value_head_w=rnd((1, d)), value_head_b=rnd((1,)),
        layers=layers,
    )


def prepare_params(params, cfg):
    """One-time host-side prep: transpose weights to (Din, Dout) bf16 for the
    MXU, stack per-layer params along a leading layer axis for the layer grid,
    reshape biases / norm params to (L, 1, Dout) f32, and build the combined
    lane-dense output-head weight [value | policy | index | 0-pad]."""
    d = cfg["d_emb"]
    nw, ms = cfg["n_words"], cfg["max_seq_len"]
    bf, f32 = jnp.bfloat16, jnp.float32

    def t(w):  # PyTorch (out, in) -> (in, out), bf16
        return jnp.asarray(w, f32).T.astype(bf)

    def stack(fn):
        return jnp.stack([fn(lp) for lp in params["layers"]], axis=0)

    prep = dict(
        token_embedding=params["token_embedding"].astype(f32),
        index_embedding=params["index_embedding"].astype(f32),
        sa_wqkv=stack(lambda lp: t(lp["self_attn"]["in_proj_weight"])),            # (L,d,3d)
        sa_bqkv=stack(lambda lp: lp["self_attn"]["in_proj_bias"].reshape(1, 3 * d).astype(f32)),
        sa_wo=stack(lambda lp: t(lp["self_attn"]["out_proj_weight"])),             # (L,d,d)
        sa_bo=stack(lambda lp: lp["self_attn"]["out_proj_bias"].reshape(1, d).astype(f32)),
        n1g=stack(lambda lp: lp["norm1_w"].reshape(1, d).astype(f32)),
        n1b=stack(lambda lp: lp["norm1_b"].reshape(1, d).astype(f32)),
        ca_wq=stack(lambda lp: t(lp["cross_attn"]["in_proj_weight"][:d])),         # (L,d,d)
        ca_bq=stack(lambda lp: lp["cross_attn"]["in_proj_bias"][:d].reshape(1, d).astype(f32)),
        ca_wkv=stack(lambda lp: t(lp["cross_attn"]["in_proj_weight"][d:])),        # (L,d,2d)
        ca_bkv=stack(lambda lp: lp["cross_attn"]["in_proj_bias"][d:].reshape(1, 2 * d).astype(f32)),
        ca_wo=stack(lambda lp: t(lp["cross_attn"]["out_proj_weight"])),
        ca_bo=stack(lambda lp: lp["cross_attn"]["out_proj_bias"].reshape(1, d).astype(f32)),
        n2g=stack(lambda lp: lp["norm2_w"].reshape(1, d).astype(f32)),
        n2b=stack(lambda lp: lp["norm2_b"].reshape(1, d).astype(f32)),
        w1=stack(lambda lp: t(lp["lin1_w"])),                                      # (L,d,4d)
        b1=stack(lambda lp: lp["lin1_b"].reshape(1, -1).astype(f32)),
        w2=stack(lambda lp: t(lp["lin2_w"])),                                      # (L,4d,d)
        b2=stack(lambda lp: lp["lin2_b"].reshape(1, d).astype(f32)),
        n3g=stack(lambda lp: lp["norm3_w"].reshape(1, d).astype(f32)),
        n3b=stack(lambda lp: lp["norm3_b"].reshape(1, d).astype(f32)),
        value_head_b=params["value_head_b"].astype(f32),
    )

    # Combined lane-dense head weight: col 0 = value, cols 1..1+nw = policy
    # (token embedding), cols 1+nw..1+nw+ms = index (index embedding).
    K = max(128, _round_up(1 + nw + ms, 128))
    wcomb = jnp.zeros((d, K), f32)
    wcomb = wcomb.at[:, 0].set(jnp.asarray(params["value_head_w"], f32)[0])
    wcomb = wcomb.at[:, 1:1 + nw].set(params["token_embedding"].astype(f32).T)
    wcomb = wcomb.at[:, 1 + nw:1 + nw + ms].set(params["index_embedding"].astype(f32).T)
    prep["wheads"] = wcomb.astype(bf)
    return prep


# --------------------------------- main ------------------------------------

if __name__ == "__main__":
    cfg = dict(
        d_emb=128,          # n_head = d_emb // 64 = 2 (as in the module)
        n_head=2,
        n_words=32,
        max_seq_len=16,
        n_layers=2,         # n_transformer_decoder_layers
        pad_id=0, query_value=1, query_policy=2, query_index=3,
        ph_node=4, ph_edge=5, sos=6, eos=7,
    )

    key = jax.random.PRNGKey(0)
    pkey, dkey = jax.random.split(key)
    params = init_params(pkey, cfg)
    prep = prepare_params(params, cfg)

    M, L, N = 2, 8, 8                              # batch, expr length, #data samples
    data_emb = jax.random.normal(dkey, (N, cfg["d_emb"]), jnp.float32)

    # expr_ids: sos, root-type token, body (with node/edge placeholders), eos, pad
    expr_ids = jnp.array([[6, 8, 10,  4,  5,  7, 0, 0],
                          [6, 8, 11, 12,  4, 13, 5, 7]], jnp.int32)
    parents = jnp.array([[0, 0, 1, 2, 2, 0, 0, 0],
                         [0, 0, 1, 2, 3, 3, 2, 0]], jnp.int32)
    types = jnp.array([[6, 8, 4, 4, 5, 7, 0, 0],
                       [6, 8, 4, 4, 4, 4, 5, 7]], jnp.int32)

    @jax.jit
    def fwd(prep_, data_emb_, expr_ids_, parents_, types_):
        return ndformer_forward(prep_, cfg, data_emb_, expr_ids_, parents_, types_)

    value, policy, index = fwd(prep, data_emb, expr_ids, parents, types)
    jax.block_until_ready((value, policy, index))

    assert value.shape == (M,)
    assert policy.shape == (M, cfg["n_words"])
    assert index.shape == (M, cfg["max_seq_len"])
    assert bool(jnp.all(jnp.isfinite(value)))
    assert bool(jnp.all(jnp.isfinite(policy))) and bool(jnp.all(jnp.isfinite(index)))
    assert bool(jnp.all(jnp.abs(jnp.sum(policy, axis=-1) - 1.0) < 1e-3))
    assert bool(jnp.all(jnp.abs(jnp.sum(index, axis=-1) - 1.0) < 1e-3))
    print("KERNEL_OK")
</pallas_src>

<mosaic_0001>
module attributes {stable_mosaic.version = 11 : i64} {
  func.func @_decoder_stack_kernel(%arg0: i32, %arg1: i32, %arg2: memref<2x16x128xf32, #tpu.memory_space<vmem>>, %arg3: memref<2x16xf32, #tpu.memory_space<vmem>>, %arg4: memref<1x8x256xf32, #tpu.memory_space<vmem>>, %arg5: memref<1x8xf32, #tpu.memory_space<vmem>>, %arg6: memref<1x128x384xbf16, #tpu.memory_space<vmem>>, %arg7: memref<1x1x384xf32, #tpu.memory_space<vmem>>, %arg8: memref<1x128x128xbf16, #tpu.memory_space<vmem>>, %arg9: memref<1x1x128xf32, #tpu.memory_space<vmem>>, %arg10: memref<1x1x128xf32, #tpu.memory_space<vmem>>, %arg11: memref<1x1x128xf32, #tpu.memory_space<vmem>>, %arg12: memref<1x128x128xbf16, #tpu.memory_space<vmem>>, %arg13: memref<1x1x128xf32, #tpu.memory_space<vmem>>, %arg14: memref<1x128x128xbf16, #tpu.memory_space<vmem>>, %arg15: memref<1x1x128xf32, #tpu.memory_space<vmem>>, %arg16: memref<1x1x128xf32, #tpu.memory_space<vmem>>, %arg17: memref<1x1x128xf32, #tpu.memory_space<vmem>>, %arg18: memref<1x128x512xbf16, #tpu.memory_space<vmem>>, %arg19: memref<1x1x512xf32, #tpu.memory_space<vmem>>, %arg20: memref<1x512x128xbf16, #tpu.memory_space<vmem>>, %arg21: memref<1x1x128xf32, #tpu.memory_space<vmem>>, %arg22: memref<1x1x128xf32, #tpu.memory_space<vmem>>, %arg23: memref<1x1x128xf32, #tpu.memory_space<vmem>>, %arg24: memref<128x128xbf16, #tpu.memory_space<vmem>>, %arg25: memref<2x16x128xf32, #tpu.memory_space<vmem>>, %arg26: memref<2x16x128xf32, #tpu.memory_space<vmem>>) attributes {dimension_semantics = [#tpu.dimension_semantics<parallel>, #tpu.dimension_semantics<arbitrary>], iteration_bounds = array<i64: 1, 2>, scalar_prefetch = 0 : i64, scratch_operands = 1 : i64, tpu.core_type = #tpu.core_type<tc>, window_params = [{transform_indices = @transform_0, window_bounds = array<i64: 2, 16, 128>}, {transform_indices = @transform_1, window_bounds = array<i64: 2, 16>}, {transform_indices = @transform_2, window_bounds = array<i64: 1, 8, 256>}, {pipeline_mode = #tpu.pipeline_mode<synchronous>, transform_indices = @transform_3, window_bounds = array<i64: 1, 8>}, {transform_indices = @transform_4, window_bounds = array<i64: 1, 128, 384>}, {transform_indices = @transform_5, window_bounds = array<i64: 1, 1, 384>}, {transform_indices = @transform_6, window_bounds = array<i64: 1, 128, 128>}, {transform_indices = @transform_7, window_bounds = array<i64: 1, 1, 128>}, {transform_indices = @transform_8, window_bounds = array<i64: 1, 1, 128>}, {transform_indices = @transform_9, window_bounds = array<i64: 1, 1, 128>}, {transform_indices = @transform_10, window_bounds = array<i64: 1, 128, 128>}, {transform_indices = @transform_11, window_bounds = array<i64: 1, 1, 128>}, {transform_indices = @transform_12, window_bounds = array<i64: 1, 128, 128>}, {transform_indices = @transform_13, window_bounds = array<i64: 1, 1, 128>}, {transform_indices = @transform_14, window_bounds = array<i64: 1, 1, 128>}, {transform_indices = @transform_15, window_bounds = array<i64: 1, 1, 128>}, {transform_indices = @transform_16, window_bounds = array<i64: 1, 128, 512>}, {transform_indices = @transform_17, window_bounds = array<i64: 1, 1, 512>}, {transform_indices = @transform_18, window_bounds = array<i64: 1, 512, 128>}, {transform_indices = @transform_19, window_bounds = array<i64: 1, 1, 128>}, {transform_indices = @transform_20, window_bounds = array<i64: 1, 1, 128>}, {transform_indices = @transform_21, window_bounds = array<i64: 1, 1, 128>}, {pipeline_mode = #tpu.pipeline_mode<synchronous>, transform_indices = @transform_22, window_bounds = array<i64: 128, 128>}, {transform_indices = @transform_23, window_bounds = array<i64: 2, 16, 128>}]} {
    %c0_i32 = arith.constant 0 : i32
    %0 = arith.cmpi eq, %arg1, %c0_i32 : i32
    %1 = arith.extui %0 : i1 to i32
    %c0_i32_0 = arith.constant 0 : i32
    %2 = arith.cmpi ne, %1, %c0_i32_0 : i32
    scf.if %2 {
      %c0_123 = arith.constant 0 : index
      %c0_124 = arith.constant 0 : index
      %c0_125 = arith.constant 0 : index
      %292 = vector.load %arg2[%c0_123, %c0_124, %c0_125] : memref<2x16x128xf32, #tpu.memory_space<vmem>>, vector<2x16x128xf32>
      %c0_126 = arith.constant 0 : index
      %c0_127 = arith.constant 0 : index
      %c0_128 = arith.constant 0 : index
      %293 = vector.load %arg26[%c0_126, %c0_127, %c0_128] : memref<2x16x128xf32, #tpu.memory_space<vmem>>, vector<2x16x128xf32>
      tpu.vector_store %arg26[%c0_126, %c0_127, %c0_128], %292 {strides = array<i32>} : memref<2x16x128xf32, #tpu.memory_space<vmem>>, vector<2x16x128xf32>,
    } else {
    }
    %3 = tpu.iota {dimensions = array<i32: 1>} : vector<1x128xi32>
    %c0_i32_1 = arith.constant 0 : i32
    %4 = vector.broadcast %c0_i32_1 : i32 to vector<1x128xi32>
    %5 = arith.cmpi sge, %3, %4 : vector<1x128xi32>
    %c64_i32 = arith.constant 64 : i32
    %6 = vector.broadcast %c64_i32 : i32 to vector<1x128xi32>
    %7 = arith.cmpi slt, %3, %6 : vector<1x128xi32>
    %8 = arith.andi %5, %7 : vector<1x128xi1>
    %c64_i32_2 = arith.constant 64 : i32
    %9 = vector.broadcast %c64_i32_2 : i32 to vector<1x128xi32>
    %10 = arith.cmpi sge, %3, %9 : vector<1x128xi32>
    %c128_i32 = arith.constant 128 : i32
    %11 = vector.broadcast %c128_i32 : i32 to vector<1x128xi32>
    %12 = arith.cmpi slt, %3, %11 : vector<1x128xi32>
    %13 = arith.andi %10, %12 : vector<1x128xi1>
    %c0 = arith.constant 0 : index
    %c0_3 = arith.constant 0 : index
    %c0_4 = arith.constant 0 : index
    %14 = vector.load %arg26[%c0, %c0_3, %c0_4] : memref<2x16x128xf32, #tpu.memory_space<vmem>>, vector<2x16x128xf32>
    %15 = vector.shape_cast %14 : vector<2x16x128xf32> to vector<32x128xf32>
    %16 = arith.truncf %15 : vector<32x128xf32> to vector<32x128xbf16>
    %c0_5 = arith.constant 0 : index
    %c0_6 = arith.constant 0 : index
    %c0_7 = arith.constant 0 : index
    %17 = vector.load %arg6[%c0_5, %c0_6, %c0_7] : memref<1x128x384xbf16, #tpu.memory_space<vmem>>, vector<1x128x384xbf16>
    %18 = vector.shape_cast %17 : vector<1x128x384xbf16> to vector<128x384xbf16>
    %cst = arith.constant dense<0.000000e+00> : vector<32x384xf32>
    %19 = tpu.matmul %16, %18, %cst {dimension_numbers = #tpu.dot_dimension_numbers<[1], [0], [0], [1], [0, 0, 1, 1], [], []>} : vector<32x128xbf16>, vector<128x384xbf16>, vector<32x384xf32> -> vector<32x384xf32>
    %c0_8 = arith.constant 0 : index
    %c0_9 = arith.constant 0 : index
    %c0_10 = arith.constant 0 : index
    %20 = vector.load %arg7[%c0_8, %c0_9, %c0_10] : memref<1x1x384xf32, #tpu.memory_space<vmem>>, vector<1x1x384xf32>
    %21 = vector.shape_cast %20 : vector<1x1x384xf32> to vector<1x384xf32>
    %22 = vector.broadcast %21 : vector<1x384xf32> to vector<32x384xf32>
    %23 = arith.addf %19, %22 : vector<32x384xf32>
    %24 = vector.extract_strided_slice %23 {offsets = [0, 0], sizes = [32, 128], strides = [1, 1]} : vector<32x384xf32> to vector<32x128xf32>
    %25 = arith.truncf %24 : vector<32x128xf32> to vector<32x128xbf16>
    %26 = vector.shape_cast %25 : vector<32x128xbf16> to vector<2x16x128xbf16>
    %27 = vector.extract_strided_slice %23 {offsets = [0, 128], sizes = [32, 128], strides = [1, 1]} : vector<32x384xf32> to vector<32x128xf32>
    %28 = vector.extract_strided_slice %23 {offsets = [0, 256], sizes = [32, 128], strides = [1, 1]} : vector<32x384xf32> to vector<32x128xf32>
    %29 = tpu.iota {dimensions = array<i32: 0>} : vector<16x16xi32>
    %30 = tpu.iota {dimensions = array<i32: 1>} : vector<16x16xi32>
    %c3_i32 = arith.constant 3 : i32
    %31 = vector.broadcast %c3_i32 : i32 to vector<16x16xi32>
    %32 = arith.cmpi slt, %30, %31 : vector<16x16xi32>
    %33 = arith.cmpi ne, %29, %30 : vector<16x16xi32>
    %34 = arith.andi %32, %33 : vector<16x16xi1>
    %cst_11 = arith.constant -1.000000e+30 : f32
    %cst_12 = arith.constant 0.000000e+00 : f32
    %35 = vector.broadcast %cst_11 : f32 to vector<16x16xf32>
    %36 = vector.broadcast %cst_12 : f32 to vector<16x16xf32>
    %37 = arith.select %34, %35, %36 : vector<16x16xi1>, vector<16x16xf32>
    %38 = vector.shape_cast %37 : vector<16x16xf32> to vector<1x16x16xf32>
    %c0_13 = arith.constant 0 : index
    %c0_14 = arith.constant 0 : index
    %39 = vector.load %arg3[%c0_13, %c0_14] : memref<2x16xf32, #tpu.memory_space<vmem>>, vector<2x16xf32>
    %40 = vector.shape_cast %39 : vector<2x16xf32> to vector<2x1x16xf32>
    %41 = vector.broadcast %38 : vector<1x16x16xf32> to vector<2x16x16xf32>
    %42 = vector.broadcast %40 : vector<2x1x16xf32> to vector<2x16x16xf32>
    %43 = arith.addf %41, %42 : vector<2x16x16xf32>
    %cst_15 = arith.constant 0.000000e+00 : f32
    %44 = vector.shape_cast %8 : vector<1x128xi1> to vector<1x128xi1>
    %45 = vector.broadcast %44 : vector<1x128xi1> to vector<32x128xi1>
    %46 = vector.broadcast %cst_15 : f32 to vector<32x128xf32>
    %47 = arith.select %45, %27, %46 : vector<32x128xi1>, vector<32x128xf32>
    %48 = arith.truncf %47 : vector<32x128xf32> to vector<32x128xbf16>
    %49 = vector.shape_cast %48 : vector<32x128xbf16> to vector<2x16x128xbf16>
    %cst_16 = arith.constant 0.000000e+00 : f32
    %50 = vector.shape_cast %8 : vector<1x128xi1> to vector<1x128xi1>
    %51 = vector.broadcast %50 : vector<1x128xi1> to vector<32x128xi1>
    %52 = vector.broadcast %cst_16 : f32 to vector<32x128xf32>
    %53 = arith.select %51, %28, %52 : vector<32x128xi1>, vector<32x128xf32>
    %54 = arith.truncf %53 : vector<32x128xf32> to vector<32x128xbf16>
    %55 = vector.shape_cast %54 : vector<32x128xbf16> to vector<2x16x128xbf16>
    "tpu.trace_start"() <{level = 10 : i32, message = "bqd,bkd->bqk"}> : () -> ()
    %cst_17 = arith.constant dense<0.000000e+00> : vector<2x16x16xf32>
    %56 = tpu.matmul %26, %49, %cst_17 {dimension_numbers = #tpu.dot_dimension_numbers<[2], [2], [1], [1], [0, 0, 0, 1, 1, 1], [0], [0]>} : vector<2x16x128xbf16>, vector<2x16x128xbf16>, vector<2x16x16xf32> -> vector<2x16x16xf32>
    "tpu.trace_stop"() : () -> ()
    %cst_18 = arith.constant 1.250000e-01 : f32
    %57 = vector.broadcast %cst_18 : f32 to vector<2x16x16xf32>
    %58 = arith.mulf %56, %57 : vector<2x16x16xf32>
    %59 = arith.addf %58, %43 : vector<2x16x16xf32>
    %cst_19 = arith.constant dense<0xFF800000> : vector<2x16xf32>
    %60 = vector.multi_reduction <maximumf>, %59, %cst_19 [2] : vector<2x16x16xf32> to vector<2x16xf32>
    %61 = vector.shape_cast %60 : vector<2x16xf32> to vector<2x16x1xf32>
    %62 = vector.broadcast %61 : vector<2x16x1xf32> to vector<2x16x16xf32>
    %63 = arith.subf %59, %62 : vector<2x16x16xf32>
    %64 = math.exp %63 : vector<2x16x16xf32>
    %cst_20 = arith.constant dense<0.000000e+00> : vector<2x16xf32>
    %65 = vector.multi_reduction <add>, %64, %cst_20 [2] : vector<2x16x16xf32> to vector<2x16xf32>
    %66 = vector.shape_cast %65 : vector<2x16xf32> to vector<2x16x1xf32>
    %67 = tpu.reciprocal %66 {approx = true} : vector<2x16x1xf32> -> vector<2x16x1xf32>
    %68 = vector.broadcast %67 : vector<2x16x1xf32> to vector<2x16x16xf32>
    %69 = arith.mulf %64, %68 : vector<2x16x16xf32>
    %70 = arith.truncf %69 : vector<2x16x16xf32> to vector<2x16x16xbf16>
    "tpu.trace_start"() <{level = 10 : i32, message = "bqk,bkd->bqd"}> : () -> ()
    %cst_21 = arith.constant dense<0.000000e+00> : vector<2x16x128xf32>
    %71 = tpu.matmul %70, %55, %cst_21 {dimension_numbers = #tpu.dot_dimension_numbers<[2], [1], [1], [2], [0, 0, 0, 1, 1, 2], [0], [0]>} : vector<2x16x16xbf16>, vector<2x16x128xbf16>, vector<2x16x128xf32> -> vector<2x16x128xf32>
    %cst_22 = arith.constant 0.000000e+00 : f32
    "tpu.trace_stop"() : () -> ()
    %72 = vector.shape_cast %13 : vector<1x128xi1> to vector<1x128xi1>
    %73 = vector.broadcast %72 : vector<1x128xi1> to vector<32x128xi1>
    %74 = vector.broadcast %cst_22 : f32 to vector<32x128xf32>
    %75 = arith.select %73, %27, %74 : vector<32x128xi1>, vector<32x128xf32>
    %76 = arith.truncf %75 : vector<32x128xf32> to vector<32x128xbf16>
    %77 = vector.shape_cast %76 : vector<32x128xbf16> to vector<2x16x128xbf16>
    %cst_23 = arith.constant 0.000000e+00 : f32
    %78 = vector.shape_cast %13 : vector<1x128xi1> to vector<1x128xi1>
    %79 = vector.broadcast %78 : vector<1x128xi1> to vector<32x128xi1>
    %80 = vector.broadcast %cst_23 : f32 to vector<32x128xf32>
    %81 = arith.select %79, %28, %80 : vector<32x128xi1>, vector<32x128xf32>
    %82 = arith.truncf %81 : vector<32x128xf32> to vector<32x128xbf16>
    %83 = vector.shape_cast %82 : vector<32x128xbf16> to vector<2x16x128xbf16>
    "tpu.trace_start"() <{level = 10 : i32, message = "bqd,bkd->bqk"}> : () -> ()
    %cst_24 = arith.constant dense<0.000000e+00> : vector<2x16x16xf32>
    %84 = tpu.matmul %26, %77, %cst_24 {dimension_numbers = #tpu.dot_dimension_numbers<[2], [2], [1], [1], [0, 0, 0, 1, 1, 1], [0], [0]>} : vector<2x16x128xbf16>, vector<2x16x128xbf16>, vector<2x16x16xf32> -> vector<2x16x16xf32>
    "tpu.trace_stop"() : () -> ()
    %cst_25 = arith.constant 1.250000e-01 : f32
    %85 = vector.broadcast %cst_25 : f32 to vector<2x16x16xf32>
    %86 = arith.mulf %84, %85 : vector<2x16x16xf32>
    %87 = arith.addf %86, %43 : vector<2x16x16xf32>
    %cst_26 = arith.constant dense<0xFF800000> : vector<2x16xf32>
    %88 = vector.multi_reduction <maximumf>, %87, %cst_26 [2] : vector<2x16x16xf32> to vector<2x16xf32>
    %89 = vector.shape_cast %88 : vector<2x16xf32> to vector<2x16x1xf32>
    %90 = vector.broadcast %89 : vector<2x16x1xf32> to vector<2x16x16xf32>
    %91 = arith.subf %87, %90 : vector<2x16x16xf32>
    %92 = math.exp %91 : vector<2x16x16xf32>
    %cst_27 = arith.constant dense<0.000000e+00> : vector<2x16xf32>
    %93 = vector.multi_reduction <add>, %92, %cst_27 [2] : vector<2x16x16xf32> to vector<2x16xf32>
    %94 = vector.shape_cast %93 : vector<2x16xf32> to vector<2x16x1xf32>
    %95 = tpu.reciprocal %94 {approx = true} : vector<2x16x1xf32> -> vector<2x16x1xf32>
    %96 = vector.broadcast %95 : vector<2x16x1xf32> to vector<2x16x16xf32>
    %97 = arith.mulf %92, %96 : vector<2x16x16xf32>
    %98 = arith.truncf %97 : vector<2x16x16xf32> to vector<2x16x16xbf16>
    "tpu.trace_start"() <{level = 10 : i32, message = "bqk,bkd->bqd"}> : () -> ()
    %cst_28 = arith.constant dense<0.000000e+00> : vector<2x16x128xf32>
    %99 = tpu.matmul %98, %83, %cst_28 {dimension_numbers = #tpu.dot_dimension_numbers<[2], [1], [1], [2], [0, 0, 0, 1, 1, 2], [0], [0]>} : vector<2x16x16xbf16>, vector<2x16x128xbf16>, vector<2x16x128xf32> -> vector<2x16x128xf32>
    "tpu.trace_stop"() : () -> ()
    %100 = arith.addf %71, %99 : vector<2x16x128xf32>
    %101 = vector.shape_cast %100 : vector<2x16x128xf32> to vector<32x128xf32>
    %102 = arith.truncf %101 : vector<32x128xf32> to vector<32x128xbf16>
    %c0_29 = arith.constant 0 : index
    %c0_30 = arith.constant 0 : index
    %c0_31 = arith.constant 0 : index
    %103 = vector.load %arg8[%c0_29, %c0_30, %c0_31] : memref<1x128x128xbf16, #tpu.memory_space<vmem>>, vector<1x128x128xbf16>
    %104 = vector.shape_cast %103 : vector<1x128x128xbf16> to vector<128x128xbf16>
    %cst_32 = arith.constant dense<0.000000e+00> : vector<32x128xf32>
    %105 = tpu.matmul %102, %104, %cst_32 {dimension_numbers = #tpu.dot_dimension_numbers<[1], [0], [0], [1], [0, 0, 1, 1], [], []>} : vector<32x128xbf16>, vector<128x128xbf16>, vector<32x128xf32> -> vector<32x128xf32>
    %c0_33 = arith.constant 0 : index
    %c0_34 = arith.constant 0 : index
    %c0_35 = arith.constant 0 : index
    %106 = vector.load %arg9[%c0_33, %c0_34, %c0_35] : memref<1x1x128xf32, #tpu.memory_space<vmem>>, vector<1x1x128xf32>
    %107 = vector.shape_cast %106 : vector<1x1x128xf32> to vector<1x128xf32>
    %108 = vector.broadcast %107 : vector<1x128xf32> to vector<32x128xf32>
    %109 = arith.addf %105, %108 : vector<32x128xf32>
    %110 = arith.addf %15, %109 : vector<32x128xf32>
    %cst_36 = arith.constant dense<0.000000e+00> : vector<32xf32>
    %111 = vector.multi_reduction <add>, %110, %cst_36 [1] : vector<32x128xf32> to vector<32xf32>
    %112 = vector.shape_cast %111 : vector<32xf32> to vector<32x1xf32>
    %cst_37 = arith.constant 1.280000e+02 : f32
    %113 = vector.broadcast %cst_37 : f32 to vector<32x1xf32>
    %114 = arith.divf %112, %113 : vector<32x1xf32>
    %115 = vector.broadcast %114 : vector<32x1xf32> to vector<32x128xf32>
    %116 = arith.subf %110, %115 : vector<32x128xf32>
    %117 = arith.mulf %116, %116 : vector<32x128xf32>
    %cst_38 = arith.constant dense<0.000000e+00> : vector<32xf32>
    %118 = vector.multi_reduction <add>, %117, %cst_38 [1] : vector<32x128xf32> to vector<32xf32>
    %119 = vector.shape_cast %118 : vector<32xf32> to vector<32x1xf32>
    %cst_39 = arith.constant 1.280000e+02 : f32
    %120 = vector.broadcast %cst_39 : f32 to vector<32x1xf32>
    %121 = arith.divf %119, %120 : vector<32x1xf32>
    %122 = vector.broadcast %114 : vector<32x1xf32> to vector<32x128xf32>
    %123 = arith.subf %110, %122 : vector<32x128xf32>
    %cst_40 = arith.constant 9.99999974E-6 : f32
    %124 = vector.broadcast %cst_40 : f32 to vector<32x1xf32>
    %125 = arith.addf %121, %124 : vector<32x1xf32>
    %126 = math.rsqrt %125 : vector<32x1xf32>
    %127 = vector.broadcast %126 : vector<32x1xf32> to vector<32x128xf32>
    %128 = arith.mulf %123, %127 : vector<32x128xf32>
    %c0_41 = arith.constant 0 : index
    %c0_42 = arith.constant 0 : index
    %c0_43 = arith.constant 0 : index
    %129 = vector.load %arg10[%c0_41, %c0_42, %c0_43] : memref<1x1x128xf32, #tpu.memory_space<vmem>>, vector<1x1x128xf32>
    %130 = vector.shape_cast %129 : vector<1x1x128xf32> to vector<1x128xf32>
    %131 = vector.broadcast %130 : vector<1x128xf32> to vector<32x128xf32>
    %132 = arith.mulf %128, %131 : vector<32x128xf32>
    %c0_44 = arith.constant 0 : index
    %c0_45 = arith.constant 0 : index
    %c0_46 = arith.constant 0 : index
    %133 = vector.load %arg11[%c0_44, %c0_45, %c0_46] : memref<1x1x128xf32, #tpu.memory_space<vmem>>, vector<1x1x128xf32>
    %134 = vector.shape_cast %133 : vector<1x1x128xf32> to vector<1x128xf32>
    %135 = vector.broadcast %134 : vector<1x128xf32> to vector<32x128xf32>
    %136 = arith.addf %132, %135 : vector<32x128xf32>
    %c0_47 = arith.constant 0 : index
    %c0_48 = arith.constant 0 : index
    %c0_49 = arith.constant 0 : index
    %137 = vector.load %arg4[%c0_47, %c0_48, %c0_49] : memref<1x8x256xf32, #tpu.memory_space<vmem>>, vector<1x8x256xf32>
    %138 = vector.shape_cast %137 : vector<1x8x256xf32> to vector<8x256xf32>
    %139 = vector.extract_strided_slice %138 {offsets = [0, 0], sizes = [8, 128], strides = [1, 1]} : vector<8x256xf32> to vector<8x128xf32>
    %140 = vector.extract_strided_slice %138 {offsets = [0, 128], sizes = [8, 128], strides = [1, 1]} : vector<8x256xf32> to vector<8x128xf32>
    %141 = arith.truncf %136 : vector<32x128xf32> to vector<32x128xbf16>
    %c0_50 = arith.constant 0 : index
    %c0_51 = arith.constant 0 : index
    %c0_52 = arith.constant 0 : index
    %142 = vector.load %arg12[%c0_50, %c0_51, %c0_52] : memref<1x128x128xbf16, #tpu.memory_space<vmem>>, vector<1x128x128xbf16>
    %143 = vector.shape_cast %142 : vector<1x128x128xbf16> to vector<128x128xbf16>
    %cst_53 = arith.constant dense<0.000000e+00> : vector<32x128xf32>
    %144 = tpu.matmul %141, %143, %cst_53 {dimension_numbers = #tpu.dot_dimension_numbers<[1], [0], [0], [1], [0, 0, 1, 1], [], []>} : vector<32x128xbf16>, vector<128x128xbf16>, vector<32x128xf32> -> vector<32x128xf32>
    %c0_54 = arith.constant 0 : index
    %c0_55 = arith.constant 0 : index
    %c0_56 = arith.constant 0 : index
    %145 = vector.load %arg13[%c0_54, %c0_55, %c0_56] : memref<1x1x128xf32, #tpu.memory_space<vmem>>, vector<1x1x128xf32>
    %146 = vector.shape_cast %145 : vector<1x1x128xf32> to vector<1x128xf32>
    %147 = vector.broadcast %146 : vector<1x128xf32> to vector<32x128xf32>
    %148 = arith.addf %144, %147 : vector<32x128xf32>
    %149 = arith.truncf %148 : vector<32x128xf32> to vector<32x128xbf16>
    %cst_57 = arith.constant 0.000000e+00 : f32
    %150 = vector.shape_cast %8 : vector<1x128xi1> to vector<1x128xi1>
    %151 = vector.broadcast %150 : vector<1x128xi1> to vector<8x128xi1>
    %152 = vector.broadcast %cst_57 : f32 to vector<8x128xf32>
    %153 = arith.select %151, %139, %152 : vector<8x128xi1>, vector<8x128xf32>
    %154 = arith.truncf %153 : vector<8x128xf32> to vector<8x128xbf16>
    %cst_58 = arith.constant 0.000000e+00 : f32
    %155 = vector.shape_cast %8 : vector<1x128xi1> to vector<1x128xi1>
    %156 = vector.broadcast %155 : vector<1x128xi1> to vector<8x128xi1>
    %157 = vector.broadcast %cst_58 : f32 to vector<8x128xf32>
    %158 = arith.select %156, %140, %157 : vector<8x128xi1>, vector<8x128xf32>
    %159 = arith.truncf %158 : vector<8x128xf32> to vector<8x128xbf16>
    %cst_59 = arith.constant dense<0.000000e+00> : vector<32x8xf32>
    %160 = tpu.matmul %149, %154, %cst_59 {dimension_numbers = #tpu.dot_dimension_numbers<[1], [1], [0], [0], [0, 0, 1, 0], [], []>} : vector<32x128xbf16>, vector<8x128xbf16>, vector<32x8xf32> -> vector<32x8xf32>
    %cst_60 = arith.constant 1.250000e-01 : f32
    %161 = vector.broadcast %cst_60 : f32 to vector<32x8xf32>
    %162 = arith.mulf %160, %161 : vector<32x8xf32>
    %c0_61 = arith.constant 0 : index
    %c0_62 = arith.constant 0 : index
    %163 = vector.load %arg5[%c0_61, %c0_62] : memref<1x8xf32, #tpu.memory_space<vmem>>, vector<1x8xf32>
    %164 = vector.broadcast %163 : vector<1x8xf32> to vector<32x8xf32>
    %165 = arith.addf %162, %164 : vector<32x8xf32>
    %cst_63 = arith.constant dense<0xFF800000> : vector<32xf32>
    %166 = vector.multi_reduction <maximumf>, %165, %cst_63 [1] : vector<32x8xf32> to vector<32xf32>
    %167 = vector.shape_cast %166 : vector<32xf32> to vector<32x1xf32>
    %168 = vector.broadcast %167 : vector<32x1xf32> to vector<32x8xf32>
    %169 = arith.subf %165, %168 : vector<32x8xf32>
    %170 = math.exp %169 : vector<32x8xf32>
    %cst_64 = arith.constant dense<0.000000e+00> : vector<32xf32>
    %171 = vector.multi_reduction <add>, %170, %cst_64 [1] : vector<32x8xf32> to vector<32xf32>
    %172 = vector.shape_cast %171 : vector<32xf32> to vector<32x1xf32>
    %173 = tpu.reciprocal %172 {approx = true} : vector<32x1xf32> -> vector<32x1xf32>
    %174 = vector.broadcast %173 : vector<32x1xf32> to vector<32x8xf32>
    %175 = arith.mulf %170, %174 : vector<32x8xf32>
    %176 = arith.truncf %175 : vector<32x8xf32> to vector<32x8xbf16>
    %cst_65 = arith.constant dense<0.000000e+00> : vector<32x128xf32>
    %177 = tpu.matmul %176, %159, %cst_65 {dimension_numbers = #tpu.dot_dimension_numbers<[1], [0], [0], [1], [0, 0, 1, 1], [], []>} : vector<32x8xbf16>, vector<8x128xbf16>, vector<32x128xf32> -> vector<32x128xf32>
    %cst_66 = arith.constant 0.000000e+00 : f32
    %178 = vector.shape_cast %13 : vector<1x128xi1> to vector<1x128xi1>
    %179 = vector.broadcast %178 : vector<1x128xi1> to vector<8x128xi1>
    %180 = vector.broadcast %cst_66 : f32 to vector<8x128xf32>
    %181 = arith.select %179, %139, %180 : vector<8x128xi1>, vector<8x128xf32>
    %182 = arith.truncf %181 : vector<8x128xf32> to vector<8x128xbf16>
    %cst_67 = arith.constant 0.000000e+00 : f32
    %183 = vector.shape_cast %13 : vector<1x128xi1> to vector<1x128xi1>
    %184 = vector.broadcast %183 : vector<1x128xi1> to vector<8x128xi1>
    %185 = vector.broadcast %cst_67 : f32 to vector<8x128xf32>
    %186 = arith.select %184, %140, %185 : vector<8x128xi1>, vector<8x128xf32>
    %187 = arith.truncf %186 : vector<8x128xf32> to vector<8x128xbf16>
    %cst_68 = arith.constant dense<0.000000e+00> : vector<32x8xf32>
    %188 = tpu.matmul %149, %182, %cst_68 {dimension_numbers = #tpu.dot_dimension_numbers<[1], [1], [0], [0], [0, 0, 1, 0], [], []>} : vector<32x128xbf16>, vector<8x128xbf16>, vector<32x8xf32> -> vector<32x8xf32>
    %cst_69 = arith.constant 1.250000e-01 : f32
    %189 = vector.broadcast %cst_69 : f32 to vector<32x8xf32>
    %190 = arith.mulf %188, %189 : vector<32x8xf32>
    %c0_70 = arith.constant 0 : index
    %c0_71 = arith.constant 0 : index
    %191 = vector.load %arg5[%c0_70, %c0_71] : memref<1x8xf32, #tpu.memory_space<vmem>>, vector<1x8xf32>
    %192 = vector.broadcast %191 : vector<1x8xf32> to vector<32x8xf32>
    %193 = arith.addf %190, %192 : vector<32x8xf32>
    %cst_72 = arith.constant dense<0xFF800000> : vector<32xf32>
    %194 = vector.multi_reduction <maximumf>, %193, %cst_72 [1] : vector<32x8xf32> to vector<32xf32>
    %195 = vector.shape_cast %194 : vector<32xf32> to vector<32x1xf32>
    %196 = vector.broadcast %195 : vector<32x1xf32> to vector<32x8xf32>
    %197 = arith.subf %193, %196 : vector<32x8xf32>
    %198 = math.exp %197 : vector<32x8xf32>
    %cst_73 = arith.constant dense<0.000000e+00> : vector<32xf32>
    %199 = vector.multi_reduction <add>, %198, %cst_73 [1] : vector<32x8xf32> to vector<32xf32>
    %200 = vector.shape_cast %199 : vector<32xf32> to vector<32x1xf32>
    %201 = tpu.reciprocal %200 {approx = true} : vector<32x1xf32> -> vector<32x1xf32>
    %202 = vector.broadcast %201 : vector<32x1xf32> to vector<32x8xf32>
    %203 = arith.mulf %198, %202 : vector<32x8xf32>
    %204 = arith.truncf %203 : vector<32x8xf32> to vector<32x8xbf16>
    %cst_74 = arith.constant dense<0.000000e+00> : vector<32x128xf32>
    %205 = tpu.matmul %204, %187, %cst_74 {dimension_numbers = #tpu.dot_dimension_numbers<[1], [0], [0], [1], [0, 0, 1, 1], [], []>} : vector<32x8xbf16>, vector<8x128xbf16>, vector<32x128xf32> -> vector<32x128xf32>
    %206 = arith.addf %177, %205 : vector<32x128xf32>
    %207 = arith.truncf %206 : vector<32x128xf32> to vector<32x128xbf16>
    %c0_75 = arith.constant 0 : index
    %c0_76 = arith.constant 0 : index
    %c0_77 = arith.constant 0 : index
    %208 = vector.load %arg14[%c0_75, %c0_76, %c0_77] : memref<1x128x128xbf16, #tpu.memory_space<vmem>>, vector<1x128x128xbf16>
    %209 = vector.shape_cast %208 : vector<1x128x128xbf16> to vector<128x128xbf16>
    %cst_78 = arith.constant dense<0.000000e+00> : vector<32x128xf32>
    %210 = tpu.matmul %207, %209, %cst_78 {dimension_numbers = #tpu.dot_dimension_numbers<[1], [0], [0], [1], [0, 0, 1, 1], [], []>} : vector<32x128xbf16>, vector<128x128xbf16>, vector<32x128xf32> -> vector<32x128xf32>
    %c0_79 = arith.constant 0 : index
    %c0_80 = arith.constant 0 : index
    %c0_81 = arith.constant 0 : index
    %211 = vector.load %arg15[%c0_79, %c0_80, %c0_81] : memref<1x1x128xf32, #tpu.memory_space<vmem>>, vector<1x1x128xf32>
    %212 = vector.shape_cast %211 : vector<1x1x128xf32> to vector<1x128xf32>
    %213 = vector.broadcast %212 : vector<1x128xf32> to vector<32x128xf32>
    %214 = arith.addf %210, %213 : vector<32x128xf32>
    %215 = arith.addf %136, %214 : vector<32x128xf32>
    %cst_82 = arith.constant dense<0.000000e+00> : vector<32xf32>
    %216 = vector.multi_reduction <add>, %215, %cst_82 [1] : vector<32x128xf32> to vector<32xf32>
    %217 = vector.shape_cast %216 : vector<32xf32> to vector<32x1xf32>
    %cst_83 = arith.constant 1.280000e+02 : f32
    %218 = vector.broadcast %cst_83 : f32 to vector<32x1xf32>
    %219 = arith.divf %217, %218 : vector<32x1xf32>
    %220 = vector.broadcast %219 : vector<32x1xf32> to vector<32x128xf32>
    %221 = arith.subf %215, %220 : vector<32x128xf32>
    %222 = arith.mulf %221, %221 : vector<32x128xf32>
    %cst_84 = arith.constant dense<0.000000e+00> : vector<32xf32>
    %223 = vector.multi_reduction <add>, %222, %cst_84 [1] : vector<32x128xf32> to vector<32xf32>
    %224 = vector.shape_cast %223 : vector<32xf32> to vector<32x1xf32>
    %cst_85 = arith.constant 1.280000e+02 : f32
    %225 = vector.broadcast %cst_85 : f32 to vector<32x1xf32>
    %226 = arith.divf %224, %225 : vector<32x1xf32>
    %227 = vector.broadcast %219 : vector<32x1xf32> to vector<32x128xf32>
    %228 = arith.subf %215, %227 : vector<32x128xf32>
    %cst_86 = arith.constant 9.99999974E-6 : f32
    %229 = vector.broadcast %cst_86 : f32 to vector<32x1xf32>
    %230 = arith.addf %226, %229 : vector<32x1xf32>
    %231 = math.rsqrt %230 : vector<32x1xf32>
    %232 = vector.broadcast %231 : vector<32x1xf32> to vector<32x128xf32>
    %233 = arith.mulf %228, %232 : vector<32x128xf32>
    %c0_87 = arith.constant 0 : index
    %c0_88 = arith.constant 0 : index
    %c0_89 = arith.constant 0 : index
    %234 = vector.load %arg16[%c0_87, %c0_88, %c0_89] : memref<1x1x128xf32, #tpu.memory_space<vmem>>, vector<1x1x128xf32>
    %235 = vector.shape_cast %234 : vector<1x1x128xf32> to vector<1x128xf32>
    %236 = vector.broadcast %235 : vector<1x128xf32> to vector<32x128xf32>
    %237 = arith.mulf %233, %236 : vector<32x128xf32>
    %c0_90 = arith.constant 0 : index
    %c0_91 = arith.constant 0 : index
    %c0_92 = arith.constant 0 : index
    %238 = vector.load %arg17[%c0_90, %c0_91, %c0_92] : memref<1x1x128xf32, #tpu.memory_space<vmem>>, vector<1x1x128xf32>
    %239 = vector.shape_cast %238 : vector<1x1x128xf32> to vector<1x128xf32>
    %240 = vector.broadcast %239 : vector<1x128xf32> to vector<32x128xf32>
    %241 = arith.addf %237, %240 : vector<32x128xf32>
    %242 = arith.truncf %241 : vector<32x128xf32> to vector<32x128xbf16>
    %c0_93 = arith.constant 0 : index
    %c0_94 = arith.constant 0 : index
    %c0_95 = arith.constant 0 : index
    %243 = vector.load %arg18[%c0_93, %c0_94, %c0_95] : memref<1x128x512xbf16, #tpu.memory_space<vmem>>, vector<1x128x512xbf16>
    %244 = vector.shape_cast %243 : vector<1x128x512xbf16> to vector<128x512xbf16>
    %cst_96 = arith.constant dense<0.000000e+00> : vector<32x512xf32>
    %245 = tpu.matmul %242, %244, %cst_96 {dimension_numbers = #tpu.dot_dimension_numbers<[1], [0], [0], [1], [0, 0, 1, 1], [], []>} : vector<32x128xbf16>, vector<128x512xbf16>, vector<32x512xf32> -> vector<32x512xf32>
    %c0_97 = arith.constant 0 : index
    %c0_98 = arith.constant 0 : index
    %c0_99 = arith.constant 0 : index
    %246 = vector.load %arg19[%c0_97, %c0_98, %c0_99] : memref<1x1x512xf32, #tpu.memory_space<vmem>>, vector<1x1x512xf32>
    %247 = vector.shape_cast %246 : vector<1x1x512xf32> to vector<1x512xf32>
    %248 = vector.broadcast %247 : vector<1x512xf32> to vector<32x512xf32>
    %249 = arith.addf %245, %248 : vector<32x512xf32>
    %cst_100 = arith.constant 0.000000e+00 : f32
    %250 = vector.broadcast %cst_100 : f32 to vector<32x512xf32>
    %251 = arith.maximumf %249, %250 : vector<32x512xf32>
    %252 = arith.truncf %251 : vector<32x512xf32> to vector<32x512xbf16>
    %c0_101 = arith.constant 0 : index
    %c0_102 = arith.constant 0 : index
    %c0_103 = arith.constant 0 : index
    %253 = vector.load %arg20[%c0_101, %c0_102, %c0_103] : memref<1x512x128xbf16, #tpu.memory_space<vmem>>, vector<1x512x128xbf16>
    %254 = vector.shape_cast %253 : vector<1x512x128xbf16> to vector<512x128xbf16>
    %cst_104 = arith.constant dense<0.000000e+00> : vector<32x128xf32>
    %255 = tpu.matmul %252, %254, %cst_104 {dimension_numbers = #tpu.dot_dimension_numbers<[1], [0], [0], [1], [0, 0, 1, 1], [], []>} : vector<32x512xbf16>, vector<512x128xbf16>, vector<32x128xf32> -> vector<32x128xf32>
    %c0_105 = arith.constant 0 : index
    %c0_106 = arith.constant 0 : index
    %c0_107 = arith.constant 0 : index
    %256 = vector.load %arg21[%c0_105, %c0_106, %c0_107] : memref<1x1x128xf32, #tpu.memory_space<vmem>>, vector<1x1x128xf32>
    %257 = vector.shape_cast %256 : vector<1x1x128xf32> to vector<1x128xf32>
    %258 = vector.broadcast %257 : vector<1x128xf32> to vector<32x128xf32>
    %259 = arith.addf %255, %258 : vector<32x128xf32>
    %260 = arith.addf %241, %259 : vector<32x128xf32>
    %cst_108 = arith.constant dense<0.000000e+00> : vector<32xf32>
    %261 = vector.multi_reduction <add>, %260, %cst_108 [1] : vector<32x128xf32> to vector<32xf32>
    %262 = vector.shape_cast %261 : vector<32xf32> to vector<32x1xf32>
    %cst_109 = arith.constant 1.280000e+02 : f32
    %263 = vector.broadcast %cst_109 : f32 to vector<32x1xf32>
    %264 = arith.divf %262, %263 : vector<32x1xf32>
    %265 = vector.broadcast %264 : vector<32x1xf32> to vector<32x128xf32>
    %266 = arith.subf %260, %265 : vector<32x128xf32>
    %267 = arith.mulf %266, %266 : vector<32x128xf32>
    %cst_110 = arith.constant dense<0.000000e+00> : vector<32xf32>
    %268 = vector.multi_reduction <add>, %267, %cst_110 [1] : vector<32x128xf32> to vector<32xf32>
    %269 = vector.shape_cast %268 : vector<32xf32> to vector<32x1xf32>
    %cst_111 = arith.constant 1.280000e+02 : f32
    %270 = vector.broadcast %cst_111 : f32 to vector<32x1xf32>
    %271 = arith.divf %269, %270 : vector<32x1xf32>
    %272 = vector.broadcast %264 : vector<32x1xf32> to vector<32x128xf32>
    %273 = arith.subf %260, %272 : vector<32x128xf32>
    %cst_112 = arith.constant 9.99999974E-6 : f32
    %274 = vector.broadcast %cst_112 : f32 to vector<32x1xf32>
    %275 = arith.addf %271, %274 : vector<32x1xf32>
    %276 = math.rsqrt %275 : vector<32x1xf32>
    %277 = vector.broadcast %276 : vector<32x1xf32> to vector<32x128xf32>
    %278 = arith.mulf %273, %277 : vector<32x128xf32>
    %c0_113 = arith.constant 0 : index
    %c0_114 = arith.constant 0 : index
    %c0_115 = arith.constant 0 : index
    %279 = vector.load %arg22[%c0_113, %c0_114, %c0_115] : memref<1x1x128xf32, #tpu.memory_space<vmem>>, vector<1x1x128xf32>
    %280 = vector.shape_cast %279 : vector<1x1x128xf32> to vector<1x128xf32>
    %281 = vector.broadcast %280 : vector<1x128xf32> to vector<32x128xf32>
    %282 = arith.mulf %278, %281 : vector<32x128xf32>
    %c0_116 = arith.constant 0 : index
    %c0_117 = arith.constant 0 : index
    %c0_118 = arith.constant 0 : index
    %283 = vector.load %arg23[%c0_116, %c0_117, %c0_118] : memref<1x1x128xf32, #tpu.memory_space<vmem>>, vector<1x1x128xf32>
    %284 = vector.shape_cast %283 : vector<1x1x128xf32> to vector<1x128xf32>
    %285 = vector.broadcast %284 : vector<1x128xf32> to vector<32x128xf32>
    %286 = arith.addf %282, %285 : vector<32x128xf32>
    %287 = vector.shape_cast %286 : vector<32x128xf32> to vector<2x16x128xf32>
    %c0_119 = arith.constant 0 : index
    %c0_120 = arith.constant 0 : index
    %c0_121 = arith.constant 0 : index
    %288 = vector.load %arg26[%c0_119, %c0_120, %c0_121] : memref<2x16x128xf32, #tpu.memory_space<vmem>>, vector<2x16x128xf32>
    tpu.vector_store %arg26[%c0_119, %c0_120, %c0_121], %287 {strides = array<i32>} : memref<2x16x128xf32, #tpu.memory_space<vmem>>, vector<2x16x128xf32>,
    %c1_i32 = arith.constant 1 : i32
    %289 = arith.cmpi eq, %arg1, %c1_i32 : i32
    %290 = arith.extui %289 : i1 to i32
    %c0_i32_122 = arith.constant 0 : i32
    %291 = arith.cmpi ne, %290, %c0_i32_122 : i32
    scf.if %291 {
      %292 = arith.truncf %286 : vector<32x128xf32> to vector<32x128xbf16>
      %c0_123 = arith.constant 0 : index
      %c0_124 = arith.constant 0 : index
      %293 = vector.load %arg24[%c0_123, %c0_124] : memref<128x128xbf16, #tpu.memory_space<vmem>>, vector<128x128xbf16>
      %cst_125 = arith.constant dense<0.000000e+00> : vector<32x128xf32>
      %294 = tpu.matmul %292, %293, %cst_125 {dimension_numbers = #tpu.dot_dimension_numbers<[1], [0], [0], [1], [0, 0, 1, 1], [], []>} : vector<32x128xbf16>, vector<128x128xbf16>, vector<32x128xf32> -> vector<32x128xf32>
      %295 = vector.shape_cast %294 : vector<32x128xf32> to vector<2x16x128xf32>
      %c0_126 = arith.constant 0 : index
      %c0_127 = arith.constant 0 : index
      %c0_128 = arith.constant 0 : index
      %296 = vector.load %arg25[%c0_126, %c0_127, %c0_128] : memref<2x16x128xf32, #tpu.memory_space<vmem>>, vector<2x16x128xf32>
      tpu.vector_store %arg25[%c0_126, %c0_127, %c0_128], %295 {strides = array<i32>} : memref<2x16x128xf32, #tpu.memory_space<vmem>>, vector<2x16x128xf32>,
    } else {
    }
    return
  }
  func.func @transform_0(%arg0: i32, %arg1: i32) -> (i32, i32, i32) {
    %c0_i32 = arith.constant 0 : i32
    %c0_i32_0 = arith.constant 0 : i32
    %c0_i32_1 = arith.constant 0 : i32
    return %arg0, %c0_i32, %c0_i32_0 : i32, i32, i32
  }
  func.func @transform_1(%arg0: i32, %arg1: i32) -> (i32, i32) {
    %c0_i32 = arith.constant 0 : i32
    %c0_i32_0 = arith.constant 0 : i32
    return %arg0, %c0_i32 : i32, i32
  }
  func.func @transform_2(%arg0: i32, %arg1: i32) -> (i32, i32, i32) {
    %c0_i32 = arith.constant 0 : i32
    %c0_i32_0 = arith.constant 0 : i32
    %c0_i32_1 = arith.constant 0 : i32
    return %arg1, %c0_i32, %c0_i32_0 : i32, i32, i32
  }
  func.func @transform_3(%arg0: i32, %arg1: i32) -> (i32, i32) {
    %c0_i32 = arith.constant 0 : i32
    %c0_i32_0 = arith.constant 0 : i32
    %c0_i32_1 = arith.constant 0 : i32
    return %c0_i32, %c0_i32_0 : i32, i32
  }
  func.func @transform_4(%arg0: i32, %arg1: i32) -> (i32, i32, i32) {
    %c0_i32 = arith.constant 0 : i32
    %c0_i32_0 = arith.constant 0 : i32
    %c0_i32_1 = arith.constant 0 : i32
    return %arg1, %c0_i32, %c0_i32_0 : i32, i32, i32
  }
  func.func @transform_5(%arg0: i32, %arg1: i32) -> (i32, i32, i32) {
    %c0_i32 = arith.constant 0 : i32
    %c0_i32_0 = arith.constant 0 : i32
    %c0_i32_1 = arith.constant 0 : i32
    return %arg1, %c0_i32, %c0_i32_0 : i32, i32, i32
  }
  func.func @transform_6(%arg0: i32, %arg1: i32) -> (i32, i32, i32) {
    %c0_i32 = arith.constant 0 : i32
    %c0_i32_0 = arith.constant 0 : i32
    %c0_i32_1 = arith.constant 0 : i32
    return %arg1, %c0_i32, %c0_i32_0 : i32, i32, i32
  }
  func.func @transform_7(%arg0: i32, %arg1: i32) -> (i32, i32, i32) {
    %c0_i32 = arith.constant 0 : i32
    %c0_i32_0 = arith.constant 0 : i32
    %c0_i32_1 = arith.constant 0 : i32
    return %arg1, %c0_i32, %c0_i32_0 : i32, i32, i32
  }
  func.func @transform_8(%arg0: i32, %arg1: i32) -> (i32, i32, i32) {
    %c0_i32 = arith.constant 0 : i32
    %c0_i32_0 = arith.constant 0 : i32
    %c0_i32_1 = arith.constant 0 : i32
    return %arg1, %c0_i32, %c0_i32_0 : i32, i32, i32
  }
  func.func @transform_9(%arg0: i32, %arg1: i32) -> (i32, i32, i32) {
    %c0_i32 = arith.constant 0 : i32
    %c0_i32_0 = arith.constant 0 : i32
    %c0_i32_1 = arith.constant 0 : i32
    return %arg1, %c0_i32, %c0_i32_0 : i32, i32, i32
  }
  func.func @transform_10(%arg0: i32, %arg1: i32) -> (i32, i32, i32) {
    %c0_i32 = arith.constant 0 : i32
    %c0_i32_0 = arith.constant 0 : i32
    %c0_i32_1 = arith.constant 0 : i32
    return %arg1, %c0_i32, %c0_i32_0 : i32, i32, i32
  }
  func.func @transform_11(%arg0: i32, %arg1: i32) -> (i32, i32, i32) {
    %c0_i32 = arith.constant 0 : i32
    %c0_i32_0 = arith.constant 0 : i32
    %c0_i32_1 = arith.constant 0 : i32
    return %arg1, %c0_i32, %c0_i32_0 : i32, i32, i32
  }
  func.func @transform_12(%arg0: i32, %arg1: i32) -> (i32, i32, i32) {
    %c0_i32 = arith.constant 0 : i32
    %c0_i32_0 = arith.constant 0 : i32
    %c0_i32_1 = arith.constant 0 : i32
    return %arg1, %c0_i32, %c0_i32_0 : i32, i32, i32
  }
  func.func @transform_13(%arg0: i32, %arg1: i32) -> (i32, i32, i32) {
    %c0_i32 = arith.constant 0 : i32
    %c0_i32_0 = arith.constant 0 : i32
    %c0_i32_1 = arith.constant 0 : i32
    return %arg1, %c0_i32, %c0_i32_0 : i32, i32, i32
  }
  func.func @transform_14(%arg0: i32, %arg1: i32) -> (i32, i32, i32) {
    %c0_i32 = arith.constant 0 : i32
    %c0_i32_0 = arith.constant 0 : i32
    %c0_i32_1 = arith.constant 0 : i32
    return %arg1, %c0_i32, %c0_i32_0 : i32, i32, i32
  }
  func.func @transform_15(%arg0: i32, %arg1: i32) -> (i32, i32, i32) {
    %c0_i32 = arith.constant 0 : i32
    %c0_i32_0 = arith.constant 0 : i32
    %c0_i32_1 = arith.constant 0 : i32
    return %arg1, %c0_i32, %c0_i32_0 : i32, i32, i32
  }
  func.func @transform_16(%arg0: i32, %arg1: i32) -> (i32, i32, i32) {
    %c0_i32 = arith.constant 0 : i32
    %c0_i32_0 = arith.constant 0 : i32
    %c0_i32_1 = arith.constant 0 : i32
    return %arg1, %c0_i32, %c0_i32_0 : i32, i32, i32
  }
  func.func @transform_17(%arg0: i32, %arg1: i32) -> (i32, i32, i32) {
    %c0_i32 = arith.constant 0 : i32
    %c0_i32_0 = arith.constant 0 : i32
    %c0_i32_1 = arith.constant 0 : i32
    return %arg1, %c0_i32, %c0_i32_0 : i32, i32, i32
  }
  func.func @transform_18(%arg0: i32, %arg1: i32) -> (i32, i32, i32) {
    %c0_i32 = arith.constant 0 : i32
    %c0_i32_0 = arith.constant 0 : i32
    %c0_i32_1 = arith.constant 0 : i32
    return %arg1, %c0_i32, %c0_i32_0 : i32, i32, i32
  }
  func.func @transform_19(%arg0: i32, %arg1: i32) -> (i32, i32, i32) {
    %c0_i32 = arith.constant 0 : i32
    %c0_i32_0 = arith.constant 0 : i32
    %c0_i32_1 = arith.constant 0 : i32
    return %arg1, %c0_i32, %c0_i32_0 : i32, i32, i32
  }
  func.func @transform_20(%arg0: i32, %arg1: i32) -> (i32, i32, i32) {
    %c0_i32 = arith.constant 0 : i32
    %c0_i32_0 = arith.constant 0 : i32
    %c0_i32_1 = arith.constant 0 : i32
    return %arg1, %c0_i32, %c0_i32_0 : i32, i32, i32
  }
  func.func @transform_21(%arg0: i32, %arg1: i32) -> (i32, i32, i32) {
    %c0_i32 = arith.constant 0 : i32
    %c0_i32_0 = arith.constant 0 : i32
    %c0_i32_1 = arith.constant 0 : i32
    return %arg1, %c0_i32, %c0_i32_0 : i32, i32, i32
  }
  func.func @transform_22(%arg0: i32, %arg1: i32) -> (i32, i32) {
    %c0_i32 = arith.constant 0 : i32
    %c0_i32_0 = arith.constant 0 : i32
    %c0_i32_1 = arith.constant 0 : i32
    return %c0_i32, %c0_i32_0 : i32, i32
  }
  func.func @transform_23(%arg0: i32, %arg1: i32) -> (i32, i32, i32) {
    %c0_i32 = arith.constant 0 : i32
    %c0_i32_0 = arith.constant 0 : i32
    %c0_i32_1 = arith.constant 0 : i32
    return %arg0, %c0_i32, %c0_i32_0 : i32, i32, i32
  }
}

</mosaic_0001>

<llo_original>
// kernel: fwd.1
$region0: #{fwd.1}
  #allocation0 [shape = 'u32[]', space=smem, size = 0x4, offset = 0x4, fixed_abs, tag = 'smem constant byte address 0x4 - core index']
  #allocation1 [shape = 'u32[144,128]{1,0:T(1,128)}', space=vmem, size = 0x12000, scoped, tag = 'internal scratch']
  #allocation2 [shape = 'f32[2,16,128]{2,1,0:T(8,128)}', space=vmem, size = 0x4000, scoped, tag = 'scratch operand']
  %s0 = inlined_call_operand.vmem [shape: f32[2,16,128], index: 0, kind: input, shape index: {}]
  %s1 = inlined_call_operand.vmem [shape: f32[2,16], index: 1, kind: input, shape index: {}]
  %s2 = inlined_call_operand.vmem [shape: f32[2,8,256], index: 2, kind: input, shape index: {}]
  %s3 = inlined_call_operand.vmem [shape: f32[1,8], index: 3, kind: input, shape index: {}]
  %s4 = inlined_call_operand.vmem [shape: bf16[2,128,384], index: 4, kind: input, shape index: {}]
  %s5 = inlined_call_operand.vmem [shape: f32[2,1,384], index: 5, kind: input, shape index: {}]
  %s6 = inlined_call_operand.vmem [shape: bf16[2,128,128], index: 6, kind: input, shape index: {}]
  %s7 = inlined_call_operand.vmem [shape: f32[2,1,128], index: 7, kind: input, shape index: {}]
  %s8 = inlined_call_operand.vmem [shape: f32[2,1,128], index: 8, kind: input, shape index: {}]
  %s9 = inlined_call_operand.vmem [shape: f32[2,1,128], index: 9, kind: input, shape index: {}]
  %s10 = inlined_call_operand.vmem [shape: bf16[2,128,128], index: 10, kind: input, shape index: {}]
  %s11 = inlined_call_operand.vmem [shape: f32[2,1,128], index: 11, kind: input, shape index: {}]
  %s12 = inlined_call_operand.vmem [shape: bf16[2,128,128], index: 12, kind: input, shape index: {}]
  %s13 = inlined_call_operand.vmem [shape: f32[2,1,128], index: 13, kind: input, shape index: {}]
  %s14 = inlined_call_operand.vmem [shape: f32[2,1,128], index: 14, kind: input, shape index: {}]
  %s15 = inlined_call_operand.vmem [shape: f32[2,1,128], index: 15, kind: input, shape index: {}]
  %s16 = inlined_call_operand.vmem [shape: bf16[2,128,512], index: 16, kind: input, shape index: {}]
  %s17 = inlined_call_operand.vmem [shape: f32[2,1,512], index: 17, kind: input, shape index: {}]
  %s18 = inlined_call_operand.hbm [shape: bf16[2,512,128], index: 18, kind: input, shape index: {}]
  %s19 = inlined_call_operand.vmem [shape: f32[2,1,128], index: 19, kind: input, shape index: {}]
  %s20 = inlined_call_operand.vmem [shape: f32[2,1,128], index: 20, kind: input, shape index: {}]
  %s21 = inlined_call_operand.vmem [shape: f32[2,1,128], index: 21, kind: input, shape index: {}]
  %s22 = inlined_call_operand.vmem [shape: bf16[128,128], index: 22, kind: input, shape index: {}]
  %s23 = inlined_call_operand.vmem [shape: f32[2,16,128], index: 23, kind: output, shape index: {}]
  %s24 = sld [smem:[#allocation0]]
  $region137: #{fwd.1} parent=0
    _
  %s26 = ssub.s32 1, %s24
  %s27 = scalar_select 0, %s26, %s24
  $region1: #{fwd.1} parent=0
    #allocation3 [shape = 'u8[262144]{0}', space=vmem, size = 0x40000, scoped, tag = 'input window, operand 18']
    #allocation4 [shape = 's32[2]{0}', space=sflag, size = 0x8, scoped, tag = 'scoped memory for fwd.1']
    %28 = vsyncpa [#allocation4], 0
    %s29 = scalar_lea.sflag [#allocation4], 1
    %30 = vsyncpa %s29, 0
    loop: start=0, step=1, limit=4
    $region2: #{fwd.1} parent=1 // loop_pre_header
      _
    $region3: #{fwd.1} parent=1 // loop_header
      %s32 = sphi 0, %s36
      %p33 = scmp.ge.s32.totalorder %s32, 4
      %s39 = sphi 0, %s51
      %s40 = sphi 0, %s47
      %s41 = sphi 0, %s39
      %s42 = sphi 0, %s40
      %s43 = sphi 0, %s41
      %s44 = sphi 0, %s42
      %s54 = sphi 0, %s56
      %s57 = sphi 0, %s54
      %s58 = sphi 0, %s57
      %s74 = sphi 0, %s58
      %s80 = sphi 0, %s82
      %s83 = sphi 0, %s80
      %s84 = sphi 0, %s83
      %s100 = sphi 0, %s84
      %s106 = sphi 0, %s108
      %s109 = sphi 0, %s106
      %s110 = sphi 0, %s109
      %s126 = sphi 0, %s110
      %s130 = sphi 0, %s130
      %s132 = sphi 0, %s130
      %s133 = sphi 0, %s132
      %s147 = sphi 0, %s133
      %s153 = sphi 0, %s155
      %s156 = sphi 0, %s153
      %s157 = sphi 0, %s156
      %s173 = sphi 0, %s157
      %s179 = sphi 0, %s181
      %s182 = sphi 0, %s179
      %s183 = sphi 0, %s182
      %s199 = sphi 0, %s183
      %s205 = sphi 0, %s207
      %s208 = sphi 0, %s205
      %s209 = sphi 0, %s208
      %s225 = sphi 0, %s209
      %s231 = sphi 0, %s233
      %s234 = sphi 0, %s231
      %s235 = sphi 0, %s234
      %s251 = sphi 0, %s235
      %s257 = sphi 0, %s259
      %s260 = sphi 0, %s257
      %s261 = sphi 0, %s260
      %s277 = sphi 0, %s261
      %s283 = sphi 0, %s285
      %s286 = sphi 0, %s283
      %s287 = sphi 0, %s286
      %s303 = sphi 0, %s287
      %s309 = sphi 0, %s311
      %s312 = sphi 0, %s309
      %s313 = sphi 0, %s312
      %s329 = sphi 0, %s313
      %s335 = sphi 0, %s337
      %s338 = sphi 0, %s335
      %s339 = sphi 0, %s338
      %s355 = sphi 0, %s339
      %s361 = sphi 0, %s363
      %s364 = sphi 0, %s361
      %s365 = sphi 0, %s364
      %s381 = sphi 0, %s365
      %s387 = sphi 0, %s389
      %s390 = sphi 0, %s387
      %s391 = sphi 0, %s390
      %s407 = sphi 0, %s391
      %s413 = sphi 0, %s415
      %s416 = sphi 0, %s413
      %s417 = sphi 0, %s416
      %s433 = sphi 0, %s417
      %s439 = sphi 0, %s441
      %s442 = sphi 0, %s439
      %s443 = sphi 0, %s442
      %s459 = sphi 0, %s443
      %s465 = sphi 0, %s467
      %s468 = sphi 0, %s465
      %s469 = sphi 0, %s468
      %s485 = sphi 0, %s469
      %s491 = sphi 0, %s493
      %s494 = sphi 0, %s491
      %s495 = sphi 0, %s494
      %s511 = sphi 0, %s495
      %s517 = sphi 0, %s519
      %s520 = sphi 0, %s517
      %s521 = sphi 0, %s520
      %s537 = sphi 0, %s521
      %s543 = sphi 0, %s545
      %s546 = sphi 0, %s543
      %s547 = sphi 0, %s546
      %s563 = sphi 0, %s547
      %s569 = sphi 0, %s571
      %s572 = sphi 0, %s569
      %s573 = sphi 0, %s572
      %s589 = sphi 0, %s573
      %s595 = sphi 0, %s597
      %s598 = sphi 0, %s595
      %s599 = sphi 0, %s598
      %s615 = sphi 0, %s599
      %s619 = sphi 0, %s619
      %s621 = sphi 0, %s619
      %s622 = sphi 0, %s621
      %s636 = sphi 0, %s622
      %s642 = sphi 0, %s644
      %s645 = sphi 0, %s642
      %s646 = sphi 0, %s645
      %s662 = sphi 0, %s646
    $region4: #{fwd.1} parent=1 // loop_header_branch
      %35 = sbr.rel (%p33) target = $region8
    $region5: #{fwd.1} parent=1 // loop_body
      %s37 = ssub.s32 %s32, 1
      %s38 = ssub.s32 %s32, 2
      %s45 = sadd.s32 1, %s40
      %p46 = scmp.ge.s32.totalorder %s45, 2
      %s47 = scalar_select %p46, 0, %s45
      %s48 = sadd.s32 1, %s39
      %s49 = scalar_select %p46, %s48, %s39
      %p50 = scmp.ge.s32.totalorder %s49, 1
      %s51 = scalar_select %p50, 0, %s49
      %s52 = ssub.s32 %s39, %s51
      %p53 = scmp.eq.s32.totalorder %s52, 0
      %s55 = sadd.s32 %s54, 1
      %s56 = scalar_select %p53, %s54, %s55
      %p59 = pneg %p53
      %p60 = scmp.eq.s32.totalorder %s32, 1
      %p61 = por %p59, %p60
      %p62 = scmp.ne.s32.totalorder %s54, %s57
      %p63 = scmp.eq.s32.totalorder %s32, 0
      %p64 = por %p62, %p63
      %p65 = scmp.ne.s32.totalorder %s54, %s57
      %p66 = scmp.eq.s32.totalorder %s37, 1
      %p67 = por %p65, %p66
      %p68 = scmp.ne.s32.totalorder %s57, %s58
      %p69 = scmp.eq.s32.totalorder %s37, 0
      %p70 = por %p68, %p69
      %p71 = scmp.ne.s32.totalorder %s57, %s58
      %p72 = scmp.eq.s32.totalorder %s38, 1
      %p73 = por %p71, %p72
      %p75 = scmp.ne.s32.totalorder %s58, %s74
      %p76 = scmp.eq.s32.totalorder %s38, 0
      %p77 = por %p75, %p76
      %s78 = ssub.s32 %s39, %s51
      %p79 = scmp.eq.s32.totalorder %s78, 0
      %s81 = sadd.s32 %s80, 1
      %s82 = scalar_select %p79, %s80, %s81
      %p85 = pneg %p79
      %p86 = scmp.eq.s32.totalorder %s32, 1
      %p87 = por %p85, %p86
      %p88 = scmp.ne.s32.totalorder %s80, %s83
      %p89 = scmp.eq.s32.totalorder %s32, 0
      %p90 = por %p88, %p89
      %p91 = scmp.ne.s32.totalorder %s80, %s83
      %p92 = scmp.eq.s32.totalorder %s37, 1
      %p93 = por %p91, %p92
      %p94 = scmp.ne.s32.totalorder %s83, %s84
      %p95 = scmp.eq.s32.totalorder %s37, 0
      %p96 = por %p94, %p95
      %p97 = scmp.ne.s32.totalorder %s83, %s84
      %p98 = scmp.eq.s32.totalorder %s38, 1
      %p99 = por %p97, %p98
      %p101 = scmp.ne.s32.totalorder %s84, %s100
      %p102 = scmp.eq.s32.totalorder %s38, 0
      %p103 = por %p101, %p102
      %s104 = ssub.s32 %s40, %s47
      %p105 = scmp.eq.s32.totalorder %s104, 0
      %s107 = sadd.s32 %s106, 1
      %s108 = scalar_select %p105, %s106, %s107
      %p111 = pneg %p105
      %p112 = scmp.eq.s32.totalorder %s32, 1
      %p113 = por %p111, %p112
      %p114 = scmp.ne.s32.totalorder %s106, %s109
      %p115 = scmp.eq.s32.totalorder %s32, 0
      %p116 = por %p114, %p115
      %p117 = scmp.ne.s32.totalorder %s106, %s109
      %p118 = scmp.eq.s32.totalorder %s37, 1
      %p119 = por %p117, %p118
      %p120 = scmp.ne.s32.totalorder %s109, %s110
      %p121 = scmp.eq.s32.totalorder %s37, 0
      %p122 = por %p120, %p121
      %p123 = scmp.ne.s32.totalorder %s109, %s110
      %p124 = scmp.eq.s32.totalorder %s38, 1
      %p125 = por %p123, %p124
      %p127 = scmp.ne.s32.totalorder %s110, %s126
      %p128 = scmp.eq.s32.totalorder %s38, 0
      %p129 = por %p127, %p128
      %s131 = sadd.s32 %s130, 1
      %p134 = scmp.eq.s32.totalorder %s32, 1
      %p135 = scmp.ne.s32.totalorder %s130, %s132
      %p136 = scmp.eq.s32.totalorder %s32, 0
      %p137 = por %p135, %p136
      %p138 = scmp.ne.s32.totalorder %s130, %s132
      %p139 = scmp.eq.s32.totalorder %s37, 1
      %p140 = por %p138, %p139
      %p141 = scmp.ne.s32.totalorder %s132, %s133
      %p142 = scmp.eq.s32.totalorder %s37, 0
      %p143 = por %p141, %p142
      %p144 = scmp.ne.s32.totalorder %s132, %s133
      %p145 = scmp.eq.s32.totalorder %s38, 1
      %p146 = por %p144, %p145
      %p148 = scmp.ne.s32.totalorder %s133, %s147
      %p149 = scmp.eq.s32.totalorder %s38, 0
      %p150 = por %p148, %p149
      %s151 = ssub.s32 %s40, %s47
      %p152 = scmp.eq.s32.totalorder %s151, 0
      %s154 = sadd.s32 %s153, 1
      %s155 = scalar_select %p152, %s153, %s154
      %p158 = pneg %p152
      %p159 = scmp.eq.s32.totalorder %s32, 1
      %p160 = por %p158, %p159
      %p161 = scmp.ne.s32.totalorder %s153, %s156
      %p162 = scmp.eq.s32.totalorder %s32, 0
      %p163 = por %p161, %p162
      %p164 = scmp.ne.s32.totalorder %s153, %s156
      %p165 = scmp.eq.s32.totalorder %s37, 1
      %p166 = por %p164, %p165
      %p167 = scmp.ne.s32.totalorder %s156, %s157
      %p168 = scmp.eq.s32.totalorder %s37, 0
      %p169 = por %p167, %p168
      %p170 = scmp.ne.s32.totalorder %s156, %s157
      %p171 = scmp.eq.s32.totalorder %s38, 1
      %p172 = por %p170, %p171
      %p174 = scmp.ne.s32.totalorder %s157, %s173
      %p175 = scmp.eq.s32.totalorder %s38, 0
      %p176 = por %p174, %p175
      %s177 = ssub.s32 %s40, %s47
      %p178 = scmp.eq.s32.totalorder %s177, 0
      %s180 = sadd.s32 %s179, 1
      %s181 = scalar_select %p178, %s179, %s180
      %p184 = pneg %p178
      %p185 = scmp.eq.s32.totalorder %s32, 1
      %p186 = por %p184, %p185
      %p187 = scmp.ne.s32.totalorder %s179, %s182
      %p188 = scmp.eq.s32.totalorder %s32, 0
      %p189 = por %p187, %p188
      %p190 = scmp.ne.s32.totalorder %s179, %s182
      %p191 = scmp.eq.s32.totalorder %s37, 1
      %p192 = por %p190, %p191
      %p193 = scmp.ne.s32.totalorder %s182, %s183
      %p194 = scmp.eq.s32.totalorder %s37, 0
      %p195 = por %p193, %p194
      %p196 = scmp.ne.s32.totalorder %s182, %s183
      %p197 = scmp.eq.s32.totalorder %s38, 1
      %p198 = por %p196, %p197
      %p200 = scmp.ne.s32.totalorder %s183, %s199
      %p201 = scmp.eq.s32.totalorder %s38, 0
      %p202 = por %p200, %p201
      %s203 = ssub.s32 %s40, %s47
      %p204 = scmp.eq.s32.totalorder %s203, 0
      %s206 = sadd.s32 %s205, 1
      %s207 = scalar_select %p204, %s205, %s206
      %p210 = pneg %p204
      %p211 = scmp.eq.s32.totalorder %s32, 1
      %p212 = por %p210, %p211
      %p213 = scmp.ne.s32.totalorder %s205, %s208
      %p214 = scmp.eq.s32.totalorder %s32, 0
      %p215 = por %p213, %p214
      %p216 = scmp.ne.s32.totalorder %s205, %s208
      %p217 = scmp.eq.s32.totalorder %s37, 1
      %p218 = por %p216, %p217
      %p219 = scmp.ne.s32.totalorder %s208, %s209
      %p220 = scmp.eq.s32.totalorder %s37, 0
      %p221 = por %p219, %p220
      %p222 = scmp.ne.s32.totalorder %s208, %s209
      %p223 = scmp.eq.s32.totalorder %s38, 1
      %p224 = por %p222, %p223
      %p226 = scmp.ne.s32.totalorder %s209, %s225
      %p227 = scmp.eq.s32.totalorder %s38, 0
      %p228 = por %p226, %p227
      %s229 = ssub.s32 %s40, %s47
      %p230 = scmp.eq.s32.totalorder %s229, 0
      %s232 = sadd.s32 %s231, 1
      %s233 = scalar_select %p230, %s231, %s232
      %p236 = pneg %p230
      %p237 = scmp.eq.s32.totalorder %s32, 1
      %p238 = por %p236, %p237
      %p239 = scmp.ne.s32.totalorder %s231, %s234
      %p240 = scmp.eq.s32.totalorder %s32, 0
      %p241 = por %p239, %p240
      %p242 = scmp.ne.s32.totalorder %s231, %s234
      %p243 = scmp.eq.s32.totalorder %s37, 1
      %p244 = por %p242, %p243
      %p245 = scmp.ne.s32.totalorder %s234, %s235
      %p246 = scmp.eq.s32.totalorder %s37, 0
      %p247 = por %p245, %p246
      %p248 = scmp.ne.s32.totalorder %s234, %s235
      %p249 = scmp.eq.s32.totalorder %s38, 1
      %p250 = por %p248, %p249
      %p252 = scmp.ne.s32.totalorder %s235, %s251
      %p253 = scmp.eq.s32.totalorder %s38, 0
      %p254 = por %p252, %p253
      %s255 = ssub.s32 %s40, %s47
      %p256 = scmp.eq.s32.totalorder %s255, 0
      %s258 = sadd.s32 %s257, 1
      %s259 = scalar_select %p256, %s257, %s258
      %p262 = pneg %p256
      %p263 = scmp.eq.s32.totalorder %s32, 1
      %p264 = por %p262, %p263
      %p265 = scmp.ne.s32.totalorder %s257, %s260
      %p266 = scmp.eq.s32.totalorder %s32, 0
      %p267 = por %p265, %p266
      %p268 = scmp.ne.s32.totalorder %s257, %s260
      %p269 = scmp.eq.s32.totalorder %s37, 1
      %p270 = por %p268, %p269
      %p271 = scmp.ne.s32.totalorder %s260, %s261
      %p272 = scmp.eq.s32.totalorder %s37, 0
      %p273 = por %p271, %p272
      %p274 = scmp.ne.s32.totalorder %s260, %s261
      %p275 = scmp.eq.s32.totalorder %s38, 1
      %p276 = por %p274, %p275
      %p278 = scmp.ne.s32.totalorder %s261, %s277
      %p279 = scmp.eq.s32.totalorder %s38, 0
      %p280 = por %p278, %p279
      %s281 = ssub.s32 %s40, %s47
      %p282 = scmp.eq.s32.totalorder %s281, 0
      %s284 = sadd.s32 %s283, 1
      %s285 = scalar_select %p282, %s283, %s284
      %p288 = pneg %p282
      %p289 = scmp.eq.s32.totalorder %s32, 1
      %p290 = por %p288, %p289
      %p291 = scmp.ne.s32.totalorder %s283, %s286
      %p292 = scmp.eq.s32.totalorder %s32, 0
      %p293 = por %p291, %p292
      %p294 = scmp.ne.s32.totalorder %s283, %s286
      %p295 = scmp.eq.s32.totalorder %s37, 1
      %p296 = por %p294, %p295
      %p297 = scmp.ne.s32.totalorder %s286, %s287
      %p298 = scmp.eq.s32.totalorder %s37, 0
      %p299 = por %p297, %p298
      %p300 = scmp.ne.s32.totalorder %s286, %s287
      %p301 = scmp.eq.s32.totalorder %s38, 1
      %p302 = por %p300, %p301
      %p304 = scmp.ne.s32.totalorder %s287, %s303
      %p305 = scmp.eq.s32.totalorder %s38, 0
      %p306 = por %p304, %p305
      %s307 = ssub.s32 %s40, %s47
      %p308 = scmp.eq.s32.totalorder %s307, 0
      %s310 = sadd.s32 %s309, 1
      %s311 = scalar_select %p308, %s309, %s310
      %p314 = pneg %p308
      %p315 = scmp.eq.s32.totalorder %s32, 1
      %p316 = por %p314, %p315
      %p317 = scmp.ne.s32.totalorder %s309, %s312
      %p318 = scmp.eq.s32.totalorder %s32, 0
      %p319 = por %p317, %p318
      %p320 = scmp.ne.s32.totalorder %s309, %s312
      %p321 = scmp.eq.s32.totalorder %s37, 1
      %p322 = por %p320, %p321
      %p323 = scmp.ne.s32.totalorder %s312, %s313
      %p324 = scmp.eq.s32.totalorder %s37, 0
      %p325 = por %p323, %p324
      %p326 = scmp.ne.s32.totalorder %s312, %s313
      %p327 = scmp.eq.s32.totalorder %s38, 1
      %p328 = por %p326, %p327
      %p330 = scmp.ne.s32.totalorder %s313, %s329
      %p331 = scmp.eq.s32.totalorder %s38, 0
      %p332 = por %p330, %p331
      %s333 = ssub.s32 %s40, %s47
      %p334 = scmp.eq.s32.totalorder %s333, 0
      %s336 = sadd.s32 %s335, 1
      %s337 = scalar_select %p334, %s335, %s336
      %p340 = pneg %p334
      %p341 = scmp.eq.s32.totalorder %s32, 1
      %p342 = por %p340, %p341
      %p343 = scmp.ne.s32.totalorder %s335, %s338
      %p344 = scmp.eq.s32.totalorder %s32, 0
      %p345 = por %p343, %p344
      %p346 = scmp.ne.s32.totalorder %s335, %s338
      %p347 = scmp.eq.s32.totalorder %s37, 1
      %p348 = por %p346, %p347
      %p349 = scmp.ne.s32.totalorder %s338, %s339
      %p350 = scmp.eq.s32.totalorder %s37, 0
      %p351 = por %p349, %p350
      %p352 = scmp.ne.s32.totalorder %s338, %s339
      %p353 = scmp.eq.s32.totalorder %s38, 1
      %p354 = por %p352, %p353
      %p356 = scmp.ne.s32.totalorder %s339, %s355
      %p357 = scmp.eq.s32.totalorder %s38, 0
      %p358 = por %p356, %p357
      %s359 = ssub.s32 %s40, %s47
      %p360 = scmp.eq.s32.totalorder %s359, 0
      %s362 = sadd.s32 %s361, 1
      %s363 = scalar_select %p360, %s361, %s362
      %p366 = pneg %p360
      %p367 = scmp.eq.s32.totalorder %s32, 1
      %p368 = por %p366, %p367
      %p369 = scmp.ne.s32.totalorder %s361, %s364
      %p370 = scmp.eq.s32.totalorder %s32, 0
      %p371 = por %p369, %p370
      %p372 = scmp.ne.s32.totalorder %s361, %s364
      %p373 = scmp.eq.s32.totalorder %s37, 1
      %p374 = por %p372, %p373
      %p375 = scmp.ne.s32.totalorder %s364, %s365
      %p376 = scmp.eq.s32.totalorder %s37, 0
      %p377 = por %p375, %p376
      %p378 = scmp.ne.s32.totalorder %s364, %s365
      %p379 = scmp.eq.s32.totalorder %s38, 1
      %p380 = por %p378, %p379
      %p382 = scmp.ne.s32.totalorder %s365, %s381
      %p383 = scmp.eq.s32.totalorder %s38, 0
      %p384 = por %p382, %p383
      %s385 = ssub.s32 %s40, %s47
      %p386 = scmp.eq.s32.totalorder %s385, 0
      %s388 = sadd.s32 %s387, 1
      %s389 = scalar_select %p386, %s387, %s388
      %p392 = pneg %p386
      %p393 = scmp.eq.s32.totalorder %s32, 1
      %p394 = por %p392, %p393
      %p395 = scmp.ne.s32.totalorder %s387, %s390
      %p396 = scmp.eq.s32.totalorder %s32, 0
      %p397 = por %p395, %p396
      %p398 = scmp.ne.s32.totalorder %s387, %s390
      %p399 = scmp.eq.s32.totalorder %s37, 1
      %p400 = por %p398, %p399
      %p401 = scmp.ne.s32.totalorder %s390, %s391
      %p402 = scmp.eq.s32.totalorder %s37, 0
      %p403 = por %p401, %p402
      %p404 = scmp.ne.s32.totalorder %s390, %s391
      %p405 = scmp.eq.s32.totalorder %s38, 1
      %p406 = por %p404, %p405
      %p408 = scmp.ne.s32.totalorder %s391, %s407
      %p409 = scmp.eq.s32.totalorder %s38, 0
      %p410 = por %p408, %p409
      %s411 = ssub.s32 %s40, %s47
      %p412 = scmp.eq.s32.totalorder %s411, 0
      %s414 = sadd.s32 %s413, 1
      %s415 = scalar_select %p412, %s413, %s414
      %p418 = pneg %p412
      %p419 = scmp.eq.s32.totalorder %s32, 1
      %p420 = por %p418, %p419
      %p421 = scmp.ne.s32.totalorder %s413, %s416
      %p422 = scmp.eq.s32.totalorder %s32, 0
      %p423 = por %p421, %p422
      %p424 = scmp.ne.s32.totalorder %s413, %s416
      %p425 = scmp.eq.s32.totalorder %s37, 1
      %p426 = por %p424, %p425
      %p427 = scmp.ne.s32.totalorder %s416, %s417
      %p428 = scmp.eq.s32.totalorder %s37, 0
      %p429 = por %p427, %p428
      %p430 = scmp.ne.s32.totalorder %s416, %s417
      %p431 = scmp.eq.s32.totalorder %s38, 1
      %p432 = por %p430, %p431
      %p434 = scmp.ne.s32.totalorder %s417, %s433
      %p435 = scmp.eq.s32.totalorder %s38, 0
      %p436 = por %p434, %p435
      %s437 = ssub.s32 %s40, %s47
      %p438 = scmp.eq.s32.totalorder %s437, 0
      %s440 = sadd.s32 %s439, 1
      %s441 = scalar_select %p438, %s439, %s440
      %p444 = pneg %p438
      %p445 = scmp.eq.s32.totalorder %s32, 1
      %p446 = por %p444, %p445
      %p447 = scmp.ne.s32.totalorder %s439, %s442
      %p448 = scmp.eq.s32.totalorder %s32, 0
      %p449 = por %p447, %p448
      %p450 = scmp.ne.s32.totalorder %s439, %s442
      %p451 = scmp.eq.s32.totalorder %s37, 1
      %p452 = por %p450, %p451
      %p453 = scmp.ne.s32.totalorder %s442, %s443
      %p454 = scmp.eq.s32.totalorder %s37, 0
      %p455 = por %p453, %p454
      %p456 = scmp.ne.s32.totalorder %s442, %s443
      %p457 = scmp.eq.s32.totalorder %s38, 1
      %p458 = por %p456, %p457
      %p460 = scmp.ne.s32.totalorder %s443, %s459
      %p461 = scmp.eq.s32.totalorder %s38, 0
      %p462 = por %p460, %p461
      %s463 = ssub.s32 %s40, %s47
      %p464 = scmp.eq.s32.totalorder %s463, 0
      %s466 = sadd.s32 %s465, 1
      %s467 = scalar_select %p464, %s465, %s466
      %p470 = pneg %p464
      %p471 = scmp.eq.s32.totalorder %s32, 1
      %p472 = por %p470, %p471
      %p473 = scmp.ne.s32.totalorder %s465, %s468
      %p474 = scmp.eq.s32.totalorder %s32, 0
      %p475 = por %p473, %p474
      %p476 = scmp.ne.s32.totalorder %s465, %s468
      %p477 = scmp.eq.s32.totalorder %s37, 1
      %p478 = por %p476, %p477
      %p479 = scmp.ne.s32.totalorder %s468, %s469
      %p480 = scmp.eq.s32.totalorder %s37, 0
      %p481 = por %p479, %p480
      %p482 = scmp.ne.s32.totalorder %s468, %s469
      %p483 = scmp.eq.s32.totalorder %s38, 1
      %p484 = por %p482, %p483
      %p486 = scmp.ne.s32.totalorder %s469, %s485
      %p487 = scmp.eq.s32.totalorder %s38, 0
      %p488 = por %p486, %p487
      %s489 = ssub.s32 %s40, %s47
      %p490 = scmp.eq.s32.totalorder %s489, 0
      %s492 = sadd.s32 %s491, 1
      %s493 = scalar_select %p490, %s491, %s492
      %p496 = pneg %p490
      %p497 = scmp.eq.s32.totalorder %s32, 1
      %p498 = por %p496, %p497
      %p499 = scmp.ne.s32.totalorder %s491, %s494
      %p500 = scmp.eq.s32.totalorder %s32, 0
      %p501 = por %p499, %p500
      %p502 = scmp.ne.s32.totalorder %s491, %s494
      %p503 = scmp.eq.s32.totalorder %s37, 1
      %p504 = por %p502, %p503
      %p505 = scmp.ne.s32.totalorder %s494, %s495
      %p506 = scmp.eq.s32.totalorder %s37, 0
      %p507 = por %p505, %p506
      %p508 = scmp.ne.s32.totalorder %s494, %s495
      %p509 = scmp.eq.s32.totalorder %s38, 1
      %p510 = por %p508, %p509
      %p512 = scmp.ne.s32.totalorder %s495, %s511
      %p513 = scmp.eq.s32.totalorder %s38, 0
      %p514 = por %p512, %p513
      %s515 = ssub.s32 %s40, %s47
      %p516 = scmp.eq.s32.totalorder %s515, 0
      %s518 = sadd.s32 %s517, 1
      %s519 = scalar_select %p516, %s517, %s518
      %p522 = pneg %p516
      %p523 = scmp.eq.s32.totalorder %s32, 1
      %p524 = por %p522, %p523
      %p525 = scmp.ne.s32.totalorder %s517, %s520
      %p526 = scmp.eq.s32.totalorder %s32, 0
      %p527 = por %p525, %p526
      %p528 = scmp.ne.s32.totalorder %s517, %s520
      %p529 = scmp.eq.s32.totalorder %s37, 1
      %p530 = por %p528, %p529
      %p531 = scmp.ne.s32.totalorder %s520, %s521
      %p532 = scmp.eq.s32.totalorder %s37, 0
      %p533 = por %p531, %p532
      %p534 = scmp.ne.s32.totalorder %s520, %s521
      %p535 = scmp.eq.s32.totalorder %s38, 1
      %p536 = por %p534, %p535
      %p538 = scmp.ne.s32.totalorder %s521, %s537
      %p539 = scmp.eq.s32.totalorder %s38, 0
      %p540 = por %p538, %p539
      %s541 = ssub.s32 %s40, %s47
      %p542 = scmp.eq.s32.totalorder %s541, 0
      %s544 = sadd.s32 %s543, 1
      %s545 = scalar_select %p542, %s543, %s544
      %p548 = pneg %p542
      %p549 = scmp.eq.s32.totalorder %s32, 1
      %p550 = por %p548, %p549
      %p551 = scmp.ne.s32.totalorder %s543, %s546
      %p552 = scmp.eq.s32.totalorder %s32, 0
      %p553 = por %p551, %p552
      %p554 = scmp.ne.s32.totalorder %s543, %s546
      %p555 = scmp.eq.s32.totalorder %s37, 1
      %p556 = por %p554, %p555
      %p557 = scmp.ne.s32.totalorder %s546, %s547
      %p558 = scmp.eq.s32.totalorder %s37, 0
      %p559 = por %p557, %p558
      %p560 = scmp.ne.s32.totalorder %s546, %s547
      %p561 = scmp.eq.s32.totalorder %s38, 1
      %p562 = por %p560, %p561
      %p564 = scmp.ne.s32.totalorder %s547, %s563
      %p565 = scmp.eq.s32.totalorder %s38, 0
      %p566 = por %p564, %p565
      %s567 = ssub.s32 %s40, %s47
      %p568 = scmp.eq.s32.totalorder %s567, 0
      %s570 = sadd.s32 %s569, 1
      %s571 = scalar_select %p568, %s569, %s570
      %p574 = pneg %p568
      %p575 = scmp.eq.s32.totalorder %s32, 1
      %p576 = por %p574, %p575
      %p577 = scmp.ne.s32.totalorder %s569, %s572
      %p578 = scmp.eq.s32.totalorder %s32, 0
      %p579 = por %p577, %p578
      %p580 = scmp.ne.s32.totalorder %s569, %s572
      %p581 = scmp.eq.s32.totalorder %s37, 1
      %p582 = por %p580, %p581
      %p583 = scmp.ne.s32.totalorder %s572, %s573
      %p584 = scmp.eq.s32.totalorder %s37, 0
      %p585 = por %p583, %p584
      %p586 = scmp.ne.s32.totalorder %s572, %s573
      %p587 = scmp.eq.s32.totalorder %s38, 1
      %p588 = por %p586, %p587
      %p590 = scmp.ne.s32.totalorder %s573, %s589
      %p591 = scmp.eq.s32.totalorder %s38, 0
      %p592 = por %p590, %p591
      %s593 = ssub.s32 %s40, %s47
      %p594 = scmp.eq.s32.totalorder %s593, 0
      %s596 = sadd.s32 %s595, 1
      %s597 = scalar_select %p594, %s595, %s596
      %p600 = pneg %p594
      %p601 = scmp.eq.s32.totalorder %s32, 1
      %p602 = por %p600, %p601
      %p603 = scmp.ne.s32.totalorder %s595, %s598
      %p604 = scmp.eq.s32.totalorder %s32, 0
      %p605 = por %p603, %p604
      %p606 = scmp.ne.s32.totalorder %s595, %s598
      %p607 = scmp.eq.s32.totalorder %s37, 1
      %p608 = por %p606, %p607
      %p609 = scmp.ne.s32.totalorder %s598, %s599
      %p610 = scmp.eq.s32.totalorder %s37, 0
      %p611 = por %p609, %p610
      %p612 = scmp.ne.s32.totalorder %s598, %s599
      %p613 = scmp.eq.s32.totalorder %s38, 1
      %p614 = por %p612, %p613
      %p616 = scmp.ne.s32.totalorder %s599, %s615
      %p617 = scmp.eq.s32.totalorder %s38, 0
      %p618 = por %p616, %p617
      %s620 = sadd.s32 %s619, 1
      %p623 = scmp.eq.s32.totalorder %s32, 1
      %p624 = scmp.ne.s32.totalorder %s619, %s621
      %p625 = scmp.eq.s32.totalorder %s32, 0
      %p626 = por %p624, %p625
      %p627 = scmp.ne.s32.totalorder %s619, %s621
      %p628 = scmp.eq.s32.totalorder %s37, 1
      %p629 = por %p627, %p628
      %p630 = scmp.ne.s32.totalorder %s621, %s622
      %p631 = scmp.eq.s32.totalorder %s37, 0
      %p632 = por %p630, %p631
      %p633 = scmp.ne.s32.totalorder %s621, %s622
      %p634 = scmp.eq.s32.totalorder %s38, 1
      %p635 = por %p633, %p634
      %p637 = scmp.ne.s32.totalorder %s622, %s636
      %p638 = scmp.eq.s32.totalorder %s38, 0
      %p639 = por %p637, %p638
      %s640 = ssub.s32 %s39, %s51
      %p641 = scmp.eq.s32.totalorder %s640, 0
      %s643 = sadd.s32 %s642, 1
      %s644 = scalar_select %p641, %s642, %s643
      %p647 = pneg %p641
      %p648 = scmp.eq.s32.totalorder %s32, 1
      %p649 = por %p647, %p648
      %p650 = scmp.ne.s32.totalorder %s642, %s645
      %p651 = scmp.eq.s32.totalorder %s32, 0
      %p652 = por %p650, %p651
      %p653 = scmp.ne.s32.totalorder %s642, %s645
      %p654 = scmp.eq.s32.totalorder %s37, 1
      %p655 = por %p653, %p654
      %p656 = scmp.ne.s32.totalorder %s645, %s646
      %p657 = scmp.eq.s32.totalorder %s37, 0
      %p658 = por %p656, %p657
      %p659 = scmp.ne.s32.totalorder %s645, %s646
      %p660 = scmp.eq.s32.totalorder %s38, 1
      %p661 = por %p659, %p660
      %p663 = scmp.ne.s32.totalorder %s646, %s662
      %p664 = scmp.eq.s32.totalorder %s38, 0
      %p665 = por %p663, %p664
      %p666 = scmp.le.s32.totalorder 1, %s32
      %p667 = scmp.lt.s32.totalorder %s32, 3
      %p668 = pnand %p666, %p667
      %p669 = pneg %p668
      // Predicated region
      $region9: #{fwd.1} parent=5 // pred_check
        _
      $region10: #{fwd.1} parent=5 // pred_check_branch
        %671 = sbr.rel (%p668) target = $region12
      $region11: #{fwd.1} parent=5 // pred_region
        %s672 = ssub.s32 %s32, 1
        // Predicated region
        $region13: #{fwd.1} parent=11 // pred_check
          %p673 = pneg %p70
        $region14: #{fwd.1} parent=11 // pred_check_branch
          %675 = sbr.rel (%p673) target = $region16
        $region15: #{fwd.1} parent=11 // pred_region
          %s676 = smul.u32 2, %s41
          %p677 = scmp.lt.s32.totalorder %s676, 1
          %s678 = scalar_select %p677, %s676, 1
          %s679 = smul.addr %s678, 2
          %s680 = smul.addr %s679, 8
          %s681 = scalar_lea.vmem %s0, %s680
          %s682 = smul.u32 2, %s41
        $region16: #{fwd.1} parent=11 // pred_fallthru
          _
        // Predicated region
        $region17: #{fwd.1} parent=11 // pred_check
          %p683 = pneg %p96
        $region18: #{fwd.1} parent=11 // pred_check_branch
          %685 = sbr.rel (%p683) target = $region20
        $region19: #{fwd.1} parent=11 // pred_region
          %p686 = scmp.lt.s32.totalorder %s41, 0
          %s687 = scalar_select %p686, %s41, 0
          %s688 = smul.addr %s687, 2
          %s689 = scalar_lea.vmem %s1, %s688
        $region20: #{fwd.1} parent=11 // pred_fallthru
          _
        // Predicated region
        $region21: #{fwd.1} parent=11 // pred_check
          %p690 = pneg %p143
        $region22: #{fwd.1} parent=11 // pred_check_branch
          %692 = sbr.rel (%p690) target = $region24
        $region23: #{fwd.1} parent=11 // pred_region
          _
        $region24: #{fwd.1} parent=11 // pred_fallthru
          _
        // Predicated region
        $region25: #{fwd.1} parent=11 // pred_check
          %p693 = pneg %p632
        $region26: #{fwd.1} parent=11 // pred_check_branch
          %695 = sbr.rel (%p693) target = $region28
        $region27: #{fwd.1} parent=11 // pred_region
          _
        $region28: #{fwd.1} parent=11 // pred_fallthru
          _
      $region12: #{fwd.1} parent=5 // pred_fallthru
        _
      %p696 = scmp.lt.s32.totalorder %s32, 2
      // Predicated region
      $region29: #{fwd.1} parent=5 // pred_check
        %p697 = pneg %p696
      $region30: #{fwd.1} parent=5 // pred_check_branch
        %699 = sbr.rel (%p697) target = $region32
      $region31: #{fwd.1} parent=5 // pred_region
        // Predicated region
        $region33: #{fwd.1} parent=31 // pred_check
          %p700 = pneg %p116
        $region34: #{fwd.1} parent=31 // pred_check_branch
          %702 = sbr.rel (%p700) target = $region36
        $region35: #{fwd.1} parent=31 // pred_region
          %p703 = scmp.lt.s32.totalorder %s40, 1
          %s704 = scalar_select %p703, %s40, 1
          %s705 = smul.addr %s704, 2
          %s706 = smul.addr %s705, 8
          %s707 = scalar_lea.vmem %s2, %s706
        $region36: #{fwd.1} parent=31 // pred_fallthru
          _
        // Predicated region
        $region37: #{fwd.1} parent=31 // pred_check
          %p708 = pneg %p163
        $region38: #{fwd.1} parent=31 // pred_check_branch
          %710 = sbr.rel (%p708) target = $region40
        $region39: #{fwd.1} parent=31 // pred_region
          %p711 = scmp.lt.s32.totalorder %s40, 1
          %s712 = scalar_select %p711, %s40, 1
          %s713 = smul.addr %s712, 48
          %s714 = smul.addr %s713, 4
          %s715 = scalar_lea.vmem %s4, %s714
        $region40: #{fwd.1} parent=31 // pred_fallthru
          _
        // Predicated region
        $region41: #{fwd.1} parent=31 // pred_check
          %p716 = pneg %p189
        $region42: #{fwd.1} parent=31 // pred_check_branch
          %718 = sbr.rel (%p716) target = $region44
        $region43: #{fwd.1} parent=31 // pred_region
          %p719 = scmp.lt.s32.totalorder %s40, 1
          %s720 = scalar_select %p719, %s40, 1
          %s721 = smul.addr %s720, 3
          %s722 = scalar_lea.vmem %s5, %s721
        $region44: #{fwd.1} parent=31 // pred_fallthru
          _
        // Predicated region
        $region45: #{fwd.1} parent=31 // pred_check
          %p723 = pneg %p215
        $region46: #{fwd.1} parent=31 // pred_check_branch
          %725 = sbr.rel (%p723) target = $region48
        $region47: #{fwd.1} parent=31 // pred_region
          %p726 = scmp.lt.s32.totalorder %s40, 1
          %s727 = scalar_select %p726, %s40, 1
          %s728 = smul.addr %s727, 16
          %s729 = smul.addr %s728, 4
          %s730 = scalar_lea.vmem %s6, %s729
        $region48: #{fwd.1} parent=31 // pred_fallthru
          _
        // Predicated region
        $region49: #{fwd.1} parent=31 // pred_check
          %p731 = pneg %p241
        $region50: #{fwd.1} parent=31 // pred_check_branch
          %733 = sbr.rel (%p731) target = $region52
        $region51: #{fwd.1} parent=31 // pred_region
          %p734 = scmp.lt.s32.totalorder %s40, 1
          %s735 = scalar_select %p734, %s40, 1
          %s736 = scalar_lea.vmem %s7, %s735
        $region52: #{fwd.1} parent=31 // pred_fallthru
          _
        // Predicated region
        $region53: #{fwd.1} parent=31 // pred_check
          %p737 = pneg %p267
        $region54: #{fwd.1} parent=31 // pred_check_branch
          %739 = sbr.rel (%p737) target = $region56
        $region55: #{fwd.1} parent=31 // pred_region
          %p740 = scmp.lt.s32.totalorder %s40, 1
          %s741 = scalar_select %p740, %s40, 1
          %s742 = scalar_lea.vmem %s8, %s741
        $region56: #{fwd.1} parent=31 // pred_fallthru
          _
        // Predicated region
        $region57: #{fwd.1} parent=31 // pred_check
          %p743 = pneg %p293
        $region58: #{fwd.1} parent=31 // pred_check_branch
          %745 = sbr.rel (%p743) target = $region60
        $region59: #{fwd.1} parent=31 // pred_region
          %p746 = scmp.lt.s32.totalorder %s40, 1
          %s747 = scalar_select %p746, %s40, 1
          %s748 = scalar_lea.vmem %s9, %s747
        $region60: #{fwd.1} parent=31 // pred_fallthru
          _
        // Predicated region
        $region61: #{fwd.1} parent=31 // pred_check
          %p749 = pneg %p319
        $region62: #{fwd.1} parent=31 // pred_check_branch
          %751 = sbr.rel (%p749) target = $region64
        $region63: #{fwd.1} parent=31 // pred_region
          %p752 = scmp.lt.s32.totalorder %s40, 1
          %s753 = scalar_select %p752, %s40, 1
          %s754 = smul.addr %s753, 16
          %s755 = smul.addr %s754, 4
          %s756 = scalar_lea.vmem %s10, %s755
        $region64: #{fwd.1} parent=31 // pred_fallthru
          _
        // Predicated region
        $region65: #{fwd.1} parent=31 // pred_check
          %p757 = pneg %p345
        $region66: #{fwd.1} parent=31 // pred_check_branch
          %759 = sbr.rel (%p757) target = $region68
        $region67: #{fwd.1} parent=31 // pred_region
          %p760 = scmp.lt.s32.totalorder %s40, 1
          %s761 = scalar_select %p760, %s40, 1
          %s762 = scalar_lea.vmem %s11, %s761
        $region68: #{fwd.1} parent=31 // pred_fallthru
          _
        // Predicated region
        $region69: #{fwd.1} parent=31 // pred_check
          %p763 = pneg %p371
        $region70: #{fwd.1} parent=31 // pred_check_branch
          %765 = sbr.rel (%p763) target = $region72
        $region71: #{fwd.1} parent=31 // pred_region
          %p766 = scmp.lt.s32.totalorder %s40, 1
          %s767 = scalar_select %p766, %s40, 1
          %s768 = smul.addr %s767, 16
          %s769 = smul.addr %s768, 4
          %s770 = scalar_lea.vmem %s12, %s769
        $region72: #{fwd.1} parent=31 // pred_fallthru
          _
        // Predicated region
        $region73: #{fwd.1} parent=31 // pred_check
          %p771 = pneg %p397
        $region74: #{fwd.1} parent=31 // pred_check_branch
          %773 = sbr.rel (%p771) target = $region76
        $region75: #{fwd.1} parent=31 // pred_region
          %p774 = scmp.lt.s32.totalorder %s40, 1
          %s775 = scalar_select %p774, %s40, 1
          %s776 = scalar_lea.vmem %s13, %s775
        $region76: #{fwd.1} parent=31 // pred_fallthru
          _
        // Predicated region
        $region77: #{fwd.1} parent=31 // pred_check
          %p777 = pneg %p423
        $region78: #{fwd.1} parent=31 // pred_check_branch
          %779 = sbr.rel (%p777) target = $region80
        $region79: #{fwd.1} parent=31 // pred_region
          %p780 = scmp.lt.s32.totalorder %s40, 1
          %s781 = scalar_select %p780, %s40, 1
          %s782 = scalar_lea.vmem %s14, %s781
        $region80: #{fwd.1} parent=31 // pred_fallthru
          _
        // Predicated region
        $region81: #{fwd.1} parent=31 // pred_check
          %p783 = pneg %p449
        $region82: #{fwd.1} parent=31 // pred_check_branch
          %785 = sbr.rel (%p783) target = $region84
        $region83: #{fwd.1} parent=31 // pred_region
          %p786 = scmp.lt.s32.totalorder %s40, 1
          %s787 = scalar_select %p786, %s40, 1
          %s788 = scalar_lea.vmem %s15, %s787
        $region84: #{fwd.1} parent=31 // pred_fallthru
          _
        // Predicated region
        $region85: #{fwd.1} parent=31 // pred_check
          %p789 = pneg %p475
        $region86: #{fwd.1} parent=31 // pred_check_branch
          %791 = sbr.rel (%p789) target = $region88
        $region87: #{fwd.1} parent=31 // pred_region
          %p792 = scmp.lt.s32.totalorder %s40, 1
          %s793 = scalar_select %p792, %s40, 1
          %s794 = smul.addr %s793, 64
          %s795 = smul.addr %s794, 4
          %s796 = scalar_lea.vmem %s16, %s795
        $region88: #{fwd.1} parent=31 // pred_fallthru
          _
        // Predicated region
        $region89: #{fwd.1} parent=31 // pred_check
          %p797 = pneg %p501
        $region90: #{fwd.1} parent=31 // pred_check_branch
          %799 = sbr.rel (%p797) target = $region92
        $region91: #{fwd.1} parent=31 // pred_region
          %p800 = scmp.lt.s32.totalorder %s40, 1
          %s801 = scalar_select %p800, %s40, 1
          %s802 = smul.addr %s801, 4
          %s803 = scalar_lea.vmem %s17, %s802
        $region92: #{fwd.1} parent=31 // pred_fallthru
          _
        // Predicated region
        $region93: #{fwd.1} parent=31 // pred_check
          %p804 = pneg %p527
        $region94: #{fwd.1} parent=31 // pred_check_branch
          %806 = sbr.rel (%p804) target = $region96
        $region95: #{fwd.1} parent=31 // pred_region
          %s807 = sand.u32 %s517, 1
          %s808 = scalar_lea.sflag [#allocation4], %s807
          %s809 = sand.u32 %s517, 1
          %s810 = smul.addr %s809, 256
          %s811 = scalar_lea.vmem [#allocation3], %s810
          %s813 = ssub.s32 4096, 4096
          %814 = vsyncadd %s808, %s813
          %s815 = smul.addr %s40, 64
          %s816 = smul.addr %s815, 64
          %s817 = scalar_lea.hbm %s18, %s816
          %s818 = sshll.u32 %s811, 4
          %s819 = int_to_ptr.vmem [resolvable:$true] %s818
          %824 = dma.hbm_to_vmem [thread:$0]  %s817, 4096, %s819, %s808, 64, 64, 4
        $region96: #{fwd.1} parent=31 // pred_fallthru
          _
        // Predicated region
        $region97: #{fwd.1} parent=31 // pred_check
          %p825 = pneg %p553
        $region98: #{fwd.1} parent=31 // pred_check_branch
          %827 = sbr.rel (%p825) target = $region100
        $region99: #{fwd.1} parent=31 // pred_region
          %p828 = scmp.lt.s32.totalorder %s40, 1
          %s829 = scalar_select %p828, %s40, 1
          %s830 = scalar_lea.vmem %s19, %s829
        $region100: #{fwd.1} parent=31 // pred_fallthru
          _
        // Predicated region
        $region101: #{fwd.1} parent=31 // pred_check
          %p831 = pneg %p579
        $region102: #{fwd.1} parent=31 // pred_check_branch
          %833 = sbr.rel (%p831) target = $region104
        $region103: #{fwd.1} parent=31 // pred_region
          %p834 = scmp.lt.s32.totalorder %s40, 1
          %s835 = scalar_select %p834, %s40, 1
          %s836 = scalar_lea.vmem %s20, %s835
        $region104: #{fwd.1} parent=31 // pred_fallthru
          _
        // Predicated region
        $region105: #{fwd.1} parent=31 // pred_check
          %p837 = pneg %p605
        $region106: #{fwd.1} parent=31 // pred_check_branch
          %839 = sbr.rel (%p837) target = $region108
        $region107: #{fwd.1} parent=31 // pred_region
          %p840 = scmp.lt.s32.totalorder %s40, 1
          %s841 = scalar_select %p840, %s40, 1
          %s842 = scalar_lea.vmem %s21, %s841
        $region108: #{fwd.1} parent=31 // pred_fallthru
          _
      $region32: #{fwd.1} parent=5 // pred_fallthru
        _
      %p843 = scmp.le.s32.totalorder 1, %s32
      %p844 = scmp.lt.s32.totalorder %s32, 3
      %p845 = pnand %p843, %p844
      %p846 = pneg %p845
      // Predicated region
      $region109: #{fwd.1} parent=5 // pred_check
        _
      $region110: #{fwd.1} parent=5 // pred_check_branch
        %848 = sbr.rel (%p845) target = $region112
      $region111: #{fwd.1} parent=5 // pred_region
        %s849 = ssub.s32 %s32, 1
        %s850 = sand.u32 %s520, 1
        %s851 = scalar_lea.sflag [#allocation4], %s850
        %s852 = sand.u32 %s520, 1
        %s853 = smul.addr %s852, 256
        %s854 = scalar_lea.vmem [#allocation3], %s853
        // Predicated region
        $region113: #{fwd.1} parent=111 // pred_check
          %p855 = pneg %p533
        $region114: #{fwd.1} parent=111 // pred_check_branch
          %857 = sbr.rel (%p855) target = $region116
        $region115: #{fwd.1} parent=111 // pred_region
          %858 = dma.done %s851, 4096
        $region116: #{fwd.1} parent=111 // pred_fallthru
          _
        %s859 = smul.u32 2, %s41
        %p860 = scmp.lt.s32.totalorder %s859, 1
        %s861 = scalar_select %p860, %s859, 1
        %s862 = smul.addr %s861, 2
        %s863 = smul.addr %s862, 8
        %s864 = scalar_lea.vmem %s0, %s863
        %p865 = pneg %p70
        %p866 = pneg %p67
        %p867 = scmp.lt.s32.totalorder %s41, 0
        %s868 = scalar_select %p867, %s41, 0
        %s869 = smul.addr %s868, 2
        %s870 = scalar_lea.vmem %s1, %s869
        %p871 = pneg %p96
        %p872 = pneg %p93
        %p873 = scmp.lt.s32.totalorder %s42, 1
        %s874 = scalar_select %p873, %s42, 1
        %s875 = smul.addr %s874, 2
        %s876 = smul.addr %s875, 8
        %s877 = scalar_lea.vmem %s2, %s876
        %p878 = pneg %p122
        %p879 = pneg %p119
        %p880 = pneg %p143
        %p881 = pneg %p140
        %p882 = scmp.lt.s32.totalorder %s42, 1
        %s883 = scalar_select %p882, %s42, 1
        %s884 = smul.addr %s883, 48
        %s885 = smul.addr %s884, 4
        %s886 = scalar_lea.vmem %s4, %s885
        %p887 = pneg %p169
        %p888 = pneg %p166
        %p889 = scmp.lt.s32.totalorder %s42, 1
        %s890 = scalar_select %p889, %s42, 1
        %s891 = smul.addr %s890, 3
        %s892 = scalar_lea.vmem %s5, %s891
        %p893 = pneg %p195
        %p894 = pneg %p192
        %p895 = scmp.lt.s32.totalorder %s42, 1
        %s896 = scalar_select %p895, %s42, 1
        %s897 = smul.addr %s896, 16
        %s898 = smul.addr %s897, 4
        %s899 = scalar_lea.vmem %s6, %s898
        %p900 = pneg %p221
        %p901 = pneg %p218
        %p902 = scmp.lt.s32.totalorder %s42, 1
        %s903 = scalar_select %p902, %s42, 1
        %s904 = scalar_lea.vmem %s7, %s903
        %p905 = pneg %p247
        %p906 = pneg %p244
        %p907 = scmp.lt.s32.totalorder %s42, 1
        %s908 = scalar_select %p907, %s42, 1
        %s909 = scalar_lea.vmem %s8, %s908
        %p910 = pneg %p273
        %p911 = pneg %p270
        %p912 = scmp.lt.s32.totalorder %s42, 1
        %s913 = scalar_select %p912, %s42, 1
        %s914 = scalar_lea.vmem %s9, %s913
        %p915 = pneg %p299
        %p916 = pneg %p296
        %p917 = scmp.lt.s32.totalorder %s42, 1
        %s918 = scalar_select %p917, %s42, 1
        %s919 = smul.addr %s918, 16
        %s920 = smul.addr %s919, 4
        %s921 = scalar_lea.vmem %s10, %s920
        %p922 = pneg %p325
        %p923 = pneg %p322
        %p924 = scmp.lt.s32.totalorder %s42, 1
        %s925 = scalar_select %p924, %s42, 1
        %s926 = scalar_lea.vmem %s11, %s925
        %p927 = pneg %p351
        %p928 = pneg %p348
        %p929 = scmp.lt.s32.totalorder %s42, 1
        %s930 = scalar_select %p929, %s42, 1
        %s931 = smul.addr %s930, 16
        %s932 = smul.addr %s931, 4
        %s933 = scalar_lea.vmem %s12, %s932
        %p934 = pneg %p377
        %p935 = pneg %p374
        %p936 = scmp.lt.s32.totalorder %s42, 1
        %s937 = scalar_select %p936, %s42, 1
        %s938 = scalar_lea.vmem %s13, %s937
        %p939 = pneg %p403
        %p940 = pneg %p400
        %p941 = scmp.lt.s32.totalorder %s42, 1
        %s942 = scalar_select %p941, %s42, 1
        %s943 = scalar_lea.vmem %s14, %s942
        %p944 = pneg %p429
        %p945 = pneg %p426
        %p946 = scmp.lt.s32.totalorder %s42, 1
        %s947 = scalar_select %p946, %s42, 1
        %s948 = scalar_lea.vmem %s15, %s947
        %p949 = pneg %p455
        %p950 = pneg %p452
        %p951 = scmp.lt.s32.totalorder %s42, 1
        %s952 = scalar_select %p951, %s42, 1
        %s953 = smul.addr %s952, 64
        %s954 = smul.addr %s953, 4
        %s955 = scalar_lea.vmem %s16, %s954
        %p956 = pneg %p481
        %p957 = pneg %p478
        %p958 = scmp.lt.s32.totalorder %s42, 1
        %s959 = scalar_select %p958, %s42, 1
        %s960 = smul.addr %s959, 4
        %s961 = scalar_lea.vmem %s17, %s960
        %p962 = pneg %p507
        %p963 = pneg %p504
        %s964 = sand.u32 %s520, 1
        %s965 = scalar_lea.sflag [#allocation4], %s964
        %s966 = sand.u32 %s520, 1
        %s967 = smul.addr %s966, 256
        %s968 = scalar_lea.vmem [#allocation3], %s967
        %p969 = pneg %p533
        %p970 = pneg %p530
        %p971 = scmp.lt.s32.totalorder %s42, 1
        %s972 = scalar_select %p971, %s42, 1
        %s973 = scalar_lea.vmem %s19, %s972
        %p974 = pneg %p559
        %p975 = pneg %p556
        %p976 = scmp.lt.s32.totalorder %s42, 1
        %s977 = scalar_select %p976, %s42, 1
        %s978 = scalar_lea.vmem %s20, %s977
        %p979 = pneg %p585
        %p980 = pneg %p582
        %p981 = scmp.lt.s32.totalorder %s42, 1
        %s982 = scalar_select %p981, %s42, 1
        %s983 = scalar_lea.vmem %s21, %s982
        %p984 = pneg %p611
        %p985 = pneg %p608
        %p986 = pneg %p632
        %p987 = pneg %p629
        %p988 = pneg %p658
        %p989 = pneg %p655
        %s990 = smul.u32 2, %s41
        %p991 = scmp.lt.s32.totalorder %s990, 1
        %s992 = scalar_select %p991, %s990, 1
        %s993 = smul.addr %s992, 2
        %s994 = smul.addr %s993, 8
        %s995 = scalar_lea.vmem %s23, %s994
        %s996 = smul.u32 2, %s41
        %p997 = scmp.lt.s32.totalorder %s996, 1
        %s998 = scalar_select %p997, %s996, 1
        %s999 = smul.addr %s998, 2
        %s1000 = smul.addr %s999, 8
        %s1001 = scalar_lea.vmem %s0, %s1000
        %s1002 = smul.u32 2, %s41
        %p1003 = scmp.lt.s32.totalorder %s41, 0
        %s1004 = scalar_select %p1003, %s41, 0
        %s1005 = smul.addr %s1004, 2
        %s1006 = scalar_lea.vmem %s1, %s1005
        %p1007 = scmp.lt.s32.totalorder %s42, 1
        %s1008 = scalar_select %p1007, %s42, 1
        %s1009 = smul.addr %s1008, 2
        %s1010 = smul.addr %s1009, 8
        %s1011 = scalar_lea.vmem %s2, %s1010
        %p1012 = scmp.lt.s32.totalorder %s42, 1
        %s1013 = scalar_select %p1012, %s42, 1
        %s1014 = smul.addr %s1013, 48
        %s1015 = smul.addr %s1014, 4
        %s1016 = scalar_lea.vmem %s4, %s1015
        %p1017 = scmp.lt.s32.totalorder %s42, 1
        %s1018 = scalar_select %p1017, %s42, 1
        %s1019 = smul.addr %s1018, 3
        %s1020 = scalar_lea.vmem %s5, %s1019
        %p1021 = scmp.lt.s32.totalorder %s42, 1
        %s1022 = scalar_select %p1021, %s42, 1
        %s1023 = smul.addr %s1022, 16
        %s1024 = smul.addr %s1023, 4
        %s1025 = scalar_lea.vmem %s6, %s1024
        %p1026 = scmp.lt.s32.totalorder %s42, 1
        %s1027 = scalar_select %p1026, %s42, 1
        %s1028 = scalar_lea.vmem %s7, %s1027
        %p1029 = scmp.lt.s32.totalorder %s42, 1
        %s1030 = scalar_select %p1029, %s42, 1
        %s1031 = scalar_lea.vmem %s8, %s1030
        %p1032 = scmp.lt.s32.totalorder %s42, 1
        %s1033 = scalar_select %p1032, %s42, 1
        %s1034 = scalar_lea.vmem %s9, %s1033
        %p1035 = scmp.lt.s32.totalorder %s42, 1
        %s1036 = scalar_select %p1035, %s42, 1
        %s1037 = smul.addr %s1036, 16
        %s1038 = smul.addr %s1037, 4
        %s1039 = scalar_lea.vmem %s10, %s1038
        %p1040 = scmp.lt.s32.totalorder %s42, 1
        %s1041 = scalar_select %p1040, %s42, 1
        %s1042 = scalar_lea.vmem %s11, %s1041
        %p1043 = scmp.lt.s32.totalorder %s42, 1
        %s1044 = scalar_select %p1043, %s42, 1
        %s1045 = smul.addr %s1044, 16
        %s1046 = smul.addr %s1045, 4
        %s1047 = scalar_lea.vmem %s12, %s1046
        %p1048 = scmp.lt.s32.totalorder %s42, 1
        %s1049 = scalar_select %p1048, %s42, 1
        %s1050 = scalar_lea.vmem %s13, %s1049
        %p1051 = scmp.lt.s32.totalorder %s42, 1
        %s1052 = scalar_select %p1051, %s42, 1
        %s1053 = scalar_lea.vmem %s14, %s1052
        %p1054 = scmp.lt.s32.totalorder %s42, 1
        %s1055 = scalar_select %p1054, %s42, 1
        %s1056 = scalar_lea.vmem %s15, %s1055
        %p1057 = scmp.lt.s32.totalorder %s42, 1
        %s1058 = scalar_select %p1057, %s42, 1
        %s1059 = smul.addr %s1058, 64
        %s1060 = smul.addr %s1059, 4
        %s1061 = scalar_lea.vmem %s16, %s1060
        %p1062 = scmp.lt.s32.totalorder %s42, 1
        %s1063 = scalar_select %p1062, %s42, 1
        %s1064 = smul.addr %s1063, 4
        %s1065 = scalar_lea.vmem %s17, %s1064
        %p1066 = scmp.lt.s32.totalorder %s42, 1
        %s1067 = scalar_select %p1066, %s42, 1
        %s1068 = scalar_lea.vmem %s19, %s1067
        %p1069 = scmp.lt.s32.totalorder %s42, 1
        %s1070 = scalar_select %p1069, %s42, 1
        %s1071 = scalar_lea.vmem %s20, %s1070
        %p1072 = scmp.lt.s32.totalorder %s42, 1
        %s1073 = scalar_select %p1072, %s42, 1
        %s1074 = scalar_lea.vmem %s21, %s1073
        %s1075 = smul.u32 2, %s41
        %p1076 = scmp.lt.s32.totalorder %s1075, 1
        %s1077 = scalar_select %p1076, %s1075, 1
        %s1078 = smul.addr %s1077, 2
        %s1079 = smul.addr %s1078, 8
        %s1080 = scalar_lea.vmem %s23, %s1079
        %s1081 = smul.u32 2, %s41
        %p1083 = scmp.eq.s32.totalorder %s42, 0
        // Predicated region
        $region117: #{fwd.1} parent=111 // pred_check
          %p1084 = pneg %p1083
        $region118: #{fwd.1} parent=111 // pred_check_branch
          %1086 = sbr.rel (%p1084) target = $region120
        $region119: #{fwd.1} parent=111 // pred_region
          %v1087 = vld [vmem:[%s1001] sm:$0xff]
          %v1088 = vld [vmem:[%s1001 + $0x8] sm:$0xff]
          %v1089 = vld [vmem:[%s1001 + $0x10] sm:$0xff]
          %v1090 = vld [vmem:[%s1001 + $0x18] sm:$0xff]
          %1091 = vst [vmem:[#allocation2] sm:$0xff] %v1087
          %1092 = vst [vmem:[#allocation2 + $0x8] sm:$0xff] %v1088
          %1093 = vst [vmem:[#allocation2 + $0x10] sm:$0xff] %v1089
          %1094 = vst [vmem:[#allocation2 + $0x18] sm:$0xff] %v1090
        $region120: #{fwd.1} parent=111 // pred_fallthru
          _
        %v1095 = vlaneseq
        %v1096 = vand.u32 %v1095, 127
        %vm1097 = vcmp.ge.s32.totalorder %v1096, 0
        %vm1098 = vcmp.lt.s32.totalorder %v1096, 64
        %vm1099 = vmand %vm1097, %vm1098
        %vm1100 = vcmp.ge.s32.totalorder %v1096, 64
        %vm1101 = vcmp.lt.s32.totalorder %v1096, 128
        %vm1102 = vmand %vm1100, %vm1101
        %v1103 = vld [vmem:[#allocation2] sm:$0xff]
        %v1104 = vld [vmem:[#allocation2 + $0x8] sm:$0xff]
        %v1105 = vld [vmem:[#allocation2 + $0x10] sm:$0xff]
        %v1106 = vld [vmem:[#allocation2 + $0x18] sm:$0xff]
        %v1107 = vpack.c.bf16 %v1104, %v1103
        %v1108 = vpack.c.bf16 %v1106, %v1105
        %v1109 = vld [vmem:[%s1016] sm:$0xff]
        %v1110 = vld [vmem:[%s1016 + $0x8] sm:$0xf]
        %v1111 = vld [vmem:[%s1016 + $0xc] sm:$0xff]
        %v1112 = vld [vmem:[%s1016 + $0x14] sm:$0xf]
        %v1113 = vld [vmem:[%s1016 + $0x18] sm:$0xff]
        %v1114 = vld [vmem:[%s1016 + $0x20] sm:$0xf]
        %v1115 = vld [vmem:[%s1016 + $0x24] sm:$0xff]
        %v1116 = vld [vmem:[%s1016 + $0x2c] sm:$0xf]
        %v1117 = vld [vmem:[%s1016 + $0x30] sm:$0xff]
        %v1118 = vld [vmem:[%s1016 + $0x38] sm:$0xf]
        %v1119 = vld [vmem:[%s1016 + $0x3c] sm:$0xff]
        %v1120 = vld [vmem:[%s1016 + $0x44] sm:$0xf]
        %v1121 = vld [vmem:[%s1016 + $0x48] sm:$0xff]
        %v1122 = vld [vmem:[%s1016 + $0x50] sm:$0xf]
        %v1123 = vld [vmem:[%s1016 + $0x54] sm:$0xff]
        %v1124 = vld [vmem:[%s1016 + $0x5c] sm:$0xf]
        %v1125 = vld [vmem:[%s1016 + $0x60] sm:$0xff]
        %v1126 = vld [vmem:[%s1016 + $0x68] sm:$0xf]
        %v1127 = vld [vmem:[%s1016 + $0x6c] sm:$0xff]
        %v1128 = vld [vmem:[%s1016 + $0x74] sm:$0xf]
        %v1129 = vld [vmem:[%s1016 + $0x78] sm:$0xff]
        %v1130 = vld [vmem:[%s1016 + $0x80] sm:$0xf]
        %v1131 = vld [vmem:[%s1016 + $0x84] sm:$0xff]
        %v1132 = vld [vmem:[%s1016 + $0x8c] sm:$0xf]
        %v1133 = vld [vmem:[%s1016 + $0x90] sm:$0xff]
        %v1134 = vld [vmem:[%s1016 + $0x98] sm:$0xf]
        %v1135 = vld [vmem:[%s1016 + $0x9c] sm:$0xff]
        %v1136 = vld [vmem:[%s1016 + $0xa4] sm:$0xf]
        %v1137 = vld [vmem:[%s1016 + $0xa8] sm:$0xff]
        %v1138 = vld [vmem:[%s1016 + $0xb0] sm:$0xf]
        %v1139 = vld [vmem:[%s1016 + $0xb4] sm:$0xff]
        %v1140 = vld [vmem:[%s1016 + $0xbc] sm:$0xf]
        %v1141 = vld [vmem:[%s1020] sm:$0x7]
        %v1143 = vlaneseq
        %v1144 = vshrl.u32 %v1143, 7
        %v1145 = vsub.s32 0, %v1144
        %v1146 = vrot.slane %v1141, %v1145
        %v1147 = vlaneseq
        %v1148 = vshrl.u32 %v1147, 7
        %v1149 = vsub.s32 1, %v1148
        %v1150 = vrot.slane %v1141, %v1149
        %v1151 = vlaneseq
        %v1152 = vshrl.u32 %v1151, 7
        %v1153 = vsub.s32 2, %v1152
        %v1154 = vrot.slane %v1141, %v1153
        %v1190 = vunpack.c.l.b16 %v1109
        %v1191 = vunpack.c.h.b16 %v1109
        %v1192 = vunpack.c.l.b16 %v1110
        %v1193 = vunpack.c.l.b16 %v1111
        %v1194 = vunpack.c.h.b16 %v1111
        %v1195 = vunpack.c.l.b16 %v1112
        %v1196 = vunpack.c.l.b16 %v1113
        %v1197 = vunpack.c.h.b16 %v1113
        %v1198 = vunpack.c.l.b16 %v1114
        %v1199 = vunpack.c.l.b16 %v1115
        %v1200 = vunpack.c.h.b16 %v1115
        %v1201 = vunpack.c.l.b16 %v1116
        %v1202 = vunpack.c.l.b16 %v1117
        %v1203 = vunpack.c.h.b16 %v1117
        %v1204 = vunpack.c.l.b16 %v1118
        %v1205 = vunpack.c.l.b16 %v1119
        %v1206 = vunpack.c.h.b16 %v1119
        %v1207 = vunpack.c.l.b16 %v1120
        %v1208 = vunpack.c.l.b16 %v1121
        %v1209 = vunpack.c.h.b16 %v1121
        %v1210 = vunpack.c.l.b16 %v1122
        %v1211 = vunpack.c.l.b16 %v1123
        %v1212 = vunpack.c.h.b16 %v1123
        %v1213 = vunpack.c.l.b16 %v1124
        %v1214 = vunpack.c.l.b16 %v1125
        %v1215 = vunpack.c.h.b16 %v1125
        %v1216 = vunpack.c.l.b16 %v1126
        %v1217 = vunpack.c.l.b16 %v1127
        %v1218 = vunpack.c.h.b16 %v1127
        %v1219 = vunpack.c.l.b16 %v1128
        %v1220 = vunpack.c.l.b16 %v1129
        %v1221 = vunpack.c.h.b16 %v1129
        %v1222 = vunpack.c.l.b16 %v1130
        %v1223 = vunpack.c.l.b16 %v1131
        %v1224 = vunpack.c.h.b16 %v1131
        %v1225 = vunpack.c.l.b16 %v1132
        %v1226 = vunpack.c.l.b16 %v1133
        %v1227 = vunpack.c.h.b16 %v1133
        %v1228 = vunpack.c.l.b16 %v1134
        %v1229 = vunpack.c.l.b16 %v1135
        %v1230 = vunpack.c.h.b16 %v1135
        %v1231 = vunpack.c.l.b16 %v1136
        %v1232 = vunpack.c.l.b16 %v1137
        %v1233 = vunpack.c.h.b16 %v1137
        %v1234 = vunpack.c.l.b16 %v1138
        %v1235 = vunpack.c.l.b16 %v1139
        %v1236 = vunpack.c.h.b16 %v1139
        %v1237 = vunpack.c.l.b16 %v1140
        %v1238 = vpack.c.b16 %v1193, %v1190
        %v1239 = vpack.c.b16 %v1194, %v1191
        %v1240 = vpack.c.b16 %v1195, %v1192
        %v1241 = vpack.c.b16 %v1199, %v1196
        %v1242 = vpack.c.b16 %v1200, %v1197
        %v1243 = vpack.c.b16 %v1201, %v1198
        %v1244 = vpack.c.b16 %v1205, %v1202
        %v1245 = vpack.c.b16 %v1206, %v1203
        %v1246 = vpack.c.b16 %v1207, %v1204
        %v1247 = vpack.c.b16 %v1211, %v1208
        %v1248 = vpack.c.b16 %v1212, %v1209
        %v1249 = vpack.c.b16 %v1213, %v1210
        %v1250 = vpack.c.b16 %v1217, %v1214
        %v1251 = vpack.c.b16 %v1218, %v1215
        %v1252 = vpack.c.b16 %v1219, %v1216
        %v1253 = vpack.c.b16 %v1223, %v1220
        %v1254 = vpack.c.b16 %v1224, %v1221
        %v1255 = vpack.c.b16 %v1225, %v1222
        %v1256 = vpack.c.b16 %v1229, %v1226
        %v1257 = vpack.c.b16 %v1230, %v1227
        %v1258 = vpack.c.b16 %v1231, %v1228
        %v1259 = vpack.c.b16 %v1235, %v1232
        %v1260 = vpack.c.b16 %v1236, %v1233
        %v1261 = vpack.c.b16 %v1237, %v1234
        %1286 = vmatprep.subr.bf16.mxu0 %v1239
        %1287 = vmatpush1.bf16.msra.mxu0 %v1238
        %1288 = vmatprep.subr.bf16.mxu0 %v1242
        %1289 = vmatpush1.bf16.msra.mxu0 %v1241
        %1290 = vmatprep.subr.bf16.mxu0 %v1245
        %1291 = vmatpush1.bf16.msra.mxu0 %v1244
        %1292 = vmatprep.subr.bf16.mxu0 %v1248
        %1293 = vmatpush1.bf16.msra.mxu0 %v1247
        %1294 = vmatprep.subr.bf16.mxu0 %v1251
        %1295 = vmatpush1.bf16.msra.mxu0 %v1250
        %1296 = vmatprep.subr.bf16.mxu0 %v1254
        %1297 = vmatpush1.bf16.msra.mxu0 %v1253
        %1298 = vmatprep.subr.bf16.mxu0 %v1257
        %1299 = vmatpush1.bf16.msra.mxu0 %v1256
        %1300 = vmatprep.subr.bf16.mxu0 %v1260
        %1301 = vmatpush1.bf16.msra.mxu0 %v1259
        %1302 = vmatprep.subr.bf16.mxu0 0
        %1303 = vmatpush1.bf16.msra.mxu0 0
        %1304 = vmatprep.subr.bf16.mxu0 0
        %1305 = vmatpush1.bf16.msra.mxu0 0
        %1306 = vmatprep.subr.bf16.mxu0 0
        %1307 = vmatpush1.bf16.msra.mxu0 0
        %1308 = vmatprep.subr.bf16.mxu0 0
        %1309 = vmatpush1.bf16.msra.mxu0 0
        %1310 = vmatprep.subr.bf16.mxu0 0
        %1311 = vmatpush1.bf16.msra.mxu0 0
        %1312 = vmatprep.subr.bf16.mxu0 0
        %1313 = vmatpush1.bf16.msra.mxu0 0
        %1314 = vmatprep.subr.bf16.mxu0 0
        %1315 = vmatpush1.bf16.msra.mxu0 0
        %1316 = vmatprep.subr.bf16.mxu0 0
        %1317 = vmatpush1.bf16.msra.mxu0 0
        %1318 = vmatprep.mubr.bf16.mxu0 0
        %1319 = vmatmul.mubr.bf16.gmra.mrb[0].mxu0 %v1107
        %v1320 = vpop.f32.mrb[0].mxu0
        %v1321 = vadd.f32 %v1146, %v1320
        %v1322 = vpop.f32.mrb[0].mxu0
        %v1323 = vadd.f32 %v1150, %v1322
        %v1324 = vpop.f32.mrb[0].mxu0
        %v1325 = vadd.f32 %v1146, %v1324
        %v1326 = vpop.f32.mrb[0].mxu0
        %v1327 = vadd.f32 %v1150, %v1326
        %1328 = vmatprep.mubr.bf16.mxu0 0
        %1329 = vmatmul.mubr.bf16.gmra.mrb[0].mxu0 %v1108
        %v1330 = vpop.f32.mrb[0].mxu0
        %v1331 = vadd.f32 %v1146, %v1330
        %v1332 = vpop.f32.mrb[0].mxu0
        %v1333 = vadd.f32 %v1150, %v1332
        %v1334 = vpop.f32.mrb[0].mxu0
        %v1335 = vadd.f32 %v1146, %v1334
        %v1336 = vpop.f32.mrb[0].mxu0
        %v1337 = vadd.f32 %v1150, %v1336
        %1338 = vdwg.mxu0
        %1339 = vmatprep.subr.bf16.mxu0 0
        %1340 = vmatpush1.bf16.msra.mxu0 %v1240
        %1341 = vmatprep.subr.bf16.mxu0 0
        %1342 = vmatpush1.bf16.msra.mxu0 %v1243
        %1343 = vmatprep.subr.bf16.mxu0 0
        %1344 = vmatpush1.bf16.msra.mxu0 %v1246
        %1345 = vmatprep.subr.bf16.mxu0 0
        %1346 = vmatpush1.bf16.msra.mxu0 %v1249
        %1347 = vmatprep.subr.bf16.mxu0 0
        %1348 = vmatpush1.bf16.msra.mxu0 %v1252
        %1349 = vmatprep.subr.bf16.mxu0 0
        %1350 = vmatpush1.bf16.msra.mxu0 %v1255
        %1351 = vmatprep.subr.bf16.mxu0 0
        %1352 = vmatpush1.bf16.msra.mxu0 %v1258
        %1353 = vmatprep.subr.bf16.mxu0 0
        %1354 = vmatpush1.bf16.msra.mxu0 %v1261
        %1355 = vmatprep.subr.bf16.mxu0 0
        %1356 = vmatpush1.bf16.msra.mxu0 0
        %1357 = vmatprep.subr.bf16.mxu0 0
        %1358 = vmatpush1.bf16.msra.mxu0 0
        %1359 = vmatprep.subr.bf16.mxu0 0
        %1360 = vmatpush1.bf16.msra.mxu0 0
        %1361 = vmatprep.subr.bf16.mxu0 0
        %1362 = vmatpush1.bf16.msra.mxu0 0
        %1363 = vmatprep.subr.bf16.mxu0 0
        %1364 = vmatpush1.bf16.msra.mxu0 0
        %1365 = vmatprep.subr.bf16.mxu0 0
        %1366 = vmatpush1.bf16.msra.mxu0 0
        %1367 = vmatprep.subr.bf16.mxu0 0
        %1368 = vmatpush1.bf16.msra.mxu0 0
        %1369 = vmatprep.subr.bf16.mxu0 0
        %1370 = vmatpush1.bf16.msra.mxu0 0
        %1371 = vmatprep.mubr.bf16.mxu0 0
        %1372 = vmatmul.mubr.bf16.gmra.mrb[0].mxu0 %v1107
        %v1373 = vpop.f32.mrb[0].mxu0
        %v1374 = vadd.f32 %v1154, %v1373
        %v1375 = vpop.f32.mrb[0].mxu0
        %v1376 = vpop.f32.mrb[0].mxu0
        %v1377 = vadd.f32 %v1154, %v1376
        %v1378 = vpop.f32.mrb[0].mxu0
        %1379 = vmatprep.mubr.bf16.mxu0 0
        %1380 = vmatmul.mubr.bf16.gmra.mrb[0].mxu0 %v1108
        %v1381 = vpop.f32.mrb[0].mxu0
        %v1382 = vadd.f32 %v1154, %v1381
        %v1383 = vpop.f32.mrb[0].mxu0
        %v1384 = vpop.f32.mrb[0].mxu0
        %v1385 = vadd.f32 %v1154, %v1384
        %v1386 = vpop.f32.mrb[0].mxu0
        %1387 = vdwg.mxu0
        %v1388 = vpack.c.bf16 %v1325, %v1321
        %v1389 = vpack.c.bf16 %v1335, %v1331
        %v1390 = vlaneseq
        %v1391 = vshrl.u32 %v1390, 7
        %v1392 = vadd.s32 %v1391, 8
        %vm1393 = vcmp.lt.s32.totalorder %v1096, 3
        %vm1394 = vcmp.ne.s32.totalorder %v1391, %v1096
        %vm1395 = vcmp.ne.s32.totalorder %v1392, %v1096
        %vm1396 = vmand %vm1393, %vm1394
        %vm1397 = vmand %vm1393, %vm1395
        %v1398 = vsel %vm1396, -1e+30, 0.0
        %v1399 = vsel %vm1397, -1e+30, 0.0
        %v1400 = vld [vmem:[%s1006] sm:$0x3]
        %v1403 = vunpack.c.l.s4 1966171168
        %v1404 = vunpack.c.0.s8 %v1403
        %v1405 = vlaneseq
        %v1406 = vshrl.u32 %v1405, 7
        %v1407 = vsub.s32 %v1404, %v1406
        %v1408 = vrot.slane %v1400, %v1407
        %v1409 = vcombine.high %v1408, %v1408
        %v1411 = vunpack.c.l.s4 1966171168
        %v1412 = vunpack.c.0.s8 %v1411
        %v1413 = vlaneseq
        %v1414 = vshrl.u32 %v1413, 7
        %v1415 = vsub.s32 %v1412, %v1414
        %v1416 = vrot.slane %v1408, %v1415
        %v1418 = vunpack.c.l.s4 1966171168
        %v1419 = vunpack.c.0.s8 %v1418
        %v1420 = vlaneseq
        %v1421 = vshrl.u32 %v1420, 7
        %v1422 = vsub.s32 %v1419, %v1421
        %v1423 = vrot.slane %v1409, %v1422
        %v1424 = vlaneseq
        %v1425 = vshrl.u32 %v1424, 7
        %v1426 = vsub.s32 0, %v1425
        %v1427 = vrot.slane %v1416, %v1426
        %v1428 = vlaneseq
        %v1429 = vshrl.u32 %v1428, 7
        %v1430 = vsub.s32 0, %v1429
        %v1431 = vrot.slane %v1423, %v1430
        %v1434 = vadd.f32 %v1398, %v1427
        %v1435 = vadd.f32 %v1399, %v1427
        %v1436 = vadd.f32 %v1398, %v1431
        %v1437 = vadd.f32 %v1399, %v1431
        %v1438 = vsel %vm1099, 1, 0
        %vm1439 = vcmp.eq.s32.totalorder %v1438, 1
        %v1440 = vsel %vm1439, %v1323, 0.0
        %v1441 = vsel %vm1439, %v1327, 0.0
        %v1442 = vsel %vm1439, %v1333, 0.0
        %v1443 = vsel %vm1439, %v1337, 0.0
        %v1444 = vpack.c.bf16 %v1441, %v1440
        %v1445 = vpack.c.bf16 %v1443, %v1442
        %v1446 = vsel %vm1439, %v1374, 0.0
        %v1447 = vsel %vm1439, %v1377, 0.0
        %v1448 = vsel %vm1439, %v1382, 0.0
        %v1449 = vsel %vm1439, %v1385, 0.0
        %v1450 = vpack.c.bf16 %v1447, %v1446
        %v1451 = vpack.c.bf16 %v1449, %v1448
        %1452 = vmatprep.subr.bf16.mxu0 0
        %1453 = vmatpush1.bf16.xpose.msra.mxu0 %v1444
        %1454 = vmatprep.subr.bf16.mxu0 0
        %1455 = vmatpush1.bf16.xpose.msra.mxu0 0
        %1456 = vmatprep.subr.bf16.mxu0 0
        %1457 = vmatpush1.bf16.xpose.msra.mxu0 0
        %1458 = vmatprep.subr.bf16.mxu0 0
        %1459 = vmatpush1.bf16.xpose.msra.mxu0 0
        %1460 = vmatprep.subr.bf16.mxu0 0
        %1461 = vmatpush1.bf16.xpose.msra.mxu0 0
        %1462 = vmatprep.subr.bf16.mxu0 0
        %1463 = vmatpush1.bf16.xpose.msra.mxu0 0
        %1464 = vmatprep.subr.bf16.mxu0 0
        %1465 = vmatpush1.bf16.xpose.msra.mxu0 0
        %1466 = vmatprep.subr.bf16.mxu0 0
        %1467 = vmatpush1.bf16.xpose.msra.mxu0 0
        %1468 = vmatprep.subr.bf16.mxu0 0
        %1469 = vmatpush1.bf16.xpose.msra.mxu0 0
        %1470 = vmatprep.subr.bf16.mxu0 0
        %1471 = vmatpush1.bf16.xpose.msra.mxu0 0
        %1472 = vmatprep.subr.bf16.mxu0 0
        %1473 = vmatpush1.bf16.xpose.msra.mxu0 0
        %1474 = vmatprep.subr.bf16.mxu0 0
        %1475 = vmatpush1.bf16.xpose.msra.mxu0 0
        %1476 = vmatprep.subr.bf16.mxu0 0
        %1477 = vmatpush1.bf16.xpose.msra.mxu0 0
        %1478 = vmatprep.subr.bf16.mxu0 0
        %1479 = vmatpush1.bf16.xpose.msra.mxu0 0
        %1480 = vmatprep.subr.bf16.mxu0 0
        %1481 = vmatpush1.bf16.xpose.msra.mxu0 0
        %1482 = vmatprep.subr.bf16.mxu0 0
        %1483 = vmatpush1.bf16.xpose.msra.mxu0 0
        %1484 = vmatprep.mubr.bf16.mxu0 0
        %1485 = vmatmul.mubr.bf16.gmra.mrb[0].mxu0 %v1388
        %v1486 = vpop.f32.mrb[0].mxu0
        %v1487 = vadd.f32 0.0, %v1486
        %v1488 = vpop.f32.mrb[0].mxu0
        %v1489 = vpop.f32.mrb[0].mxu0
        %v1490 = vadd.f32 0.0, %v1489
        %v1491 = vpop.f32.mrb[0].mxu0
        %1492 = vdwg.mxu0
        %1493 = vmatprep.subr.bf16.mxu0 0
        %1494 = vmatpush1.bf16.xpose.msra.mxu0 %v1445
        %1495 = vmatprep.subr.bf16.mxu0 0
        %1496 = vmatpush1.bf16.xpose.msra.mxu0 0
        %1497 = vmatprep.subr.bf16.mxu0 0
        %1498 = vmatpush1.bf16.xpose.msra.mxu0 0
        %1499 = vmatprep.subr.bf16.mxu0 0
        %1500 = vmatpush1.bf16.xpose.msra.mxu0 0
        %1501 = vmatprep.subr.bf16.mxu0 0
        %1502 = vmatpush1.bf16.xpose.msra.mxu0 0
        %1503 = vmatprep.subr.bf16.mxu0 0
        %1504 = vmatpush1.bf16.xpose.msra.mxu0 0
        %1505 = vmatprep.subr.bf16.mxu0 0
        %1506 = vmatpush1.bf16.xpose.msra.mxu0 0
        %1507 = vmatprep.subr.bf16.mxu0 0
        %1508 = vmatpush1.bf16.xpose.msra.mxu0 0
        %1509 = vmatprep.subr.bf16.mxu0 0
        %1510 = vmatpush1.bf16.xpose.msra.mxu0 0
        %1511 = vmatprep.subr.bf16.mxu0 0
        %1512 = vmatpush1.bf16.xpose.msra.mxu0 0
        %1513 = vmatprep.subr.bf16.mxu0 0
        %1514 = vmatpush1.bf16.xpose.msra.mxu0 0
        %1515 = vmatprep.subr.bf16.mxu0 0
        %1516 = vmatpush1.bf16.xpose.msra.mxu0 0
        %1517 = vmatprep.subr.bf16.mxu0 0
        %1518 = vmatpush1.bf16.xpose.msra.mxu0 0
        %1519 = vmatprep.subr.bf16.mxu0 0
        %1520 = vmatpush1.bf16.xpose.msra.mxu0 0
        %1521 = vmatprep.subr.bf16.mxu0 0
        %1522 = vmatpush1.bf16.xpose.msra.mxu0 0
        %1523 = vmatprep.subr.bf16.mxu0 0
        %1524 = vmatpush1.bf16.xpose.msra.mxu0 0
        %1525 = vmatprep.mubr.bf16.mxu0 0
        %1526 = vmatmul.mubr.bf16.gmra.mrb[0].mxu0 %v1389
        %v1527 = vpop.f32.mrb[0].mxu0
        %v1528 = vadd.f32 0.0, %v1527
        %v1529 = vpop.f32.mrb[0].mxu0
        %v1530 = vpop.f32.mrb[0].mxu0
        %v1531 = vadd.f32 0.0, %v1530
        %v1532 = vpop.f32.mrb[0].mxu0
        %1533 = vdwg.mxu0
        %v1534 = vmul.f32 %v1487, 0.125
        %v1535 = vmul.f32 %v1490, 0.125
        %v1536 = vmul.f32 %v1528, 0.125
        %v1537 = vmul.f32 %v1531, 0.125
        %v1538 = vadd.f32 %v1534, %v1434
        %v1539 = vadd.f32 %v1535, %v1435
        %v1540 = vadd.f32 %v1536, %v1436
        %v1541 = vadd.f32 %v1537, %v1437
        %vm1542 = vcmask 130048
        %v1543 = vsel %vm1542, %v1538, -inf
        %1544 = vmax.xlane.f32.xlu0 %v1543
        %v1545 = vpop.xlane.xlu0 %1544
        %v1546 = vsel %vm1542, %v1539, -inf
        %1547 = vmax.xlane.f32.xlu0 %v1546
        %v1548 = vpop.xlane.xlu0 %1547
        %v1549 = vsel %vm1542, %v1540, -inf
        %1550 = vmax.xlane.f32.xlu0 %v1549
        %v1551 = vpop.xlane.xlu0 %1550
        %v1552 = vsel %vm1542, %v1541, -inf
        %1553 = vmax.xlane.f32.xlu0 %v1552
        %v1554 = vpop.xlane.xlu0 %1553
        %v1555 = vsub.f32 %v1538, %v1545
        %v1556 = vsub.f32 %v1539, %v1548
        %v1557 = vsub.f32 %v1540, %v1551
        %v1558 = vsub.f32 %v1541, %v1554
        %v1559 = vmul.f32 %v1555, 1.442695
        %v1560 = vpow.pop %v1559
        %v1561 = vmul.f32 %v1556, 1.442695
        %v1562 = vpow.pop %v1561
        %v1563 = vmul.f32 %v1557, 1.442695
        %v1564 = vpow.pop %v1563
        %v1565 = vmul.f32 %v1558, 1.442695
        %v1566 = vpow.pop %v1565
        %v1567 = vsel %vm1542, %v1560, 0.0
        %1568 = vadd.xlane.f32.xlu0 %v1567
        %v1569 = vpop.xlane.xlu0 %1568
        %v1570 = vsel %vm1542, %v1562, 0.0
        %1571 = vadd.xlane.f32.xlu0 %v1570
        %v1572 = vpop.xlane.xlu0 %1571
        %v1573 = vsel %vm1542, %v1564, 0.0
        %1574 = vadd.xlane.f32.xlu0 %v1573
        %v1575 = vpop.xlane.xlu0 %1574
        %v1576 = vsel %vm1542, %v1566, 0.0
        %1577 = vadd.xlane.f32.xlu0 %v1576
        %v1578 = vpop.xlane.xlu0 %1577
        %v1579 = vrcp.pop %v1569
        %v1580 = vrcp.pop %v1572
        %v1581 = vrcp.pop %v1575
        %v1582 = vrcp.pop %v1578
        %v1583 = vmul.f32 %v1560, %v1579
        %v1584 = vmul.f32 %v1562, %v1580
        %v1585 = vmul.f32 %v1564, %v1581
        %v1586 = vmul.f32 %v1566, %v1582
        %v1587 = vpack.c.bf16 %v1584, %v1583
        %v1588 = vpack.c.bf16 %v1586, %v1585
        %v1589 = vsel %vm1102, 1, 0
        %vm1590 = vcmp.eq.s32.totalorder %v1589, 1
        %v1591 = vsel %vm1590, %v1323, 0.0
        %v1592 = vsel %vm1590, %v1327, 0.0
        %v1593 = vsel %vm1590, %v1333, 0.0
        %v1594 = vsel %vm1590, %v1337, 0.0
        %v1595 = vpack.c.bf16 %v1592, %v1591
        %v1596 = vpack.c.bf16 %v1594, %v1593
        %v1597 = vsel %vm1590, %v1374, 0.0
        %v1598 = vsel %vm1590, %v1377, 0.0
        %v1599 = vsel %vm1590, %v1382, 0.0
        %v1600 = vsel %vm1590, %v1385, 0.0
        %v1601 = vpack.c.bf16 %v1598, %v1597
        %v1602 = vpack.c.bf16 %v1600, %v1599
        %1603 = vmatprep.subr.bf16.mxu0 0
        %1604 = vmatpush1.bf16.xpose.msra.mxu0 %v1595
        %1605 = vmatprep.subr.bf16.mxu0 0
        %1606 = vmatpush1.bf16.xpose.msra.mxu0 0
        %1607 = vmatprep.subr.bf16.mxu0 0
        %1608 = vmatpush1.bf16.xpose.msra.mxu0 0
        %1609 = vmatprep.subr.bf16.mxu0 0
        %1610 = vmatpush1.bf16.xpose.msra.mxu0 0
        %1611 = vmatprep.subr.bf16.mxu0 0
        %1612 = vmatpush1.bf16.xpose.msra.mxu0 0
        %1613 = vmatprep.subr.bf16.mxu0 0
        %1614 = vmatpush1.bf16.xpose.msra.mxu0 0
        %1615 = vmatprep.subr.bf16.mxu0 0
        %1616 = vmatpush1.bf16.xpose.msra.mxu0 0
        %1617 = vmatprep.subr.bf16.mxu0 0
        %1618 = vmatpush1.bf16.xpose.msra.mxu0 0
        %1619 = vmatprep.subr.bf16.mxu0 0
        %1620 = vmatpush1.bf16.xpose.msra.mxu0 0
        %1621 = vmatprep.subr.bf16.mxu0 0
        %1622 = vmatpush1.bf16.xpose.msra.mxu0 0
        %1623 = vmatprep.subr.bf16.mxu0 0
        %1624 = vmatpush1.bf16.xpose.msra.mxu0 0
        %1625 = vmatprep.subr.bf16.mxu0 0
        %1626 = vmatpush1.bf16.xpose.msra.mxu0 0
        %1627 = vmatprep.subr.bf16.mxu0 0
        %1628 = vmatpush1.bf16.xpose.msra.mxu0 0
        %1629 = vmatprep.subr.bf16.mxu0 0
        %1630 = vmatpush1.bf16.xpose.msra.mxu0 0
        %1631 = vmatprep.subr.bf16.mxu0 0
        %1632 = vmatpush1.bf16.xpose.msra.mxu0 0
        %1633 = vmatprep.subr.bf16.mxu0 0
        %1634 = vmatpush1.bf16.xpose.msra.mxu0 0
        %1635 = vmatprep.mubr.bf16.mxu0 0
        %1636 = vmatmul.mubr.bf16.gmra.mrb[0].mxu0 %v1388
        %v1637 = vpop.f32.mrb[0].mxu0
        %v1638 = vadd.f32 0.0, %v1637
        %v1639 = vpop.f32.mrb[0].mxu0
        %v1640 = vpop.f32.mrb[0].mxu0
        %v1641 = vadd.f32 0.0, %v1640
        %v1642 = vpop.f32.mrb[0].mxu0
        %1643 = vdwg.mxu0
        %1644 = vmatprep.subr.bf16.mxu0 0
        %1645 = vmatpush1.bf16.xpose.msra.mxu0 %v1596
        %1646 = vmatprep.subr.bf16.mxu0 0
        %1647 = vmatpush1.bf16.xpose.msra.mxu0 0
        %1648 = vmatprep.subr.bf16.mxu0 0
        %1649 = vmatpush1.bf16.xpose.msra.mxu0 0
        %1650 = vmatprep.subr.bf16.mxu0 0
        %1651 = vmatpush1.bf16.xpose.msra.mxu0 0
        %1652 = vmatprep.subr.bf16.mxu0 0
        %1653 = vmatpush1.bf16.xpose.msra.mxu0 0
        %1654 = vmatprep.subr.bf16.mxu0 0
        %1655 = vmatpush1.bf16.xpose.msra.mxu0 0
        %1656 = vmatprep.subr.bf16.mxu0 0
        %1657 = vmatpush1.bf16.xpose.msra.mxu0 0
        %1658 = vmatprep.subr.bf16.mxu0 0
        %1659 = vmatpush1.bf16.xpose.msra.mxu0 0
        %1660 = vmatprep.subr.bf16.mxu0 0
        %1661 = vmatpush1.bf16.xpose.msra.mxu0 0
        %1662 = vmatprep.subr.bf16.mxu0 0
        %1663 = vmatpush1.bf16.xpose.msra.mxu0 0
        %1664 = vmatprep.subr.bf16.mxu0 0
        %1665 = vmatpush1.bf16.xpose.msra.mxu0 0
        %1666 = vmatprep.subr.bf16.mxu0 0
        %1667 = vmatpush1.bf16.xpose.msra.mxu0 0
        %1668 = vmatprep.subr.bf16.mxu0 0
        %1669 = vmatpush1.bf16.xpose.msra.mxu0 0
        %1670 = vmatprep.subr.bf16.mxu0 0
        %1671 = vmatpush1.bf16.xpose.msra.mxu0 0
        %1672 = vmatprep.subr.bf16.mxu0 0
        %1673 = vmatpush1.bf16.xpose.msra.mxu0 0
        %1674 = vmatprep.subr.bf16.mxu0 0
        %1675 = vmatpush1.bf16.xpose.msra.mxu0 0
        %1676 = vmatprep.mubr.bf16.mxu0 0
        %1677 = vmatmul.mubr.bf16.gmra.mrb[0].mxu0 %v1389
        %v1678 = vpop.f32.mrb[0].mxu0
        %v1679 = vadd.f32 0.0, %v1678
        %v1680 = vpop.f32.mrb[0].mxu0
        %v1681 = vpop.f32.mrb[0].mxu0
        %v1682 = vadd.f32 0.0, %v1681
        %v1683 = vpop.f32.mrb[0].mxu0
        %1684 = vdwg.mxu0
        %v1685 = vmul.f32 %v1638, 0.125
        %v1686 = vmul.f32 %v1641, 0.125
        %v1687 = vmul.f32 %v1679, 0.125
        %v1688 = vmul.f32 %v1682, 0.125
        %v1689 = vadd.f32 %v1685, %v1434
        %v1690 = vadd.f32 %v1686, %v1435
        %v1691 = vadd.f32 %v1687, %v1436
        %v1692 = vadd.f32 %v1688, %v1437
        %v1693 = vsel %vm1542, %v1689, -inf
        %1694 = vmax.xlane.f32.xlu0 %v1693
        %v1695 = vpop.xlane.xlu0 %1694
        %v1696 = vsel %vm1542, %v1690, -inf
        %1697 = vmax.xlane.f32.xlu0 %v1696
        %v1698 = vpop.xlane.xlu0 %1697
        %v1699 = vsel %vm1542, %v1691, -inf
        %1700 = vmax.xlane.f32.xlu0 %v1699
        %v1701 = vpop.xlane.xlu0 %1700
        %v1702 = vsel %vm1542, %v1692, -inf
        %1703 = vmax.xlane.f32.xlu0 %v1702
        %v1704 = vpop.xlane.xlu0 %1703
        %v1705 = vsub.f32 %v1689, %v1695
        %v1706 = vsub.f32 %v1690, %v1698
        %v1707 = vsub.f32 %v1691, %v1701
        %v1708 = vsub.f32 %v1692, %v1704
        %v1709 = vmul.f32 %v1705, 1.442695
        %v1710 = vpow.pop %v1709
        %v1711 = vmul.f32 %v1706, 1.442695
        %v1712 = vpow.pop %v1711
        %v1713 = vmul.f32 %v1707, 1.442695
        %v1714 = vpow.pop %v1713
        %v1715 = vmul.f32 %v1708, 1.442695
        %v1716 = vpow.pop %v1715
        %v1717 = vsel %vm1542, %v1710, 0.0
        %1718 = vadd.xlane.f32.xlu0 %v1717
        %v1719 = vpop.xlane.xlu0 %1718
        %v1720 = vsel %vm1542, %v1712, 0.0
        %1721 = vadd.xlane.f32.xlu0 %v1720
        %v1722 = vpop.xlane.xlu0 %1721
        %v1723 = vsel %vm1542, %v1714, 0.0
        %1724 = vadd.xlane.f32.xlu0 %v1723
        %v1725 = vpop.xlane.xlu0 %1724
        %v1726 = vsel %vm1542, %v1716, 0.0
        %1727 = vadd.xlane.f32.xlu0 %v1726
        %v1728 = vpop.xlane.xlu0 %1727
        %v1729 = vrcp.pop %v1719
        %v1730 = vrcp.pop %v1722
        %v1731 = vrcp.pop %v1725
        %v1732 = vrcp.pop %v1728
        %v1733 = vmul.f32 %v1710, %v1729
        %v1734 = vmul.f32 %v1712, %v1730
        %v1735 = vmul.f32 %v1714, %v1731
        %v1736 = vmul.f32 %v1716, %v1732
        %v1737 = vpack.c.bf16 %v1734, %v1733
        %v1738 = vpack.c.bf16 %v1736, %v1735
        %v1740 = vsel %vm1542, %v1737, 0
        %1742 = vmatprep.subr.bf16.mxu0 0
        %1743 = vmatpush1.bf16.msra.mxu0 %v1601
        %1744 = vmatprep.subr.bf16.mxu0 0
        %1745 = vmatpush1.bf16.msra.mxu0 0
        %1746 = vmatprep.subr.bf16.mxu0 0
        %1747 = vmatpush1.bf16.msra.mxu0 0
        %1748 = vmatprep.subr.bf16.mxu0 0
        %1749 = vmatpush1.bf16.msra.mxu0 0
        %1750 = vmatprep.subr.bf16.mxu0 0
        %1751 = vmatpush1.bf16.msra.mxu0 0
        %1752 = vmatprep.subr.bf16.mxu0 0
        %1753 = vmatpush1.bf16.msra.mxu0 0
        %1754 = vmatprep.subr.bf16.mxu0 0
        %1755 = vmatpush1.bf16.msra.mxu0 0
        %1756 = vmatprep.subr.bf16.mxu0 0
        %1757 = vmatpush1.bf16.msra.mxu0 0
        %1758 = vmatprep.subr.bf16.mxu0 0
        %1759 = vmatpush1.bf16.msra.mxu0 0
        %1760 = vmatprep.subr.bf16.mxu0 0
        %1761 = vmatpush1.bf16.msra.mxu0 0
        %1762 = vmatprep.subr.bf16.mxu0 0
        %1763 = vmatpush1.bf16.msra.mxu0 0
        %1764 = vmatprep.subr.bf16.mxu0 0
        %1765 = vmatpush1.bf16.msra.mxu0 0
        %1766 = vmatprep.subr.bf16.mxu0 0
        %1767 = vmatpush1.bf16.msra.mxu0 0
        %1768 = vmatprep.subr.bf16.mxu0 0
        %1769 = vmatpush1.bf16.msra.mxu0 0
        %1770 = vmatprep.subr.bf16.mxu0 0
        %1771 = vmatpush1.bf16.msra.mxu0 0
        %1772 = vmatprep.subr.bf16.mxu0 0
        %1773 = vmatpush1.bf16.msra.mxu0 0
        %1774 = vmatprep.mubr.bf16.mxu0 0
        %1775 = vmatmul.mubr.bf16.gmra.mrb[0].mxu0 %v1740
        %v1776 = vpop.f32.mrb[0].mxu0
        %v1777 = vadd.f32 0.0, %v1776
        %v1778 = vpop.f32.mrb[0].mxu0
        %v1779 = vpop.f32.mrb[0].mxu0
        %v1780 = vadd.f32 0.0, %v1779
        %v1781 = vpop.f32.mrb[0].mxu0
        %1782 = vdwg.mxu0
        %v1784 = vsel %vm1542, %v1738, 0
        %1786 = vmatprep.subr.bf16.mxu0 0
        %1787 = vmatpush1.bf16.msra.mxu0 %v1602
        %1788 = vmatprep.subr.bf16.mxu0 0
        %1789 = vmatpush1.bf16.msra.mxu0 0
        %1790 = vmatprep.subr.bf16.mxu0 0
        %1791 = vmatpush1.bf16.msra.mxu0 0
        %1792 = vmatprep.subr.bf16.mxu0 0
        %1793 = vmatpush1.bf16.msra.mxu0 0
        %1794 = vmatprep.subr.bf16.mxu0 0
        %1795 = vmatpush1.bf16.msra.mxu0 0
        %1796 = vmatprep.subr.bf16.mxu0 0
        %1797 = vmatpush1.bf16.msra.mxu0 0
        %1798 = vmatprep.subr.bf16.mxu0 0
        %1799 = vmatpush1.bf16.msra.mxu0 0
        %1800 = vmatprep.subr.bf16.mxu0 0
        %1801 = vmatpush1.bf16.msra.mxu0 0
        %1802 = vmatprep.subr.bf16.mxu0 0
        %1803 = vmatpush1.bf16.msra.mxu0 0
        %1804 = vmatprep.subr.bf16.mxu0 0
        %1805 = vmatpush1.bf16.msra.mxu0 0
        %1806 = vmatprep.subr.bf16.mxu0 0
        %1807 = vmatpush1.bf16.msra.mxu0 0
        %1808 = vmatprep.subr.bf16.mxu0 0
        %1809 = vmatpush1.bf16.msra.mxu0 0
        %1810 = vmatprep.subr.bf16.mxu0 0
        %1811 = vmatpush1.bf16.msra.mxu0 0
        %1812 = vmatprep.subr.bf16.mxu0 0
        %1813 = vmatpush1.bf16.msra.mxu0 0
        %1814 = vmatprep.subr.bf16.mxu0 0
        %1815 = vmatpush1.bf16.msra.mxu0 0
        %1816 = vmatprep.subr.bf16.mxu0 0
        %1817 = vmatpush1.bf16.msra.mxu0 0
        %1818 = vmatprep.mubr.bf16.mxu0 0
        %1819 = vmatmul.mubr.bf16.gmra.mrb[0].mxu0 %v1784
        %v1820 = vpop.f32.mrb[0].mxu0
        %v1821 = vadd.f32 0.0, %v1820
        %v1822 = vpop.f32.mrb[0].mxu0
        %v1823 = vpop.f32.mrb[0].mxu0
        %v1824 = vadd.f32 0.0, %v1823
        %v1825 = vpop.f32.mrb[0].mxu0
        %1826 = vdwg.mxu0
        %v1828 = vsel %vm1542, %v1587, 0
        %1830 = vmatprep.subr.bf16.mxu0 0
        %1831 = vmatpush1.bf16.msra.mxu0 %v1450
        %1832 = vmatprep.subr.bf16.mxu0 0
        %1833 = vmatpush1.bf16.msra.mxu0 0
        %1834 = vmatprep.subr.bf16.mxu0 0
        %1835 = vmatpush1.bf16.msra.mxu0 0
        %1836 = vmatprep.subr.bf16.mxu0 0
        %1837 = vmatpush1.bf16.msra.mxu0 0
        %1838 = vmatprep.subr.bf16.mxu0 0
        %1839 = vmatpush1.bf16.msra.mxu0 0
        %1840 = vmatprep.subr.bf16.mxu0 0
        %1841 = vmatpush1.bf16.msra.mxu0 0
        %1842 = vmatprep.subr.bf16.mxu0 0
        %1843 = vmatpush1.bf16.msra.mxu0 0
        %1844 = vmatprep.subr.bf16.mxu0 0
        %1845 = vmatpush1.bf16.msra.mxu0 0
        %1846 = vmatprep.subr.bf16.mxu0 0
        %1847 = vmatpush1.bf16.msra.mxu0 0
        %1848 = vmatprep.subr.bf16.mxu0 0
        %1849 = vmatpush1.bf16.msra.mxu0 0
        %1850 = vmatprep.subr.bf16.mxu0 0
        %1851 = vmatpush1.bf16.msra.mxu0 0
        %1852 = vmatprep.subr.bf16.mxu0 0
        %1853 = vmatpush1.bf16.msra.mxu0 0
        %1854 = vmatprep.subr.bf16.mxu0 0
        %1855 = vmatpush1.bf16.msra.mxu0 0
        %1856 = vmatprep.subr.bf16.mxu0 0
        %1857 = vmatpush1.bf16.msra.mxu0 0
        %1858 = vmatprep.subr.bf16.mxu0 0
        %1859 = vmatpush1.bf16.msra.mxu0 0
        %1860 = vmatprep.subr.bf16.mxu0 0
        %1861 = vmatpush1.bf16.msra.mxu0 0
        %1862 = vmatprep.mubr.bf16.mxu0 0
        %1863 = vmatmul.mubr.bf16.gmra.mrb[0].mxu0 %v1828
        %v1864 = vpop.f32.mrb[0].mxu0
        %v1865 = vadd.f32 %v1777, %v1864
        %v1866 = vpop.f32.mrb[0].mxu0
        %v1867 = vpop.f32.mrb[0].mxu0
        %v1868 = vadd.f32 %v1780, %v1867
        %v1869 = vpop.f32.mrb[0].mxu0
        %1870 = vdwg.mxu0
        %v1872 = vsel %vm1542, %v1588, 0
        %1874 = vmatprep.subr.bf16.mxu0 0
        %1875 = vmatpush1.bf16.msra.mxu0 %v1451
        %1876 = vmatprep.subr.bf16.mxu0 0
        %1877 = vmatpush1.bf16.msra.mxu0 0
        %1878 = vmatprep.subr.bf16.mxu0 0
        %1879 = vmatpush1.bf16.msra.mxu0 0
        %1880 = vmatprep.subr.bf16.mxu0 0
        %1881 = vmatpush1.bf16.msra.mxu0 0
        %1882 = vmatprep.subr.bf16.mxu0 0
        %1883 = vmatpush1.bf16.msra.mxu0 0
        %1884 = vmatprep.subr.bf16.mxu0 0
        %1885 = vmatpush1.bf16.msra.mxu0 0
        %1886 = vmatprep.subr.bf16.mxu0 0
        %1887 = vmatpush1.bf16.msra.mxu0 0
        %1888 = vmatprep.subr.bf16.mxu0 0
        %1889 = vmatpush1.bf16.msra.mxu0 0
        %1890 = vmatprep.subr.bf16.mxu0 0
        %1891 = vmatpush1.bf16.msra.mxu0 0
        %1892 = vmatprep.subr.bf16.mxu0 0
        %1893 = vmatpush1.bf16.msra.mxu0 0
        %1894 = vmatprep.subr.bf16.mxu0 0
        %1895 = vmatpush1.bf16.msra.mxu0 0
        %1896 = vmatprep.subr.bf16.mxu0 0
        %1897 = vmatpush1.bf16.msra.mxu0 0
        %1898 = vmatprep.subr.bf16.mxu0 0
        %1899 = vmatpush1.bf16.msra.mxu0 0
        %1900 = vmatprep.subr.bf16.mxu0 0
        %1901 = vmatpush1.bf16.msra.mxu0 0
        %1902 = vmatprep.subr.bf16.mxu0 0
        %1903 = vmatpush1.bf16.msra.mxu0 0
        %1904 = vmatprep.subr.bf16.mxu0 0
        %1905 = vmatpush1.bf16.msra.mxu0 0
        %1906 = vmatprep.mubr.bf16.mxu0 0
        %1907 = vmatmul.mubr.bf16.gmra.mrb[0].mxu0 %v1872
        %v1908 = vpop.f32.mrb[0].mxu0
        %v1909 = vadd.f32 %v1821, %v1908
        %v1910 = vpop.f32.mrb[0].mxu0
        %v1911 = vpop.f32.mrb[0].mxu0
        %v1912 = vadd.f32 %v1824, %v1911
        %v1913 = vpop.f32.mrb[0].mxu0
        %1914 = vdwg.mxu0
        %v1915 = vpack.c.bf16 %v1868, %v1865
        %v1916 = vpack.c.bf16 %v1912, %v1909
        %v1917 = vld [vmem:[%s1025] sm:$0xf]
        %v1918 = vld [vmem:[%s1025 + $0x4] sm:$0xf]
        %v1919 = vld [vmem:[%s1025 + $0x8] sm:$0xf]
        %v1920 = vld [vmem:[%s1025 + $0xc] sm:$0xf]
        %v1921 = vld [vmem:[%s1025 + $0x10] sm:$0xf]
        %v1922 = vld [vmem:[%s1025 + $0x14] sm:$0xf]
        %v1923 = vld [vmem:[%s1025 + $0x18] sm:$0xf]
        %v1924 = vld [vmem:[%s1025 + $0x1c] sm:$0xf]
        %v1925 = vld [vmem:[%s1025 + $0x20] sm:$0xf]
        %v1926 = vld [vmem:[%s1025 + $0x24] sm:$0xf]
        %v1927 = vld [vmem:[%s1025 + $0x28] sm:$0xf]
        %v1928 = vld [vmem:[%s1025 + $0x2c] sm:$0xf]
        %v1929 = vld [vmem:[%s1025 + $0x30] sm:$0xf]
        %v1930 = vld [vmem:[%s1025 + $0x34] sm:$0xf]
        %v1931 = vld [vmem:[%s1025 + $0x38] sm:$0xf]
        %v1932 = vld [vmem:[%s1025 + $0x3c] sm:$0xf]
        %v1933 = vld [vmem:[%s1028] sm:$0x1]
        %v1935 = vlaneseq
        %v1936 = vshrl.u32 %v1935, 7
        %v1937 = vsub.s32 0, %v1936
        %v1938 = vrot.slane %v1933, %v1937
        %v1956 = vunpack.c.l.b16 %v1917
        %v1957 = vunpack.c.l.b16 %v1918
        %v1958 = vunpack.c.l.b16 %v1919
        %v1959 = vunpack.c.l.b16 %v1920
        %v1960 = vunpack.c.l.b16 %v1921
        %v1961 = vunpack.c.l.b16 %v1922
        %v1962 = vunpack.c.l.b16 %v1923
        %v1963 = vunpack.c.l.b16 %v1924
        %v1964 = vunpack.c.l.b16 %v1925
        %v1965 = vunpack.c.l.b16 %v1926
        %v1966 = vunpack.c.l.b16 %v1927
        %v1967 = vunpack.c.l.b16 %v1928
        %v1968 = vunpack.c.l.b16 %v1929
        %v1969 = vunpack.c.l.b16 %v1930
        %v1970 = vunpack.c.l.b16 %v1931
        %v1971 = vunpack.c.l.b16 %v1932
        %v1972 = vpack.c.b16 %v1957, %v1956
        %v1973 = vpack.c.b16 %v1959, %v1958
        %v1974 = vpack.c.b16 %v1961, %v1960
        %v1975 = vpack.c.b16 %v1963, %v1962
        %v1976 = vpack.c.b16 %v1965, %v1964
        %v1977 = vpack.c.b16 %v1967, %v1966
        %v1978 = vpack.c.b16 %v1969, %v1968
        %v1979 = vpack.c.b16 %v1971, %v1970
        %1988 = vmatprep.subr.bf16.mxu0 0
        %1989 = vmatpush1.bf16.msra.mxu0 %v1972
        %1990 = vmatprep.subr.bf16.mxu0 0
        %1991 = vmatpush1.bf16.msra.mxu0 %v1973
        %1992 = vmatprep.subr.bf16.mxu0 0
        %1993 = vmatpush1.bf16.msra.mxu0 %v1974
        %1994 = vmatprep.subr.bf16.mxu0 0
        %1995 = vmatpush1.bf16.msra.mxu0 %v1975
        %1996 = vmatprep.subr.bf16.mxu0 0
        %1997 = vmatpush1.bf16.msra.mxu0 %v1976
        %1998 = vmatprep.subr.bf16.mxu0 0
        %1999 = vmatpush1.bf16.msra.mxu0 %v1977
        %2000 = vmatprep.subr.bf16.mxu0 0
        %2001 = vmatpush1.bf16.msra.mxu0 %v1978
        %2002 = vmatprep.subr.bf16.mxu0 0
        %2003 = vmatpush1.bf16.msra.mxu0 %v1979
        %2004 = vmatprep.subr.bf16.mxu0 0
        %2005 = vmatpush1.bf16.msra.mxu0 0
        %2006 = vmatprep.subr.bf16.mxu0 0
        %2007 = vmatpush1.bf16.msra.mxu0 0
        %2008 = vmatprep.subr.bf16.mxu0 0
        %2009 = vmatpush1.bf16.msra.mxu0 0
        %2010 = vmatprep.subr.bf16.mxu0 0
        %2011 = vmatpush1.bf16.msra.mxu0 0
        %2012 = vmatprep.subr.bf16.mxu0 0
        %2013 = vmatpush1.bf16.msra.mxu0 0
        %2014 = vmatprep.subr.bf16.mxu0 0
        %2015 = vmatpush1.bf16.msra.mxu0 0
        %2016 = vmatprep.subr.bf16.mxu0 0
        %2017 = vmatpush1.bf16.msra.mxu0 0
        %2018 = vmatprep.subr.bf16.mxu0 0
        %2019 = vmatpush1.bf16.msra.mxu0 0
        %2020 = vmatprep.mubr.bf16.mxu0 0
        %2021 = vmatmul.mubr.bf16.gmra.mrb[0].mxu0 %v1915
        %v2022 = vpop.f32.mrb[0].mxu0
        %v2023 = vadd.f32 %v1938, %v2022
        %v2024 = vpop.f32.mrb[0].mxu0
        %v2025 = vpop.f32.mrb[0].mxu0
        %v2026 = vadd.f32 %v1938, %v2025
        %v2027 = vpop.f32.mrb[0].mxu0
        %2028 = vmatprep.mubr.bf16.mxu0 0
        %2029 = vmatmul.mubr.bf16.gmra.mrb[0].mxu0 %v1916
        %v2030 = vpop.f32.mrb[0].mxu0
        %v2031 = vadd.f32 %v1938, %v2030
        %v2032 = vpop.f32.mrb[0].mxu0
        %v2033 = vpop.f32.mrb[0].mxu0
        %v2034 = vadd.f32 %v1938, %v2033
        %v2035 = vpop.f32.mrb[0].mxu0
        %2036 = vdwg.mxu0
        %v2037 = vadd.f32 %v1103, %v2023
        %v2038 = vadd.f32 %v1104, %v2026
        %v2039 = vadd.f32 %v1105, %v2031
        %v2040 = vadd.f32 %v1106, %v2034
        %2041 = vadd.xlane.f32.xlu0 %v2037
        %v2042 = vpop.xlane.xlu0 %2041
        %2043 = vadd.xlane.f32.xlu0 %v2038
        %v2044 = vpop.xlane.xlu0 %2043
        %2045 = vadd.xlane.f32.xlu0 %v2039
        %v2046 = vpop.xlane.xlu0 %2045
        %2047 = vadd.xlane.f32.xlu0 %v2040
        %v2048 = vpop.xlane.xlu0 %2047
        %v2049 = vrcp.pop 128.0
        %v2050 = vmul.f32 %v2042, %v2049
        %v2051 = vmul.f32 %v2044, %v2049
        %v2052 = vmul.f32 %v2046, %v2049
        %v2053 = vmul.f32 %v2048, %v2049
        %v2054 = vsub.f32 %v2037, %v2050
        %v2055 = vsub.f32 %v2038, %v2051
        %v2056 = vsub.f32 %v2039, %v2052
        %v2057 = vsub.f32 %v2040, %v2053
        %v2058 = vmul.f32 %v2054, %v2054
        %v2059 = vmul.f32 %v2055, %v2055
        %v2060 = vmul.f32 %v2056, %v2056
        %v2061 = vmul.f32 %v2057, %v2057
        %2062 = vadd.xlane.f32.xlu0 %v2058
        %v2063 = vpop.xlane.xlu0 %2062
        %2064 = vadd.xlane.f32.xlu0 %v2059
        %v2065 = vpop.xlane.xlu0 %2064
        %2066 = vadd.xlane.f32.xlu0 %v2060
        %v2067 = vpop.xlane.xlu0 %2066
        %2068 = vadd.xlane.f32.xlu0 %v2061
        %v2069 = vpop.xlane.xlu0 %2068
        %v2070 = vmul.f32 %v2063, %v2049
        %v2071 = vmul.f32 %v2065, %v2049
        %v2072 = vmul.f32 %v2067, %v2049
        %v2073 = vmul.f32 %v2069, %v2049
        %v2074 = vadd.f32 %v2070, 1e-05
        %v2075 = vadd.f32 %v2071, 1e-05
        %v2076 = vadd.f32 %v2072, 1e-05
        %v2077 = vadd.f32 %v2073, 1e-05
        %v2078 = vrsqrt.pop %v2074
        %v2079 = vrsqrt.pop %v2075
        %v2080 = vrsqrt.pop %v2076
        %v2081 = vrsqrt.pop %v2077
        %v2082 = vmul.f32 %v2054, %v2078
        %v2083 = vmul.f32 %v2055, %v2079
        %v2084 = vmul.f32 %v2056, %v2080
        %v2085 = vmul.f32 %v2057, %v2081
        %v2086 = vld [vmem:[%s1031] sm:$0x1]
        %v2088 = vlaneseq
        %v2089 = vshrl.u32 %v2088, 7
        %v2090 = vsub.s32 0, %v2089
        %v2091 = vrot.slane %v2086, %v2090
        %v2093 = vmul.f32 %v2082, %v2091
        %v2094 = vmul.f32 %v2083, %v2091
        %v2095 = vmul.f32 %v2084, %v2091
        %v2096 = vmul.f32 %v2085, %v2091
        %v2097 = vld [vmem:[%s1034] sm:$0x1]
        %v2099 = vlaneseq
        %v2100 = vshrl.u32 %v2099, 7
        %v2101 = vsub.s32 0, %v2100
        %v2102 = vrot.slane %v2097, %v2101
        %v2104 = vadd.f32 %v2093, %v2102
        %v2105 = vadd.f32 %v2094, %v2102
        %v2106 = vadd.f32 %v2095, %v2102
        %v2107 = vadd.f32 %v2096, %v2102
        %v2108 = vld [vmem:[%s1011] sm:$0xff]
        %v2109 = vld [vmem:[%s1011 + $0x8] sm:$0xff]
        %v2110 = vpack.c.bf16 %v2105, %v2104
        %v2111 = vpack.c.bf16 %v2107, %v2106
        %v2112 = vld [vmem:[%s1039] sm:$0xf]
        %v2113 = vld [vmem:[%s1039 + $0x4] sm:$0xf]
        %v2114 = vld [vmem:[%s1039 + $0x8] sm:$0xf]
        %v2115 = vld [vmem:[%s1039 + $0xc] sm:$0xf]
        %v2116 = vld [vmem:[%s1039 + $0x10] sm:$0xf]
        %v2117 = vld [vmem:[%s1039 + $0x14] sm:$0xf]
        %v2118 = vld [vmem:[%s1039 + $0x18] sm:$0xf]
        %v2119 = vld [vmem:[%s1039 + $0x1c] sm:$0xf]
        %v2120 = vld [vmem:[%s1039 + $0x20] sm:$0xf]
        %v2121 = vld [vmem:[%s1039 + $0x24] sm:$0xf]
        %v2122 = vld [vmem:[%s1039 + $0x28] sm:$0xf]
        %v2123 = vld [vmem:[%s1039 + $0x2c] sm:$0xf]
        %v2124 = vld [vmem:[%s1039 + $0x30] sm:$0xf]
        %v2125 = vld [vmem:[%s1039 + $0x34] sm:$0xf]
        %v2126 = vld [vmem:[%s1039 + $0x38] sm:$0xf]
        %v2127 = vld [vmem:[%s1039 + $0x3c] sm:$0xf]
        %v2128 = vld [vmem:[%s1042] sm:$0x1]
        %v2130 = vlaneseq
        %v2131 = vshrl.u32 %v2130, 7
        %v2132 = vsub.s32 0, %v2131
        %v2133 = vrot.slane %v2128, %v2132
        %v2151 = vunpack.c.l.b16 %v2112
        %v2152 = vunpack.c.l.b16 %v2113
        %v2153 = vunpack.c.l.b16 %v2114
        %v2154 = vunpack.c.l.b16 %v2115
        %v2155 = vunpack.c.l.b16 %v2116
        %v2156 = vunpack.c.l.b16 %v2117
        %v2157 = vunpack.c.l.b16 %v2118
        %v2158 = vunpack.c.l.b16 %v2119
        %v2159 = vunpack.c.l.b16 %v2120
        %v2160 = vunpack.c.l.b16 %v2121
        %v2161 = vunpack.c.l.b16 %v2122
        %v2162 = vunpack.c.l.b16 %v2123
        %v2163 = vunpack.c.l.b16 %v2124
        %v2164 = vunpack.c.l.b16 %v2125
        %v2165 = vunpack.c.l.b16 %v2126
        %v2166 = vunpack.c.l.b16 %v2127
        %v2167 = vpack.c.b16 %v2152, %v2151
        %v2168 = vpack.c.b16 %v2154, %v2153
        %v2169 = vpack.c.b16 %v2156, %v2155
        %v2170 = vpack.c.b16 %v2158, %v2157
        %v2171 = vpack.c.b16 %v2160, %v2159
        %v2172 = vpack.c.b16 %v2162, %v2161
        %v2173 = vpack.c.b16 %v2164, %v2163
        %v2174 = vpack.c.b16 %v2166, %v2165
        %2183 = vmatprep.subr.bf16.mxu0 0
        %2184 = vmatpush1.bf16.msra.mxu0 %v2167
        %2185 = vmatprep.subr.bf16.mxu0 0
        %2186 = vmatpush1.bf16.msra.mxu0 %v2168
        %2187 = vmatprep.subr.bf16.mxu0 0
        %2188 = vmatpush1.bf16.msra.mxu0 %v2169
        %2189 = vmatprep.subr.bf16.mxu0 0
        %2190 = vmatpush1.bf16.msra.mxu0 %v2170
        %2191 = vmatprep.subr.bf16.mxu0 0
        %2192 = vmatpush1.bf16.msra.mxu0 %v2171
        %2193 = vmatprep.subr.bf16.mxu0 0
        %2194 = vmatpush1.bf16.msra.mxu0 %v2172
        %2195 = vmatprep.subr.bf16.mxu0 0
        %2196 = vmatpush1.bf16.msra.mxu0 %v2173
        %2197 = vmatprep.subr.bf16.mxu0 0
        %2198 = vmatpush1.bf16.msra.mxu0 %v2174
        %2199 = vmatprep.subr.bf16.mxu0 0
        %2200 = vmatpush1.bf16.msra.mxu0 0
        %2201 = vmatprep.subr.bf16.mxu0 0
        %2202 = vmatpush1.bf16.msra.mxu0 0
        %2203 = vmatprep.subr.bf16.mxu0 0
        %2204 = vmatpush1.bf16.msra.mxu0 0
        %2205 = vmatprep.subr.bf16.mxu0 0
        %2206 = vmatpush1.bf16.msra.mxu0 0
        %2207 = vmatprep.subr.bf16.mxu0 0
        %2208 = vmatpush1.bf16.msra.mxu0 0
        %2209 = vmatprep.subr.bf16.mxu0 0
        %2210 = vmatpush1.bf16.msra.mxu0 0
        %2211 = vmatprep.subr.bf16.mxu0 0
        %2212 = vmatpush1.bf16.msra.mxu0 0
        %2213 = vmatprep.subr.bf16.mxu0 0
        %2214 = vmatpush1.bf16.msra.mxu0 0
        %2215 = vmatprep.mubr.bf16.mxu0 0
        %2216 = vmatmul.mubr.bf16.gmra.mrb[0].mxu0 %v2110
        %v2217 = vpop.f32.mrb[0].mxu0
        %v2218 = vadd.f32 %v2133, %v2217
        %v2219 = vpop.f32.mrb[0].mxu0
        %v2220 = vpop.f32.mrb[0].mxu0
        %v2221 = vadd.f32 %v2133, %v2220
        %v2222 = vpop.f32.mrb[0].mxu0
        %2223 = vmatprep.mubr.bf16.mxu0 0
        %2224 = vmatmul.mubr.bf16.gmra.mrb[0].mxu0 %v2111
        %v2225 = vpop.f32.mrb[0].mxu0
        %v2226 = vadd.f32 %v2133, %v2225
        %v2227 = vpop.f32.mrb[0].mxu0
        %v2228 = vpop.f32.mrb[0].mxu0
        %v2229 = vadd.f32 %v2133, %v2228
        %v2230 = vpop.f32.mrb[0].mxu0
        %2231 = vdwg.mxu0
        %v2232 = vpack.c.bf16 %v2221, %v2218
        %v2233 = vpack.c.bf16 %v2229, %v2226
        %v2234 = vsel %vm1439, %v2108, 0.0
        %v2235 = vpack.c.bf16 %v2234, %v2234
        %v2236 = vsel %vm1439, %v2109, 0.0
        %v2237 = vpack.c.bf16 %v2236, %v2236
        %2238 = vmatprep.subr.bf16.mxu0 0
        %2239 = vmatpush1.bf16.xpose.msra.mxu0 %v2235
        %2240 = vmatprep.subr.bf16.mxu0 0
        %2241 = vmatpush1.bf16.xpose.msra.mxu0 0
        %2242 = vmatprep.subr.bf16.mxu0 0
        %2243 = vmatpush1.bf16.xpose.msra.mxu0 0
        %2244 = vmatprep.subr.bf16.mxu0 0
        %2245 = vmatpush1.bf16.xpose.msra.mxu0 0
        %2246 = vmatprep.subr.bf16.mxu0 0
        %2247 = vmatpush1.bf16.xpose.msra.mxu0 0
        %2248 = vmatprep.subr.bf16.mxu0 0
        %2249 = vmatpush1.bf16.xpose.msra.mxu0 0
        %2250 = vmatprep.subr.bf16.mxu0 0
        %2251 = vmatpush1.bf16.xpose.msra.mxu0 0
        %2252 = vmatprep.subr.bf16.mxu0 0
        %2253 = vmatpush1.bf16.xpose.msra.mxu0 0
        %2254 = vmatprep.subr.bf16.mxu0 0
        %2255 = vmatpush1.bf16.xpose.msra.mxu0 0
        %2256 = vmatprep.subr.bf16.mxu0 0
        %2257 = vmatpush1.bf16.xpose.msra.mxu0 0
        %2258 = vmatprep.subr.bf16.mxu0 0
        %2259 = vmatpush1.bf16.xpose.msra.mxu0 0
        %2260 = vmatprep.subr.bf16.mxu0 0
        %2261 = vmatpush1.bf16.xpose.msra.mxu0 0
        %2262 = vmatprep.subr.bf16.mxu0 0
        %2263 = vmatpush1.bf16.xpose.msra.mxu0 0
        %2264 = vmatprep.subr.bf16.mxu0 0
        %2265 = vmatpush1.bf16.xpose.msra.mxu0 0
        %2266 = vmatprep.subr.bf16.mxu0 0
        %2267 = vmatpush1.bf16.xpose.msra.mxu0 0
        %2268 = vmatprep.subr.bf16.mxu0 0
        %2269 = vmatpush1.bf16.xpose.msra.mxu0 0
        %2270 = vmatprep.mubr.bf16.mxu0 0
        %2271 = vmatmul.mubr.bf16.gmra.mrb[0].mxu0 %v2232
        %v2272 = vpop.f32.mrb[0].mxu0
        %v2273 = vadd.f32 0.0, %v2272
        %v2274 = vpop.f32.mrb[0].mxu0
        %v2275 = vpop.f32.mrb[0].mxu0
        %v2276 = vadd.f32 0.0, %v2275
        %v2277 = vpop.f32.mrb[0].mxu0
        %2278 = vmatprep.mubr.bf16.mxu0 0
        %2279 = vmatmul.mubr.bf16.gmra.mrb[0].mxu0 %v2233
        %v2280 = vpop.f32.mrb[0].mxu0
        %v2281 = vadd.f32 0.0, %v2280
        %v2282 = vpop.f32.mrb[0].mxu0
        %v2283 = vpop.f32.mrb[0].mxu0
        %v2284 = vadd.f32 0.0, %v2283
        %v2285 = vpop.f32.mrb[0].mxu0
        %2286 = vdwg.mxu0
        %v2287 = vmul.f32 %v2273, 0.125
        %v2288 = vmul.f32 %v2276, 0.125
        %v2289 = vmul.f32 %v2281, 0.125
        %v2290 = vmul.f32 %v2284, 0.125
        %v2291 = vld [vmem:[%s3] sm:$0x1]
        %v2293 = vlaneseq
        %v2294 = vshrl.u32 %v2293, 7
        %v2295 = vsub.s32 0, %v2294
        %v2296 = vrot.slane %v2291, %v2295
        %v2298 = vadd.f32 %v2287, %v2296
        %v2299 = vadd.f32 %v2288, %v2296
        %v2300 = vadd.f32 %v2289, %v2296
        %v2301 = vadd.f32 %v2290, %v2296
        %vm2302 = vcmask 64512
        %v2303 = vsel %vm2302, %v2298, -inf
        %2304 = vmax.xlane.f32.xlu0 %v2303
        %v2305 = vpop.xlane.xlu0 %2304
        %v2306 = vsel %vm2302, %v2299, -inf
        %2307 = vmax.xlane.f32.xlu0 %v2306
        %v2308 = vpop.xlane.xlu0 %2307
        %v2309 = vsel %vm2302, %v2300, -inf
        %2310 = vmax.xlane.f32.xlu0 %v2309
        %v2311 = vpop.xlane.xlu0 %2310
        %v2312 = vsel %vm2302, %v2301, -inf
        %2313 = vmax.xlane.f32.xlu0 %v2312
        %v2314 = vpop.xlane.xlu0 %2313
        %v2315 = vsub.f32 %v2298, %v2305
        %v2316 = vsub.f32 %v2299, %v2308
        %v2317 = vsub.f32 %v2300, %v2311
        %v2318 = vsub.f32 %v2301, %v2314
        %v2319 = vmul.f32 %v2315, 1.442695
        %v2320 = vpow.pop %v2319
        %v2321 = vmul.f32 %v2316, 1.442695
        %v2322 = vpow.pop %v2321
        %v2323 = vmul.f32 %v2317, 1.442695
        %v2324 = vpow.pop %v2323
        %v2325 = vmul.f32 %v2318, 1.442695
        %v2326 = vpow.pop %v2325
        %v2327 = vsel %vm2302, %v2320, 0.0
        %2328 = vadd.xlane.f32.xlu0 %v2327
        %v2329 = vpop.xlane.xlu0 %2328
        %v2330 = vsel %vm2302, %v2322, 0.0
        %2331 = vadd.xlane.f32.xlu0 %v2330
        %v2332 = vpop.xlane.xlu0 %2331
        %v2333 = vsel %vm2302, %v2324, 0.0
        %2334 = vadd.xlane.f32.xlu0 %v2333
        %v2335 = vpop.xlane.xlu0 %2334
        %v2336 = vsel %vm2302, %v2326, 0.0
        %2337 = vadd.xlane.f32.xlu0 %v2336
        %v2338 = vpop.xlane.xlu0 %2337
        %v2339 = vrcp.pop %v2329
        %v2340 = vrcp.pop %v2332
        %v2341 = vrcp.pop %v2335
        %v2342 = vrcp.pop %v2338
        %v2343 = vmul.f32 %v2320, %v2339
        %v2344 = vmul.f32 %v2322, %v2340
        %v2345 = vmul.f32 %v2324, %v2341
        %v2346 = vmul.f32 %v2326, %v2342
        %v2347 = vpack.c.bf16 %v2344, %v2343
        %v2348 = vpack.c.bf16 %v2346, %v2345
        %v2349 = vsel %vm1590, %v2108, 0.0
        %v2350 = vpack.c.bf16 %v2349, %v2349
        %v2351 = vsel %vm1590, %v2109, 0.0
        %v2352 = vpack.c.bf16 %v2351, %v2351
        %2353 = vmatprep.subr.bf16.mxu0 0
        %2354 = vmatpush1.bf16.xpose.msra.mxu0 %v2350
        %2355 = vmatprep.subr.bf16.mxu0 0
        %2356 = vmatpush1.bf16.xpose.msra.mxu0 0
        %2357 = vmatprep.subr.bf16.mxu0 0
        %2358 = vmatpush1.bf16.xpose.msra.mxu0 0
        %2359 = vmatprep.subr.bf16.mxu0 0
        %2360 = vmatpush1.bf16.xpose.msra.mxu0 0
        %2361 = vmatprep.subr.bf16.mxu0 0
        %2362 = vmatpush1.bf16.xpose.msra.mxu0 0
        %2363 = vmatprep.subr.bf16.mxu0 0
        %2364 = vmatpush1.bf16.xpose.msra.mxu0 0
        %2365 = vmatprep.subr.bf16.mxu0 0
        %2366 = vmatpush1.bf16.xpose.msra.mxu0 0
        %2367 = vmatprep.subr.bf16.mxu0 0
        %2368 = vmatpush1.bf16.xpose.msra.mxu0 0
        %2369 = vmatprep.subr.bf16.mxu0 0
        %2370 = vmatpush1.bf16.xpose.msra.mxu0 0
        %2371 = vmatprep.subr.bf16.mxu0 0
        %2372 = vmatpush1.bf16.xpose.msra.mxu0 0
        %2373 = vmatprep.subr.bf16.mxu0 0
        %2374 = vmatpush1.bf16.xpose.msra.mxu0 0
        %2375 = vmatprep.subr.bf16.mxu0 0
        %2376 = vmatpush1.bf16.xpose.msra.mxu0 0
        %2377 = vmatprep.subr.bf16.mxu0 0
        %2378 = vmatpush1.bf16.xpose.msra.mxu0 0
        %2379 = vmatprep.subr.bf16.mxu0 0
        %2380 = vmatpush1.bf16.xpose.msra.mxu0 0
        %2381 = vmatprep.subr.bf16.mxu0 0
        %2382 = vmatpush1.bf16.xpose.msra.mxu0 0
        %2383 = vmatprep.subr.bf16.mxu0 0
        %2384 = vmatpush1.bf16.xpose.msra.mxu0 0
        %2385 = vmatprep.mubr.bf16.mxu0 0
        %2386 = vmatmul.mubr.bf16.gmra.mrb[0].mxu0 %v2232
        %v2387 = vpop.f32.mrb[0].mxu0
        %v2388 = vadd.f32 0.0, %v2387
        %v2389 = vpop.f32.mrb[0].mxu0
        %v2390 = vpop.f32.mrb[0].mxu0
        %v2391 = vadd.f32 0.0, %v2390
        %v2392 = vpop.f32.mrb[0].mxu0
        %2393 = vmatprep.mubr.bf16.mxu0 0
        %2394 = vmatmul.mubr.bf16.gmra.mrb[0].mxu0 %v2233
        %v2395 = vpop.f32.mrb[0].mxu0
        %v2396 = vadd.f32 0.0, %v2395
        %v2397 = vpop.f32.mrb[0].mxu0
        %v2398 = vpop.f32.mrb[0].mxu0
        %v2399 = vadd.f32 0.0, %v2398
        %v2400 = vpop.f32.mrb[0].mxu0
        %2401 = vdwg.mxu0
        %v2402 = vmul.f32 %v2388, 0.125
        %v2403 = vmul.f32 %v2391, 0.125
        %v2404 = vmul.f32 %v2396, 0.125
        %v2405 = vmul.f32 %v2399, 0.125
        %v2406 = vadd.f32 %v2402, %v2296
        %v2407 = vadd.f32 %v2403, %v2296
        %v2408 = vadd.f32 %v2404, %v2296
        %v2409 = vadd.f32 %v2405, %v2296
        %v2410 = vsel %vm2302, %v2406, -inf
        %2411 = vmax.xlane.f32.xlu0 %v2410
        %v2412 = vpop.xlane.xlu0 %2411
        %v2413 = vsel %vm2302, %v2407, -inf
        %2414 = vmax.xlane.f32.xlu0 %v2413
        %v2415 = vpop.xlane.xlu0 %2414
        %v2416 = vsel %vm2302, %v2408, -inf
        %2417 = vmax.xlane.f32.xlu0 %v2416
        %v2418 = vpop.xlane.xlu0 %2417
        %v2419 = vsel %vm2302, %v2409, -inf
        %2420 = vmax.xlane.f32.xlu0 %v2419
        %v2421 = vpop.xlane.xlu0 %2420
        %v2422 = vsub.f32 %v2406, %v2412
        %v2423 = vsub.f32 %v2407, %v2415
        %v2424 = vsub.f32 %v2408, %v2418
        %v2425 = vsub.f32 %v2409, %v2421
        %v2426 = vmul.f32 %v2422, 1.442695
        %v2427 = vpow.pop %v2426
        %v2428 = vmul.f32 %v2423, 1.442695
        %v2429 = vpow.pop %v2428
        %v2430 = vmul.f32 %v2424, 1.442695
        %v2431 = vpow.pop %v2430
        %v2432 = vmul.f32 %v2425, 1.442695
        %v2433 = vpow.pop %v2432
        %v2434 = vsel %vm2302, %v2427, 0.0
        %2435 = vadd.xlane.f32.xlu0 %v2434
        %v2436 = vpop.xlane.xlu0 %2435
        %v2437 = vsel %vm2302, %v2429, 0.0
        %2438 = vadd.xlane.f32.xlu0 %v2437
        %v2439 = vpop.xlane.xlu0 %2438
        %v2440 = vsel %vm2302, %v2431, 0.0
        %2441 = vadd.xlane.f32.xlu0 %v2440
        %v2442 = vpop.xlane.xlu0 %2441
        %v2443 = vsel %vm2302, %v2433, 0.0
        %2444 = vadd.xlane.f32.xlu0 %v2443
        %v2445 = vpop.xlane.xlu0 %2444
        %v2446 = vrcp.pop %v2436
        %v2447 = vrcp.pop %v2439
        %v2448 = vrcp.pop %v2442
        %v2449 = vrcp.pop %v2445
        %v2450 = vmul.f32 %v2427, %v2446
        %v2451 = vmul.f32 %v2429, %v2447
        %v2452 = vmul.f32 %v2431, %v2448
        %v2453 = vmul.f32 %v2433, %v2449
        %v2454 = vpack.c.bf16 %v2451, %v2450
        %v2455 = vpack.c.bf16 %v2453, %v2452
        %v2457 = vsel %vm2302, %v2454, 0
        %v2460 = vsel %vm2302, %v2455, 0
        %vm2462 = vcmask 1043456
        %v2464 = vsel %vm2462, %v2352, 0
        %2466 = vmatprep.subr.bf16.mxu0 0
        %2467 = vmatpush1.bf16.msra.mxu0 %v2464
        %2468 = vmatprep.subr.bf16.mxu0 0
        %2469 = vmatpush1.bf16.msra.mxu0 0
        %2470 = vmatprep.subr.bf16.mxu0 0
        %2471 = vmatpush1.bf16.msra.mxu0 0
        %2472 = vmatprep.subr.bf16.mxu0 0
        %2473 = vmatpush1.bf16.msra.mxu0 0
        %2474 = vmatprep.subr.bf16.mxu0 0
        %2475 = vmatpush1.bf16.msra.mxu0 0
        %2476 = vmatprep.subr.bf16.mxu0 0
        %2477 = vmatpush1.bf16.msra.mxu0 0
        %2478 = vmatprep.subr.bf16.mxu0 0
        %2479 = vmatpush1.bf16.msra.mxu0 0
        %2480 = vmatprep.subr.bf16.mxu0 0
        %2481 = vmatpush1.bf16.msra.mxu0 0
        %2482 = vmatprep.subr.bf16.mxu0 0
        %2483 = vmatpush1.bf16.msra.mxu0 0
        %2484 = vmatprep.subr.bf16.mxu0 0
        %2485 = vmatpush1.bf16.msra.mxu0 0
        %2486 = vmatprep.subr.bf16.mxu0 0
        %2487 = vmatpush1.bf16.msra.mxu0 0
        %2488 = vmatprep.subr.bf16.mxu0 0
        %2489 = vmatpush1.bf16.msra.mxu0 0
        %2490 = vmatprep.subr.bf16.mxu0 0
        %2491 = vmatpush1.bf16.msra.mxu0 0
        %2492 = vmatprep.subr.bf16.mxu0 0
        %2493 = vmatpush1.bf16.msra.mxu0 0
        %2494 = vmatprep.subr.bf16.mxu0 0
        %2495 = vmatpush1.bf16.msra.mxu0 0
        %2496 = vmatprep.subr.bf16.mxu0 0
        %2497 = vmatpush1.bf16.msra.mxu0 0
        %2498 = vmatprep.mubr.bf16.mxu0 0
        %2499 = vmatmul.mubr.bf16.gmra.mrb[0].mxu0 %v2457
        %v2500 = vpop.f32.mrb[0].mxu0
        %v2501 = vadd.f32 0.0, %v2500
        %v2502 = vpop.f32.mrb[0].mxu0
        %v2503 = vpop.f32.mrb[0].mxu0
        %v2504 = vadd.f32 0.0, %v2503
        %v2505 = vpop.f32.mrb[0].mxu0
        %2506 = vmatprep.mubr.bf16.mxu0 0
        %2507 = vmatmul.mubr.bf16.gmra.mrb[0].mxu0 %v2460
        %v2508 = vpop.f32.mrb[0].mxu0
        %v2509 = vadd.f32 0.0, %v2508
        %v2510 = vpop.f32.mrb[0].mxu0
        %v2511 = vpop.f32.mrb[0].mxu0
        %v2512 = vadd.f32 0.0, %v2511
        %v2513 = vpop.f32.mrb[0].mxu0
        %2514 = vdwg.mxu0
        %v2516 = vsel %vm2302, %v2347, 0
        %v2519 = vsel %vm2302, %v2348, 0
        %v2522 = vsel %vm2462, %v2237, 0
        %2524 = vmatprep.subr.bf16.mxu0 0
        %2525 = vmatpush1.bf16.msra.mxu0 %v2522
        %2526 = vmatprep.subr.bf16.mxu0 0
        %2527 = vmatpush1.bf16.msra.mxu0 0
        %2528 = vmatprep.subr.bf16.mxu0 0
        %2529 = vmatpush1.bf16.msra.mxu0 0
        %2530 = vmatprep.subr.bf16.mxu0 0
        %2531 = vmatpush1.bf16.msra.mxu0 0
        %2532 = vmatprep.subr.bf16.mxu0 0
        %2533 = vmatpush1.bf16.msra.mxu0 0
        %2534 = vmatprep.subr.bf16.mxu0 0
        %2535 = vmatpush1.bf16.msra.mxu0 0
        %2536 = vmatprep.subr.bf16.mxu0 0
        %2537 = vmatpush1.bf16.msra.mxu0 0
        %2538 = vmatprep.subr.bf16.mxu0 0
        %2539 = vmatpush1.bf16.msra.mxu0 0
        %2540 = vmatprep.subr.bf16.mxu0 0
        %2541 = vmatpush1.bf16.msra.mxu0 0
        %2542 = vmatprep.subr.bf16.mxu0 0
        %2543 = vmatpush1.bf16.msra.mxu0 0
        %2544 = vmatprep.subr.bf16.mxu0 0
        %2545 = vmatpush1.bf16.msra.mxu0 0
        %2546 = vmatprep.subr.bf16.mxu0 0
        %2547 = vmatpush1.bf16.msra.mxu0 0
        %2548 = vmatprep.subr.bf16.mxu0 0
        %2549 = vmatpush1.bf16.msra.mxu0 0
        %2550 = vmatprep.subr.bf16.mxu0 0
        %2551 = vmatpush1.bf16.msra.mxu0 0
        %2552 = vmatprep.subr.bf16.mxu0 0
        %2553 = vmatpush1.bf16.msra.mxu0 0
        %2554 = vmatprep.subr.bf16.mxu0 0
        %2555 = vmatpush1.bf16.msra.mxu0 0
        %2556 = vmatprep.mubr.bf16.mxu0 0
        %2557 = vmatmul.mubr.bf16.gmra.mrb[0].mxu0 %v2516
        %v2558 = vpop.f32.mrb[0].mxu0
        %v2559 = vadd.f32 %v2501, %v2558
        %v2560 = vpop.f32.mrb[0].mxu0
        %v2561 = vpop.f32.mrb[0].mxu0
        %v2562 = vadd.f32 %v2504, %v2561
        %v2563 = vpop.f32.mrb[0].mxu0
        %2564 = vmatprep.mubr.bf16.mxu0 0
        %2565 = vmatmul.mubr.bf16.gmra.mrb[0].mxu0 %v2519
        %v2566 = vpop.f32.mrb[0].mxu0
        %v2567 = vadd.f32 %v2509, %v2566
        %v2568 = vpop.f32.mrb[0].mxu0
        %v2569 = vpop.f32.mrb[0].mxu0
        %v2570 = vadd.f32 %v2512, %v2569
        %v2571 = vpop.f32.mrb[0].mxu0
        %2572 = vdwg.mxu0
        %v2573 = vpack.c.bf16 %v2562, %v2559
        %v2574 = vpack.c.bf16 %v2570, %v2567
        %v2575 = vld [vmem:[%s1047] sm:$0xf]
        %v2576 = vld [vmem:[%s1047 + $0x4] sm:$0xf]
        %v2577 = vld [vmem:[%s1047 + $0x8] sm:$0xf]
        %v2578 = vld [vmem:[%s1047 + $0xc] sm:$0xf]
        %v2579 = vld [vmem:[%s1047 + $0x10] sm:$0xf]
        %v2580 = vld [vmem:[%s1047 + $0x14] sm:$0xf]
        %v2581 = vld [vmem:[%s1047 + $0x18] sm:$0xf]
        %v2582 = vld [vmem:[%s1047 + $0x1c] sm:$0xf]
        %v2583 = vld [vmem:[%s1047 + $0x20] sm:$0xf]
        %v2584 = vld [vmem:[%s1047 + $0x24] sm:$0xf]
        %v2585 = vld [vmem:[%s1047 + $0x28] sm:$0xf]
        %v2586 = vld [vmem:[%s1047 + $0x2c] sm:$0xf]
        %v2587 = vld [vmem:[%s1047 + $0x30] sm:$0xf]
        %v2588 = vld [vmem:[%s1047 + $0x34] sm:$0xf]
        %v2589 = vld [vmem:[%s1047 + $0x38] sm:$0xf]
        %v2590 = vld [vmem:[%s1047 + $0x3c] sm:$0xf]
        %v2591 = vld [vmem:[%s1050] sm:$0x1]
        %v2593 = vlaneseq
        %v2594 = vshrl.u32 %v2593, 7
        %v2595 = vsub.s32 0, %v2594
        %v2596 = vrot.slane %v2591, %v2595
        %v2614 = vunpack.c.l.b16 %v2575
        %v2615 = vunpack.c.l.b16 %v2576
        %v2616 = vunpack.c.l.b16 %v2577
        %v2617 = vunpack.c.l.b16 %v2578
        %v2618 = vunpack.c.l.b16 %v2579
        %v2619 = vunpack.c.l.b16 %v2580
        %v2620 = vunpack.c.l.b16 %v2581
        %v2621 = vunpack.c.l.b16 %v2582
        %v2622 = vunpack.c.l.b16 %v2583
        %v2623 = vunpack.c.l.b16 %v2584
        %v2624 = vunpack.c.l.b16 %v2585
        %v2625 = vunpack.c.l.b16 %v2586
        %v2626 = vunpack.c.l.b16 %v2587
        %v2627 = vunpack.c.l.b16 %v2588
        %v2628 = vunpack.c.l.b16 %v2589
        %v2629 = vunpack.c.l.b16 %v2590
        %v2630 = vpack.c.b16 %v2615, %v2614
        %v2631 = vpack.c.b16 %v2617, %v2616
        %v2632 = vpack.c.b16 %v2619, %v2618
        %v2633 = vpack.c.b16 %v2621, %v2620
        %v2634 = vpack.c.b16 %v2623, %v2622
        %v2635 = vpack.c.b16 %v2625, %v2624
        %v2636 = vpack.c.b16 %v2627, %v2626
        %v2637 = vpack.c.b16 %v2629, %v2628
        %2646 = vmatprep.subr.bf16.mxu0 0
        %2647 = vmatpush1.bf16.msra.mxu0 %v2630
        %2648 = vmatprep.subr.bf16.mxu0 0
        %2649 = vmatpush1.bf16.msra.mxu0 %v2631
        %2650 = vmatprep.subr.bf16.mxu0 0
        %2651 = vmatpush1.bf16.msra.mxu0 %v2632
        %2652 = vmatprep.subr.bf16.mxu0 0
        %2653 = vmatpush1.bf16.msra.mxu0 %v2633
        %2654 = vmatprep.subr.bf16.mxu0 0
        %2655 = vmatpush1.bf16.msra.mxu0 %v2634
        %2656 = vmatprep.subr.bf16.mxu0 0
        %2657 = vmatpush1.bf16.msra.mxu0 %v2635
        %2658 = vmatprep.subr.bf16.mxu0 0
        %2659 = vmatpush1.bf16.msra.mxu0 %v2636
        %2660 = vmatprep.subr.bf16.mxu0 0
        %2661 = vmatpush1.bf16.msra.mxu0 %v2637
        %2662 = vmatprep.subr.bf16.mxu0 0
        %2663 = vmatpush1.bf16.msra.mxu0 0
        %2664 = vmatprep.subr.bf16.mxu0 0
        %2665 = vmatpush1.bf16.msra.mxu0 0
        %2666 = vmatprep.subr.bf16.mxu0 0
        %2667 = vmatpush1.bf16.msra.mxu0 0
        %2668 = vmatprep.subr.bf16.mxu0 0
        %2669 = vmatpush1.bf16.msra.mxu0 0
        %2670 = vmatprep.subr.bf16.mxu0 0
        %2671 = vmatpush1.bf16.msra.mxu0 0
        %2672 = vmatprep.subr.bf16.mxu0 0
        %2673 = vmatpush1.bf16.msra.mxu0 0
        %2674 = vmatprep.subr.bf16.mxu0 0
        %2675 = vmatpush1.bf16.msra.mxu0 0
        %2676 = vmatprep.subr.bf16.mxu0 0
        %2677 = vmatpush1.bf16.msra.mxu0 0
        %2678 = vmatprep.mubr.bf16.mxu0 0
        %2679 = vmatmul.mubr.bf16.gmra.mrb[0].mxu0 %v2573
        %v2680 = vpop.f32.mrb[0].mxu0
        %v2681 = vadd.f32 %v2596, %v2680
        %v2682 = vpop.f32.mrb[0].mxu0
        %v2683 = vpop.f32.mrb[0].mxu0
        %v2684 = vadd.f32 %v2596, %v2683
        %v2685 = vpop.f32.mrb[0].mxu0
        %2686 = vmatprep.mubr.bf16.mxu0 0
        %2687 = vmatmul.mubr.bf16.gmra.mrb[0].mxu0 %v2574
        %v2688 = vpop.f32.mrb[0].mxu0
        %v2689 = vadd.f32 %v2596, %v2688
        %v2690 = vpop.f32.mrb[0].mxu0
        %v2691 = vpop.f32.mrb[0].mxu0
        %v2692 = vadd.f32 %v2596, %v2691
        %v2693 = vpop.f32.mrb[0].mxu0
        %2694 = vdwg.mxu0
        %v2695 = vadd.f32 %v2104, %v2681
        %v2696 = vadd.f32 %v2105, %v2684
        %v2697 = vadd.f32 %v2106, %v2689
        %v2698 = vadd.f32 %v2107, %v2692
        %2699 = vadd.xlane.f32.xlu0 %v2695
        %v2700 = vpop.xlane.xlu0 %2699
        %2701 = vadd.xlane.f32.xlu0 %v2696
        %v2702 = vpop.xlane.xlu0 %2701
        %2703 = vadd.xlane.f32.xlu0 %v2697
        %v2704 = vpop.xlane.xlu0 %2703
        %2705 = vadd.xlane.f32.xlu0 %v2698
        %v2706 = vpop.xlane.xlu0 %2705
        %v2707 = vmul.f32 %v2700, %v2049
        %v2708 = vmul.f32 %v2702, %v2049
        %v2709 = vmul.f32 %v2704, %v2049
        %v2710 = vmul.f32 %v2706, %v2049
        %v2711 = vsub.f32 %v2695, %v2707
        %v2712 = vsub.f32 %v2696, %v2708
        %v2713 = vsub.f32 %v2697, %v2709
        %v2714 = vsub.f32 %v2698, %v2710
        %v2715 = vmul.f32 %v2711, %v2711
        %v2716 = vmul.f32 %v2712, %v2712
        %v2717 = vmul.f32 %v2713, %v2713
        %v2718 = vmul.f32 %v2714, %v2714
        %2719 = vadd.xlane.f32.xlu0 %v2715
        %v2720 = vpop.xlane.xlu0 %2719
        %2721 = vadd.xlane.f32.xlu0 %v2716
        %v2722 = vpop.xlane.xlu0 %2721
        %2723 = vadd.xlane.f32.xlu0 %v2717
        %v2724 = vpop.xlane.xlu0 %2723
        %2725 = vadd.xlane.f32.xlu0 %v2718
        %v2726 = vpop.xlane.xlu0 %2725
        %v2727 = vmul.f32 %v2720, %v2049
        %v2728 = vmul.f32 %v2722, %v2049
        %v2729 = vmul.f32 %v2724, %v2049
        %v2730 = vmul.f32 %v2726, %v2049
        %v2731 = vadd.f32 %v2727, 1e-05
        %v2732 = vadd.f32 %v2728, 1e-05
        %v2733 = vadd.f32 %v2729, 1e-05
        %v2734 = vadd.f32 %v2730, 1e-05
        %v2735 = vrsqrt.pop %v2731
        %v2736 = vrsqrt.pop %v2732
        %v2737 = vrsqrt.pop %v2733
        %v2738 = vrsqrt.pop %v2734
        %v2739 = vmul.f32 %v2711, %v2735
        %v2740 = vmul.f32 %v2712, %v2736
        %v2741 = vmul.f32 %v2713, %v2737
        %v2742 = vmul.f32 %v2714, %v2738
        %v2743 = vld [vmem:[%s1053] sm:$0x1]
        %v2745 = vlaneseq
        %v2746 = vshrl.u32 %v2745, 7
        %v2747 = vsub.s32 0, %v2746
        %v2748 = vrot.slane %v2743, %v2747
        %v2750 = vmul.f32 %v2739, %v2748
        %v2751 = vmul.f32 %v2740, %v2748
        %v2752 = vmul.f32 %v2741, %v2748
        %v2753 = vmul.f32 %v2742, %v2748
        %v2754 = vld [vmem:[%s1056] sm:$0x1]
        %v2756 = vlaneseq
        %v2757 = vshrl.u32 %v2756, 7
        %v2758 = vsub.s32 0, %v2757
        %v2759 = vrot.slane %v2754, %v2758
        %v2761 = vadd.f32 %v2750, %v2759
        %v2762 = vadd.f32 %v2751, %v2759
        %v2763 = vadd.f32 %v2752, %v2759
        %v2764 = vadd.f32 %v2753, %v2759
        %v2765 = vpack.c.bf16 %v2762, %v2761
        %v2766 = vpack.c.bf16 %v2764, %v2763
        %v2767 = vld [vmem:[%s1061] sm:$0xff]
        %v2768 = vld [vmem:[%s1061 + $0x8] sm:$0xff]
        %v2769 = vld [vmem:[%s1061 + $0x10] sm:$0xff]
        %v2770 = vld [vmem:[%s1061 + $0x18] sm:$0xff]
        %v2771 = vld [vmem:[%s1061 + $0x20] sm:$0xff]
        %v2772 = vld [vmem:[%s1061 + $0x28] sm:$0xff]
        %v2773 = vld [vmem:[%s1061 + $0x30] sm:$0xff]
        %v2774 = vld [vmem:[%s1061 + $0x38] sm:$0xff]
        %v2775 = vld [vmem:[%s1061 + $0x40] sm:$0xff]
        %v2776 = vld [vmem:[%s1061 + $0x48] sm:$0xff]
        %v2777 = vld [vmem:[%s1061 + $0x50] sm:$0xff]
        %v2778 = vld [vmem:[%s1061 + $0x58] sm:$0xff]
        %v2779 = vld [vmem:[%s1061 + $0x60] sm:$0xff]
        %v2780 = vld [vmem:[%s1061 + $0x68] sm:$0xff]
        %v2781 = vld [vmem:[%s1061 + $0x70] sm:$0xff]
        %v2782 = vld [vmem:[%s1061 + $0x78] sm:$0xff]
        %v2783 = vld [vmem:[%s1061 + $0x80] sm:$0xff]
        %v2784 = vld [vmem:[%s1061 + $0x88] sm:$0xff]
        %v2785 = vld [vmem:[%s1061 + $0x90] sm:$0xff]
        %v2786 = vld [vmem:[%s1061 + $0x98] sm:$0xff]
        %v2787 = vld [vmem:[%s1061 + $0xa0] sm:$0xff]
        %v2788 = vld [vmem:[%s1061 + $0xa8] sm:$0xff]
        %v2789 = vld [vmem:[%s1061 + $0xb0] sm:$0xff]
        %v2790 = vld [vmem:[%s1061 + $0xb8] sm:$0xff]
        %v2791 = vld [vmem:[%s1061 + $0xc0] sm:$0xff]
        %v2792 = vld [vmem:[%s1061 + $0xc8] sm:$0xff]
        %v2793 = vld [vmem:[%s1061 + $0xd0] sm:$0xff]
        %v2794 = vld [vmem:[%s1061 + $0xd8] sm:$0xff]
        %v2795 = vld [vmem:[%s1061 + $0xe0] sm:$0xff]
        %v2796 = vld [vmem:[%s1061 + $0xe8] sm:$0xff]
        %v2797 = vld [vmem:[%s1061 + $0xf0] sm:$0xff]
        %v2798 = vld [vmem:[%s1061 + $0xf8] sm:$0xff]
        %v2799 = vld [vmem:[%s1065] sm:$0xf]
        %v2801 = vlaneseq
        %v2802 = vshrl.u32 %v2801, 7
        %v2803 = vsub.s32 0, %v2802
        %v2804 = vrot.slane %v2799, %v2803
        %v2805 = vlaneseq
        %v2806 = vshrl.u32 %v2805, 7
        %v2807 = vsub.s32 1, %v2806
        %v2808 = vrot.slane %v2799, %v2807
        %v2809 = vlaneseq
        %v2810 = vshrl.u32 %v2809, 7
        %v2811 = vsub.s32 2, %v2810
        %v2812 = vrot.slane %v2799, %v2811
        %v2813 = vlaneseq
        %v2814 = vshrl.u32 %v2813, 7
        %v2815 = vsub.s32 3, %v2814
        %v2816 = vrot.slane %v2799, %v2815
        %v2853 = vunpack.c.l.b16 %v2767
        %v2854 = vunpack.c.h.b16 %v2767
        %v2855 = vunpack.c.l.b16 %v2768
        %v2856 = vunpack.c.h.b16 %v2768
        %v2857 = vunpack.c.l.b16 %v2769
        %v2858 = vunpack.c.h.b16 %v2769
        %v2859 = vunpack.c.l.b16 %v2770
        %v2860 = vunpack.c.h.b16 %v2770
        %v2861 = vunpack.c.l.b16 %v2771
        %v2862 = vunpack.c.h.b16 %v2771
        %v2863 = vunpack.c.l.b16 %v2772
        %v2864 = vunpack.c.h.b16 %v2772
        %v2865 = vunpack.c.l.b16 %v2773
        %v2866 = vunpack.c.h.b16 %v2773
        %v2867 = vunpack.c.l.b16 %v2774
        %v2868 = vunpack.c.h.b16 %v2774
        %v2869 = vunpack.c.l.b16 %v2775
        %v2870 = vunpack.c.h.b16 %v2775
        %v2871 = vunpack.c.l.b16 %v2776
        %v2872 = vunpack.c.h.b16 %v2776
        %v2873 = vunpack.c.l.b16 %v2777
        %v2874 = vunpack.c.h.b16 %v2777
        %v2875 = vunpack.c.l.b16 %v2778
        %v2876 = vunpack.c.h.b16 %v2778
        %v2877 = vunpack.c.l.b16 %v2779
        %v2878 = vunpack.c.h.b16 %v2779
        %v2879 = vunpack.c.l.b16 %v2780
        %v2880 = vunpack.c.h.b16 %v2780
        %v2881 = vunpack.c.l.b16 %v2781
        %v2882 = vunpack.c.h.b16 %v2781
        %v2883 = vunpack.c.l.b16 %v2782
        %v2884 = vunpack.c.h.b16 %v2782
        %v2885 = vunpack.c.l.b16 %v2783
        %v2886 = vunpack.c.h.b16 %v2783
        %v2887 = vunpack.c.l.b16 %v2784
        %v2888 = vunpack.c.h.b16 %v2784
        %v2889 = vunpack.c.l.b16 %v2785
        %v2890 = vunpack.c.h.b16 %v2785
        %v2891 = vunpack.c.l.b16 %v2786
        %v2892 = vunpack.c.h.b16 %v2786
        %v2893 = vunpack.c.l.b16 %v2787
        %v2894 = vunpack.c.h.b16 %v2787
        %v2895 = vunpack.c.l.b16 %v2788
        %v2896 = vunpack.c.h.b16 %v2788
        %v2897 = vunpack.c.l.b16 %v2789
        %v2898 = vunpack.c.h.b16 %v2789
        %v2899 = vunpack.c.l.b16 %v2790
        %v2900 = vunpack.c.h.b16 %v2790
        %v2901 = vunpack.c.l.b16 %v2791
        %v2902 = vunpack.c.h.b16 %v2791
        %v2903 = vunpack.c.l.b16 %v2792
        %v2904 = vunpack.c.h.b16 %v2792
        %v2905 = vunpack.c.l.b16 %v2793
        %v2906 = vunpack.c.h.b16 %v2793
        %v2907 = vunpack.c.l.b16 %v2794
        %v2908 = vunpack.c.h.b16 %v2794
        %v2909 = vunpack.c.l.b16 %v2795
        %v2910 = vunpack.c.h.b16 %v2795
        %v2911 = vunpack.c.l.b16 %v2796
        %v2912 = vunpack.c.h.b16 %v2796
        %v2913 = vunpack.c.l.b16 %v2797
        %v2914 = vunpack.c.h.b16 %v2797
        %v2915 = vunpack.c.l.b16 %v2798
        %v2916 = vunpack.c.h.b16 %v2798
        %v2917 = vpack.c.b16 %v2857, %v2853
        %v2918 = vpack.c.b16 %v2858, %v2854
        %v2919 = vpack.c.b16 %v2859, %v2855
        %v2920 = vpack.c.b16 %v2860, %v2856
        %v2921 = vpack.c.b16 %v2865, %v2861
        %v2922 = vpack.c.b16 %v2866, %v2862
        %v2923 = vpack.c.b16 %v2867, %v2863
        %v2924 = vpack.c.b16 %v2868, %v2864
        %v2925 = vpack.c.b16 %v2873, %v2869
        %v2926 = vpack.c.b16 %v2874, %v2870
        %v2927 = vpack.c.b16 %v2875, %v2871
        %v2928 = vpack.c.b16 %v2876, %v2872
        %v2929 = vpack.c.b16 %v2881, %v2877
        %v2930 = vpack.c.b16 %v2882, %v2878
        %v2931 = vpack.c.b16 %v2883, %v2879
        %v2932 = vpack.c.b16 %v2884, %v2880
        %v2933 = vpack.c.b16 %v2889, %v2885
        %v2934 = vpack.c.b16 %v2890, %v2886
        %v2935 = vpack.c.b16 %v2891, %v2887
        %v2936 = vpack.c.b16 %v2892, %v2888
        %v2937 = vpack.c.b16 %v2897, %v2893
        %v2938 = vpack.c.b16 %v2898, %v2894
        %v2939 = vpack.c.b16 %v2899, %v2895
        %v2940 = vpack.c.b16 %v2900, %v2896
        %v2941 = vpack.c.b16 %v2905, %v2901
        %v2942 = vpack.c.b16 %v2906, %v2902
        %v2943 = vpack.c.b16 %v2907, %v2903
        %v2944 = vpack.c.b16 %v2908, %v2904
        %v2945 = vpack.c.b16 %v2913, %v2909
        %v2946 = vpack.c.b16 %v2914, %v2910
        %v2947 = vpack.c.b16 %v2915, %v2911
        %v2948 = vpack.c.b16 %v2916, %v2912
        %2981 = vmatprep.subr.bf16.mxu0 %v2918
        %2982 = vmatpush1.bf16.msra.mxu0 %v2917
        %2983 = vmatprep.subr.bf16.mxu0 %v2922
        %2984 = vmatpush1.bf16.msra.mxu0 %v2921
        %2985 = vmatprep.subr.bf16.mxu0 %v2926
        %2986 = vmatpush1.bf16.msra.mxu0 %v2925
        %2987 = vmatprep.subr.bf16.mxu0 %v2930
        %2988 = vmatpush1.bf16.msra.mxu0 %v2929
        %2989 = vmatprep.subr.bf16.mxu0 %v2934
        %2990 = vmatpush1.bf16.msra.mxu0 %v2933
        %2991 = vmatprep.subr.bf16.mxu0 %v2938
        %2992 = vmatpush1.bf16.msra.mxu0 %v2937
        %2993 = vmatprep.subr.bf16.mxu0 %v2942
        %2994 = vmatpush1.bf16.msra.mxu0 %v2941
        %2995 = vmatprep.subr.bf16.mxu0 %v2946
        %2996 = vmatpush1.bf16.msra.mxu0 %v2945
        %2997 = vmatprep.subr.bf16.mxu0 0
        %2998 = vmatpush1.bf16.msra.mxu0 0
        %2999 = vmatprep.subr.bf16.mxu0 0
        %3000 = vmatpush1.bf16.msra.mxu0 0
        %3001 = vmatprep.subr.bf16.mxu0 0
        %3002 = vmatpush1.bf16.msra.mxu0 0
        %3003 = vmatprep.subr.bf16.mxu0 0
        %3004 = vmatpush1.bf16.msra.mxu0 0
        %3005 = vmatprep.subr.bf16.mxu0 0
        %3006 = vmatpush1.bf16.msra.mxu0 0
        %3007 = vmatprep.subr.bf16.mxu0 0
        %3008 = vmatpush1.bf16.msra.mxu0 0
        %3009 = vmatprep.subr.bf16.mxu0 0
        %3010 = vmatpush1.bf16.msra.mxu0 0
        %3011 = vmatprep.subr.bf16.mxu0 0
        %3012 = vmatpush1.bf16.msra.mxu0 0
        %3013 = vmatprep.mubr.bf16.mxu0 0
        %3014 = vmatmul.mubr.bf16.gmra.mrb[0].mxu0 %v2765
        %v3015 = vpop.f32.mrb[0].mxu0
        %v3016 = vadd.f32 %v2804, %v3015
        %v3017 = vpop.f32.mrb[0].mxu0
        %v3018 = vadd.f32 %v2808, %v3017
        %v3019 = vpop.f32.mrb[0].mxu0
        %v3020 = vadd.f32 %v2804, %v3019
        %v3021 = vpop.f32.mrb[0].mxu0
        %v3022 = vadd.f32 %v2808, %v3021
        %3023 = vmatprep.mubr.bf16.mxu0 0
        %3024 = vmatmul.mubr.bf16.gmra.mrb[0].mxu0 %v2766
        %v3025 = vpop.f32.mrb[0].mxu0
        %v3026 = vadd.f32 %v2804, %v3025
        %v3027 = vpop.f32.mrb[0].mxu0
        %v3028 = vadd.f32 %v2808, %v3027
        %v3029 = vpop.f32.mrb[0].mxu0
        %v3030 = vadd.f32 %v2804, %v3029
        %v3031 = vpop.f32.mrb[0].mxu0
        %v3032 = vadd.f32 %v2808, %v3031
        %3033 = vdwg.mxu0
        %3034 = vmatprep.subr.bf16.mxu0 %v2920
        %3035 = vmatpush1.bf16.msra.mxu0 %v2919
        %3036 = vmatprep.subr.bf16.mxu0 %v2924
        %3037 = vmatpush1.bf16.msra.mxu0 %v2923
        %3038 = vmatprep.subr.bf16.mxu0 %v2928
        %3039 = vmatpush1.bf16.msra.mxu0 %v2927
        %3040 = vmatprep.subr.bf16.mxu0 %v2932
        %3041 = vmatpush1.bf16.msra.mxu0 %v2931
        %3042 = vmatprep.subr.bf16.mxu0 %v2936
        %3043 = vmatpush1.bf16.msra.mxu0 %v2935
        %3044 = vmatprep.subr.bf16.mxu0 %v2940
        %3045 = vmatpush1.bf16.msra.mxu0 %v2939
        %3046 = vmatprep.subr.bf16.mxu0 %v2944
        %3047 = vmatpush1.bf16.msra.mxu0 %v2943
        %3048 = vmatprep.subr.bf16.mxu0 %v2948
        %3049 = vmatpush1.bf16.msra.mxu0 %v2947
        %3050 = vmatprep.subr.bf16.mxu0 0
        %3051 = vmatpush1.bf16.msra.mxu0 0
        %3052 = vmatprep.subr.bf16.mxu0 0
        %3053 = vmatpush1.bf16.msra.mxu0 0
        %3054 = vmatprep.subr.bf16.mxu0 0
        %3055 = vmatpush1.bf16.msra.mxu0 0
        %3056 = vmatprep.subr.bf16.mxu0 0
        %3057 = vmatpush1.bf16.msra.mxu0 0
        %3058 = vmatprep.subr.bf16.mxu0 0
        %3059 = vmatpush1.bf16.msra.mxu0 0
        %3060 = vmatprep.subr.bf16.mxu0 0
        %3061 = vmatpush1.bf16.msra.mxu0 0
        %3062 = vmatprep.subr.bf16.mxu0 0
        %3063 = vmatpush1.bf16.msra.mxu0 0
        %3064 = vmatprep.subr.bf16.mxu0 0
        %3065 = vmatpush1.bf16.msra.mxu0 0
        %3066 = vmatprep.mubr.bf16.mxu0 0
        %3067 = vmatmul.mubr.bf16.gmra.mrb[0].mxu0 %v2765
        %v3068 = vpop.f32.mrb[0].mxu0
        %v3069 = vadd.f32 %v2812, %v3068
        %v3070 = vpop.f32.mrb[0].mxu0
        %v3071 = vadd.f32 %v2816, %v3070
        %v3072 = vpop.f32.mrb[0].mxu0
        %v3073 = vadd.f32 %v2812, %v3072
        %v3074 = vpop.f32.mrb[0].mxu0
        %v3075 = vadd.f32 %v2816, %v3074
        %3076 = vmatprep.mubr.bf16.mxu0 0
        %3077 = vmatmul.mubr.bf16.gmra.mrb[0].mxu0 %v2766
        %v3078 = vpop.f32.mrb[0].mxu0
        %v3079 = vadd.f32 %v2812, %v3078
        %v3080 = vpop.f32.mrb[0].mxu0
        %v3081 = vadd.f32 %v2816, %v3080
        %v3082 = vpop.f32.mrb[0].mxu0
        %v3083 = vadd.f32 %v2812, %v3082
        %v3084 = vpop.f32.mrb[0].mxu0
        %v3085 = vadd.f32 %v2816, %v3084
        %3086 = vdwg.mxu0
        %v3087 = vmax.f32 %v3016, 0.0
        %v3088 = vmax.f32 %v3018, 0.0
        %v3089 = vmax.f32 %v3069, 0.0
        %v3090 = vmax.f32 %v3071, 0.0
        %v3091 = vmax.f32 %v3020, 0.0
        %v3092 = vmax.f32 %v3022, 0.0
        %v3093 = vmax.f32 %v3073, 0.0
        %v3094 = vmax.f32 %v3075, 0.0
        %v3095 = vmax.f32 %v3026, 0.0
        %v3096 = vmax.f32 %v3028, 0.0
        %v3097 = vmax.f32 %v3079, 0.0
        %v3098 = vmax.f32 %v3081, 0.0
        %v3099 = vmax.f32 %v3030, 0.0
        %v3100 = vmax.f32 %v3032, 0.0
        %v3101 = vmax.f32 %v3083, 0.0
        %v3102 = vmax.f32 %v3085, 0.0
        %v3103 = vpack.c.bf16 %v3091, %v3087
        %v3104 = vpack.c.bf16 %v3092, %v3088
        %v3105 = vpack.c.bf16 %v3093, %v3089
        %v3106 = vpack.c.bf16 %v3094, %v3090
        %v3107 = vpack.c.bf16 %v3099, %v3095
        %v3108 = vpack.c.bf16 %v3100, %v3096
        %v3109 = vpack.c.bf16 %v3101, %v3097
        %v3110 = vpack.c.bf16 %v3102, %v3098
        %v3111 = vld [vmem:[%s854] sm:$0xf]
        %v3112 = vld [vmem:[%s854 + $0x4] sm:$0xf]
        %v3113 = vld [vmem:[%s854 + $0x8] sm:$0xf]
        %v3114 = vld [vmem:[%s854 + $0xc] sm:$0xf]
        %v3115 = vld [vmem:[%s854 + $0x10] sm:$0xf]
        %v3116 = vld [vmem:[%s854 + $0x14] sm:$0xf]
        %v3117 = vld [vmem:[%s854 + $0x18] sm:$0xf]
        %v3118 = vld [vmem:[%s854 + $0x1c] sm:$0xf]
        %v3119 = vld [vmem:[%s854 + $0x20] sm:$0xf]
        %v3120 = vld [vmem:[%s854 + $0x24] sm:$0xf]
        %v3121 = vld [vmem:[%s854 + $0x28] sm:$0xf]
        %v3122 = vld [vmem:[%s854 + $0x2c] sm:$0xf]
        %v3123 = vld [vmem:[%s854 + $0x30] sm:$0xf]
        %v3124 = vld [vmem:[%s854 + $0x34] sm:$0xf]
        %v3125 = vld [vmem:[%s854 + $0x38] sm:$0xf]
        %v3126 = vld [vmem:[%s854 + $0x3c] sm:$0xf]
        %v3127 = vld [vmem:[%s854 + $0x40] sm:$0xf]
        %v3128 = vld [vmem:[%s854 + $0x44] sm:$0xf]
        %v3129 = vld [vmem:[%s854 + $0x48] sm:$0xf]
        %v3130 = vld [vmem:[%s854 + $0x4c] sm:$0xf]
        %v3131 = vld [vmem:[%s854 + $0x50] sm:$0xf]
        %v3132 = vld [vmem:[%s854 + $0x54] sm:$0xf]
        %v3133 = vld [vmem:[%s854 + $0x58] sm:$0xf]
        %v3134 = vld [vmem:[%s854 + $0x5c] sm:$0xf]
        %v3135 = vld [vmem:[%s854 + $0x60] sm:$0xf]
        %v3136 = vld [vmem:[%s854 + $0x64] sm:$0xf]
        %v3137 = vld [vmem:[%s854 + $0x68] sm:$0xf]
        %v3138 = vld [vmem:[%s854 + $0x6c] sm:$0xf]
        %v3139 = vld [vmem:[%s854 + $0x70] sm:$0xf]
        %v3140 = vld [vmem:[%s854 + $0x74] sm:$0xf]
        %v3141 = vld [vmem:[%s854 + $0x78] sm:$0xf]
        %v3142 = vld [vmem:[%s854 + $0x7c] sm:$0xf]
        %v3143 = vld [vmem:[%s854 + $0x80] sm:$0xf]
        %v3144 = vld [vmem:[%s854 + $0x84] sm:$0xf]
        %v3145 = vld [vmem:[%s854 + $0x88] sm:$0xf]
        %v3146 = vld [vmem:[%s854 + $0x8c] sm:$0xf]
        %v3147 = vld [vmem:[%s854 + $0x90] sm:$0xf]
        %v3148 = vld [vmem:[%s854 + $0x94] sm:$0xf]
        %v3149 = vld [vmem:[%s854 + $0x98] sm:$0xf]
        %v3150 = vld [vmem:[%s854 + $0x9c] sm:$0xf]
        %v3151 = vld [vmem:[%s854 + $0xa0] sm:$0xf]
        %v3152 = vld [vmem:[%s854 + $0xa4] sm:$0xf]
        %v3153 = vld [vmem:[%s854 + $0xa8] sm:$0xf]
        %v3154 = vld [vmem:[%s854 + $0xac] sm:$0xf]
        %v3155 = vld [vmem:[%s854 + $0xb0] sm:$0xf]
        %v3156 = vld [vmem:[%s854 + $0xb4] sm:$0xf]
        %v3157 = vld [vmem:[%s854 + $0xb8] sm:$0xf]
        %v3158 = vld [vmem:[%s854 + $0xbc] sm:$0xf]
        %v3159 = vld [vmem:[%s854 + $0xc0] sm:$0xf]
        %v3160 = vld [vmem:[%s854 + $0xc4] sm:$0xf]
        %v3161 = vld [vmem:[%s854 + $0xc8] sm:$0xf]
        %v3162 = vld [vmem:[%s854 + $0xcc] sm:$0xf]
        %v3163 = vld [vmem:[%s854 + $0xd0] sm:$0xf]
        %v3164 = vld [vmem:[%s854 + $0xd4] sm:$0xf]
        %v3165 = vld [vmem:[%s854 + $0xd8] sm:$0xf]
        %v3166 = vld [vmem:[%s854 + $0xdc] sm:$0xf]
        %v3167 = vld [vmem:[%s854 + $0xe0] sm:$0xf]
        %v3168 = vld [vmem:[%s854 + $0xe4] sm:$0xf]
        %v3169 = vld [vmem:[%s854 + $0xe8] sm:$0xf]
        %v3170 = vld [vmem:[%s854 + $0xec] sm:$0xf]
        %v3171 = vld [vmem:[%s854 + $0xf0] sm:$0xf]
        %v3172 = vld [vmem:[%s854 + $0xf4] sm:$0xf]
        %v3173 = vld [vmem:[%s854 + $0xf8] sm:$0xf]
        %v3174 = vld [vmem:[%s854 + $0xfc] sm:$0xf]
        %v3175 = vld [vmem:[%s1068] sm:$0x1]
        %v3177 = vlaneseq
        %v3178 = vshrl.u32 %v3177, 7
        %v3179 = vsub.s32 0, %v3178
        %v3180 = vrot.slane %v3175, %v3179
        %v3246 = vunpack.c.l.b16 %v3111
        %v3247 = vunpack.c.l.b16 %v3112
        %v3248 = vunpack.c.l.b16 %v3113
        %v3249 = vunpack.c.l.b16 %v3114
        %v3250 = vunpack.c.l.b16 %v3115
        %v3251 = vunpack.c.l.b16 %v3116
        %v3252 = vunpack.c.l.b16 %v3117
        %v3253 = vunpack.c.l.b16 %v3118
        %v3254 = vunpack.c.l.b16 %v3119
        %v3255 = vunpack.c.l.b16 %v3120
        %v3256 = vunpack.c.l.b16 %v3121
        %v3257 = vunpack.c.l.b16 %v3122
        %v3258 = vunpack.c.l.b16 %v3123
        %v3259 = vunpack.c.l.b16 %v3124
        %v3260 = vunpack.c.l.b16 %v3125
        %v3261 = vunpack.c.l.b16 %v3126
        %v3262 = vunpack.c.l.b16 %v3127
        %v3263 = vunpack.c.l.b16 %v3128
        %v3264 = vunpack.c.l.b16 %v3129
        %v3265 = vunpack.c.l.b16 %v3130
        %v3266 = vunpack.c.l.b16 %v3131
        %v3267 = vunpack.c.l.b16 %v3132
        %v3268 = vunpack.c.l.b16 %v3133
        %v3269 = vunpack.c.l.b16 %v3134
        %v3270 = vunpack.c.l.b16 %v3135
        %v3271 = vunpack.c.l.b16 %v3136
        %v3272 = vunpack.c.l.b16 %v3137
        %v3273 = vunpack.c.l.b16 %v3138
        %v3274 = vunpack.c.l.b16 %v3139
        %v3275 = vunpack.c.l.b16 %v3140
        %v3276 = vunpack.c.l.b16 %v3141
        %v3277 = vunpack.c.l.b16 %v3142
        %v3278 = vunpack.c.l.b16 %v3143
        %v3279 = vunpack.c.l.b16 %v3144
        %v3280 = vunpack.c.l.b16 %v3145
        %v3281 = vunpack.c.l.b16 %v3146
        %v3282 = vunpack.c.l.b16 %v3147
        %v3283 = vunpack.c.l.b16 %v3148
        %v3284 = vunpack.c.l.b16 %v3149
        %v3285 = vunpack.c.l.b16 %v3150
        %v3286 = vunpack.c.l.b16 %v3151
        %v3287 = vunpack.c.l.b16 %v3152
        %v3288 = vunpack.c.l.b16 %v3153
        %v3289 = vunpack.c.l.b16 %v3154
        %v3290 = vunpack.c.l.b16 %v3155
        %v3291 = vunpack.c.l.b16 %v3156
        %v3292 = vunpack.c.l.b16 %v3157
        %v3293 = vunpack.c.l.b16 %v3158
        %v3294 = vunpack.c.l.b16 %v3159
        %v3295 = vunpack.c.l.b16 %v3160
        %v3296 = vunpack.c.l.b16 %v3161
        %v3297 = vunpack.c.l.b16 %v3162
        %v3298 = vunpack.c.l.b16 %v3163
        %v3299 = vunpack.c.l.b16 %v3164
        %v3300 = vunpack.c.l.b16 %v3165
        %v3301 = vunpack.c.l.b16 %v3166
        %v3302 = vunpack.c.l.b16 %v3167
        %v3303 = vunpack.c.l.b16 %v3168
        %v3304 = vunpack.c.l.b16 %v3169
        %v3305 = vunpack.c.l.b16 %v3170
        %v3306 = vunpack.c.l.b16 %v3171
        %v3307 = vunpack.c.l.b16 %v3172
        %v3308 = vunpack.c.l.b16 %v3173
        %v3309 = vunpack.c.l.b16 %v3174
        %v3310 = vpack.c.b16 %v3247, %v3246
        %v3311 = vpack.c.b16 %v3249, %v3248
        %v3312 = vpack.c.b16 %v3251, %v3250
        %v3313 = vpack.c.b16 %v3253, %v3252
        %v3314 = vpack.c.b16 %v3255, %v3254
        %v3315 = vpack.c.b16 %v3257, %v3256
        %v3316 = vpack.c.b16 %v3259, %v3258
        %v3317 = vpack.c.b16 %v3261, %v3260
        %v3318 = vpack.c.b16 %v3263, %v3262
        %v3319 = vpack.c.b16 %v3265, %v3264
        %v3320 = vpack.c.b16 %v3267, %v3266
        %v3321 = vpack.c.b16 %v3269, %v3268
        %v3322 = vpack.c.b16 %v3271, %v3270
        %v3323 = vpack.c.b16 %v3273, %v3272
        %v3324 = vpack.c.b16 %v3275, %v3274
        %v3325 = vpack.c.b16 %v3277, %v3276
        %v3326 = vpack.c.b16 %v3279, %v3278
        %v3327 = vpack.c.b16 %v3281, %v3280
        %v3328 = vpack.c.b16 %v3283, %v3282
        %v3329 = vpack.c.b16 %v3285, %v3284
        %v3330 = vpack.c.b16 %v3287, %v3286
        %v3331 = vpack.c.b16 %v3289, %v3288
        %v3332 = vpack.c.b16 %v3291, %v3290
        %v3333 = vpack.c.b16 %v3293, %v3292
        %v3334 = vpack.c.b16 %v3295, %v3294
        %v3335 = vpack.c.b16 %v3297, %v3296
        %v3336 = vpack.c.b16 %v3299, %v3298
        %v3337 = vpack.c.b16 %v3301, %v3300
        %v3338 = vpack.c.b16 %v3303, %v3302
        %v3339 = vpack.c.b16 %v3305, %v3304
        %v3340 = vpack.c.b16 %v3307, %v3306
        %v3341 = vpack.c.b16 %v3309, %v3308
        %3374 = vmatprep.subr.bf16.mxu0 0
        %3375 = vmatpush1.bf16.msra.mxu0 %v3310
        %3376 = vmatprep.subr.bf16.mxu0 0
        %3377 = vmatpush1.bf16.msra.mxu0 %v3311
        %3378 = vmatprep.subr.bf16.mxu0 0
        %3379 = vmatpush1.bf16.msra.mxu0 %v3312
        %3380 = vmatprep.subr.bf16.mxu0 0
        %3381 = vmatpush1.bf16.msra.mxu0 %v3313
        %3382 = vmatprep.subr.bf16.mxu0 0
        %3383 = vmatpush1.bf16.msra.mxu0 %v3314
        %3384 = vmatprep.subr.bf16.mxu0 0
        %3385 = vmatpush1.bf16.msra.mxu0 %v3315
        %3386 = vmatprep.subr.bf16.mxu0 0
        %3387 = vmatpush1.bf16.msra.mxu0 %v3316
        %3388 = vmatprep.subr.bf16.mxu0 0
        %3389 = vmatpush1.bf16.msra.mxu0 %v3317
        %3390 = vmatprep.subr.bf16.mxu0 0
        %3391 = vmatpush1.bf16.msra.mxu0 %v3318
        %3392 = vmatprep.subr.bf16.mxu0 0
        %3393 = vmatpush1.bf16.msra.mxu0 %v3319
        %3394 = vmatprep.subr.bf16.mxu0 0
        %3395 = vmatpush1.bf16.msra.mxu0 %v3320
        %3396 = vmatprep.subr.bf16.mxu0 0
        %3397 = vmatpush1.bf16.msra.mxu0 %v3321
        %3398 = vmatprep.subr.bf16.mxu0 0
        %3399 = vmatpush1.bf16.msra.mxu0 %v3322
        %3400 = vmatprep.subr.bf16.mxu0 0
        %3401 = vmatpush1.bf16.msra.mxu0 %v3323
        %3402 = vmatprep.subr.bf16.mxu0 0
        %3403 = vmatpush1.bf16.msra.mxu0 %v3324
        %3404 = vmatprep.subr.bf16.mxu0 0
        %3405 = vmatpush1.bf16.msra.mxu0 %v3325
        %3406 = vmatprep.mubr.bf16.mxu0 %v3104
        %3407 = vmatmul.mubr.bf16.gmra.mrb[0].mxu0 %v3103
        %v3408 = vpop.f32.mrb[0].mxu0
        %v3409 = vadd.f32 %v3180, %v3408
        %v3410 = vpop.f32.mrb[0].mxu0
        %v3411 = vpop.f32.mrb[0].mxu0
        %v3412 = vadd.f32 %v3180, %v3411
        %v3413 = vpop.f32.mrb[0].mxu0
        %3414 = vmatprep.mubr.bf16.mxu0 %v3108
        %3415 = vmatmul.mubr.bf16.gmra.mrb[0].mxu0 %v3107
        %v3416 = vpop.f32.mrb[0].mxu0
        %v3417 = vadd.f32 %v3180, %v3416
        %v3418 = vpop.f32.mrb[0].mxu0
        %v3419 = vpop.f32.mrb[0].mxu0
        %v3420 = vadd.f32 %v3180, %v3419
        %v3421 = vpop.f32.mrb[0].mxu0
        %3422 = vdwg.mxu0
        %3423 = vmatprep.subr.bf16.mxu0 0
        %3424 = vmatpush1.bf16.msra.mxu0 %v3326
        %3425 = vmatprep.subr.bf16.mxu0 0
        %3426 = vmatpush1.bf16.msra.mxu0 %v3327
        %3427 = vmatprep.subr.bf16.mxu0 0
        %3428 = vmatpush1.bf16.msra.mxu0 %v3328
        %3429 = vmatprep.subr.bf16.mxu0 0
        %3430 = vmatpush1.bf16.msra.mxu0 %v3329
        %3431 = vmatprep.subr.bf16.mxu0 0
        %3432 = vmatpush1.bf16.msra.mxu0 %v3330
        %3433 = vmatprep.subr.bf16.mxu0 0
        %3434 = vmatpush1.bf16.msra.mxu0 %v3331
        %3435 = vmatprep.subr.bf16.mxu0 0
        %3436 = vmatpush1.bf16.msra.mxu0 %v3332
        %3437 = vmatprep.subr.bf16.mxu0 0
        %3438 = vmatpush1.bf16.msra.mxu0 %v3333
        %3439 = vmatprep.subr.bf16.mxu0 0
        %3440 = vmatpush1.bf16.msra.mxu0 %v3334
        %3441 = vmatprep.subr.bf16.mxu0 0
        %3442 = vmatpush1.bf16.msra.mxu0 %v3335
        %3443 = vmatprep.subr.bf16.mxu0 0
        %3444 = vmatpush1.bf16.msra.mxu0 %v3336
        %3445 = vmatprep.subr.bf16.mxu0 0
        %3446 = vmatpush1.bf16.msra.mxu0 %v3337
        %3447 = vmatprep.subr.bf16.mxu0 0
        %3448 = vmatpush1.bf16.msra.mxu0 %v3338
        %3449 = vmatprep.subr.bf16.mxu0 0
        %3450 = vmatpush1.bf16.msra.mxu0 %v3339
        %3451 = vmatprep.subr.bf16.mxu0 0
        %3452 = vmatpush1.bf16.msra.mxu0 %v3340
        %3453 = vmatprep.subr.bf16.mxu0 0
        %3454 = vmatpush1.bf16.msra.mxu0 %v3341
        %3455 = vmatprep.mubr.bf16.mxu0 %v3106
        %3456 = vmatmul.mubr.bf16.gmra.mrb[0].mxu0 %v3105
        %v3457 = vpop.f32.mrb[0].mxu0
        %v3458 = vadd.f32 %v3409, %v3457
        %v3459 = vpop.f32.mrb[0].mxu0
        %v3460 = vpop.f32.mrb[0].mxu0
        %v3461 = vadd.f32 %v3412, %v3460
        %v3462 = vpop.f32.mrb[0].mxu0
        %3463 = vmatprep.mubr.bf16.mxu0 %v3110
        %3464 = vmatmul.mubr.bf16.gmra.mrb[0].mxu0 %v3109
        %v3465 = vpop.f32.mrb[0].mxu0
        %v3466 = vadd.f32 %v3417, %v3465
        %v3467 = vpop.f32.mrb[0].mxu0
        %v3468 = vpop.f32.mrb[0].mxu0
        %v3469 = vadd.f32 %v3420, %v3468
        %v3470 = vpop.f32.mrb[0].mxu0
        %3471 = vdwg.mxu0
        %v3472 = vadd.f32 %v2761, %v3458
        %v3473 = vadd.f32 %v2762, %v3461
        %v3474 = vadd.f32 %v2763, %v3466
        %v3475 = vadd.f32 %v2764, %v3469
        %3476 = vadd.xlane.f32.xlu0 %v3472
        %v3477 = vpop.xlane.xlu0 %3476
        %3478 = vadd.xlane.f32.xlu0 %v3473
        %v3479 = vpop.xlane.xlu0 %3478
        %3480 = vadd.xlane.f32.xlu0 %v3474
        %v3481 = vpop.xlane.xlu0 %3480
        %3482 = vadd.xlane.f32.xlu0 %v3475
        %v3483 = vpop.xlane.xlu0 %3482
        %v3484 = vmul.f32 %v3477, %v2049
        %v3485 = vmul.f32 %v3479, %v2049
        %v3486 = vmul.f32 %v3481, %v2049
        %v3487 = vmul.f32 %v3483, %v2049
        %v3488 = vsub.f32 %v3472, %v3484
        %v3489 = vsub.f32 %v3473, %v3485
        %v3490 = vsub.f32 %v3474, %v3486
        %v3491 = vsub.f32 %v3475, %v3487
        %v3492 = vmul.f32 %v3488, %v3488
        %v3493 = vmul.f32 %v3489, %v3489
        %v3494 = vmul.f32 %v3490, %v3490
        %v3495 = vmul.f32 %v3491, %v3491
        %3496 = vadd.xlane.f32.xlu0 %v3492
        %v3497 = vpop.xlane.xlu0 %3496
        %3498 = vadd.xlane.f32.xlu0 %v3493
        %v3499 = vpop.xlane.xlu0 %3498
        %3500 = vadd.xlane.f32.xlu0 %v3494
        %v3501 = vpop.xlane.xlu0 %3500
        %3502 = vadd.xlane.f32.xlu0 %v3495
        %v3503 = vpop.xlane.xlu0 %3502
        %v3504 = vmul.f32 %v3497, %v2049
        %v3505 = vmul.f32 %v3499, %v2049
        %v3506 = vmul.f32 %v3501, %v2049
        %v3507 = vmul.f32 %v3503, %v2049
        %v3508 = vadd.f32 %v3504, 1e-05
        %v3509 = vadd.f32 %v3505, 1e-05
        %v3510 = vadd.f32 %v3506, 1e-05
        %v3511 = vadd.f32 %v3507, 1e-05
        %v3512 = vrsqrt.pop %v3508
        %v3513 = vrsqrt.pop %v3509
        %v3514 = vrsqrt.pop %v3510
        %v3515 = vrsqrt.pop %v3511
        %v3516 = vmul.f32 %v3488, %v3512
        %v3517 = vmul.f32 %v3489, %v3513
        %v3518 = vmul.f32 %v3490, %v3514
        %v3519 = vmul.f32 %v3491, %v3515
        %v3520 = vld [vmem:[%s1071] sm:$0x1]
        %v3522 = vlaneseq
        %v3523 = vshrl.u32 %v3522, 7
        %v3524 = vsub.s32 0, %v3523
        %v3525 = vrot.slane %v3520, %v3524
        %v3527 = vmul.f32 %v3516, %v3525
        %v3528 = vmul.f32 %v3517, %v3525
        %v3529 = vmul.f32 %v3518, %v3525
        %v3530 = vmul.f32 %v3519, %v3525
        %v3531 = vld [vmem:[%s1074] sm:$0x1]
        %v3533 = vlaneseq
        %v3534 = vshrl.u32 %v3533, 7
        %v3535 = vsub.s32 0, %v3534
        %v3536 = vrot.slane %v3531, %v3535
        %v3538 = vadd.f32 %v3527, %v3536
        %v3539 = vadd.f32 %v3528, %v3536
        %v3540 = vadd.f32 %v3529, %v3536
        %v3541 = vadd.f32 %v3530, %v3536
        %3542 = vst [vmem:[#allocation2] sm:$0xff] %v3538
        %3543 = vst [vmem:[#allocation2 + $0x8] sm:$0xff] %v3539
        %3544 = vst [vmem:[#allocation2 + $0x10] sm:$0xff] %v3540
        %3545 = vst [vmem:[#allocation2 + $0x18] sm:$0xff] %v3541
        %p3546 = scmp.eq.s32.totalorder %s42, 1
        // Predicated region
        $region121: #{fwd.1} parent=111 // pred_check
          %p3547 = pneg %p3546
        $region122: #{fwd.1} parent=111 // pred_check_branch
          %3549 = sbr.rel (%p3547) target = $region124
        $region123: #{fwd.1} parent=111 // pred_region
          %v3550 = vpack.c.bf16 %v3539, %v3538
          %v3551 = vpack.c.bf16 %v3541, %v3540
          %v3552 = vld [vmem:[%s22] sm:$0xf]
          %v3553 = vld [vmem:[%s22 + $0x4] sm:$0xf]
          %v3554 = vld [vmem:[%s22 + $0x8] sm:$0xf]
          %v3555 = vld [vmem:[%s22 + $0xc] sm:$0xf]
          %v3556 = vld [vmem:[%s22 + $0x10] sm:$0xf]
          %v3557 = vld [vmem:[%s22 + $0x14] sm:$0xf]
          %v3558 = vld [vmem:[%s22 + $0x18] sm:$0xf]
          %v3559 = vld [vmem:[%s22 + $0x1c] sm:$0xf]
          %v3560 = vld [vmem:[%s22 + $0x20] sm:$0xf]
          %v3561 = vld [vmem:[%s22 + $0x24] sm:$0xf]
          %v3562 = vld [vmem:[%s22 + $0x28] sm:$0xf]
          %v3563 = vld [vmem:[%s22 + $0x2c] sm:$0xf]
          %v3564 = vld [vmem:[%s22 + $0x30] sm:$0xf]
          %v3565 = vld [vmem:[%s22 + $0x34] sm:$0xf]
          %v3566 = vld [vmem:[%s22 + $0x38] sm:$0xf]
          %v3567 = vld [vmem:[%s22 + $0x3c] sm:$0xf]
          %v3584 = vunpack.c.l.b16 %v3552
          %v3585 = vunpack.c.l.b16 %v3553
          %v3586 = vunpack.c.l.b16 %v3554
          %v3587 = vunpack.c.l.b16 %v3555
          %v3588 = vunpack.c.l.b16 %v3556
          %v3589 = vunpack.c.l.b16 %v3557
          %v3590 = vunpack.c.l.b16 %v3558
          %v3591 = vunpack.c.l.b16 %v3559
          %v3592 = vunpack.c.l.b16 %v3560
          %v3593 = vunpack.c.l.b16 %v3561
          %v3594 = vunpack.c.l.b16 %v3562
          %v3595 = vunpack.c.l.b16 %v3563
          %v3596 = vunpack.c.l.b16 %v3564
          %v3597 = vunpack.c.l.b16 %v3565
          %v3598 = vunpack.c.l.b16 %v3566
          %v3599 = vunpack.c.l.b16 %v3567
          %v3600 = vpack.c.b16 %v3585, %v3584
          %v3601 = vpack.c.b16 %v3587, %v3586
          %v3602 = vpack.c.b16 %v3589, %v3588
          %v3603 = vpack.c.b16 %v3591, %v3590
          %v3604 = vpack.c.b16 %v3593, %v3592
          %v3605 = vpack.c.b16 %v3595, %v3594
          %v3606 = vpack.c.b16 %v3597, %v3596
          %v3607 = vpack.c.b16 %v3599, %v3598
          %3616 = vmatprep.subr.bf16.mxu0 0
          %3617 = vmatpush1.bf16.msra.mxu0 %v3600
          %3618 = vmatprep.subr.bf16.mxu0 0
          %3619 = vmatpush1.bf16.msra.mxu0 %v3601
          %3620 = vmatprep.subr.bf16.mxu0 0
          %3621 = vmatpush1.bf16.msra.mxu0 %v3602
          %3622 = vmatprep.subr.bf16.mxu0 0
          %3623 = vmatpush1.bf16.msra.mxu0 %v3603
          %3624 = vmatprep.subr.bf16.mxu0 0
          %3625 = vmatpush1.bf16.msra.mxu0 %v3604
          %3626 = vmatprep.subr.bf16.mxu0 0
          %3627 = vmatpush1.bf16.msra.mxu0 %v3605
          %3628 = vmatprep.subr.bf16.mxu0 0
          %3629 = vmatpush1.bf16.msra.mxu0 %v3606
          %3630 = vmatprep.subr.bf16.mxu0 0
          %3631 = vmatpush1.bf16.msra.mxu0 %v3607
          %3632 = vmatprep.subr.bf16.mxu0 0
          %3633 = vmatpush1.bf16.msra.mxu0 0
          %3634 = vmatprep.subr.bf16.mxu0 0
          %3635 = vmatpush1.bf16.msra.mxu0 0
          %3636 = vmatprep.subr.bf16.mxu0 0
          %3637 = vmatpush1.bf16.msra.mxu0 0
          %3638 = vmatprep.subr.bf16.mxu0 0
          %3639 = vmatpush1.bf16.msra.mxu0 0
          %3640 = vmatprep.subr.bf16.mxu0 0
          %3641 = vmatpush1.bf16.msra.mxu0 0
          %3642 = vmatprep.subr.bf16.mxu0 0
          %3643 = vmatpush1.bf16.msra.mxu0 0
          %3644 = vmatprep.subr.bf16.mxu0 0
          %3645 = vmatpush1.bf16.msra.mxu0 0
          %3646 = vmatprep.subr.bf16.mxu0 0
          %3647 = vmatpush1.bf16.msra.mxu0 0
          %3648 = vmatprep.mubr.bf16.mxu0 0
          %3649 = vmatmul.mubr.bf16.gmra.mrb[0].mxu0 %v3550
          %v3650 = vpop.f32.mrb[0].mxu0
          %v3651 = vadd.f32 0.0, %v3650
          %v3652 = vpop.f32.mrb[0].mxu0
          %v3653 = vpop.f32.mrb[0].mxu0
          %v3654 = vadd.f32 0.0, %v3653
          %v3655 = vpop.f32.mrb[0].mxu0
          %3656 = vmatprep.mubr.bf16.mxu0 0
          %3657 = vmatmul.mubr.bf16.gmra.mrb[0].mxu0 %v3551
          %v3658 = vpop.f32.mrb[0].mxu0
          %v3659 = vadd.f32 0.0, %v3658
          %v3660 = vpop.f32.mrb[0].mxu0
          %v3661 = vpop.f32.mrb[0].mxu0
          %v3662 = vadd.f32 0.0, %v3661
          %v3663 = vpop.f32.mrb[0].mxu0
          %3664 = vdwg.mxu0
          %3665 = vst [vmem:[%s1080] sm:$0xff] %v3651
          %3666 = vst [vmem:[%s1080 + $0x8] sm:$0xff] %v3654
          %3667 = vst [vmem:[%s1080 + $0x10] sm:$0xff] %v3659
          %3668 = vst [vmem:[%s1080 + $0x18] sm:$0xff] %v3662
        $region124: #{fwd.1} parent=111 // pred_fallthru
          _
        %s3669 = smul.u32 2, %s41
        %p3670 = scmp.lt.s32.totalorder %s3669, 1
        %s3671 = scalar_select %p3670, %s3669, 1
        %s3672 = smul.addr %s3671, 2
        %s3673 = smul.addr %s3672, 8
        %s3674 = scalar_lea.vmem %s23, %s3673
        // Predicated region
        $region125: #{fwd.1} parent=111 // pred_check
          %p3675 = pneg %p655
        $region126: #{fwd.1} parent=111 // pred_check_branch
          %3677 = sbr.rel (%p3675) target = $region128
        $region127: #{fwd.1} parent=111 // pred_region
          %s3678 = smul.u32 2, %s41
        $region128: #{fwd.1} parent=111 // pred_fallthru
          _
        // Predicated region
        $region129: #{fwd.1} parent=111 // pred_check
          %p3679 = pneg %p655
        $region130: #{fwd.1} parent=111 // pred_check_branch
          %3681 = sbr.rel (%p3679) target = $region132
        $region131: #{fwd.1} parent=111 // pred_region
          %s3682 = smul.u32 2, %s41
          %p3683 = scmp.lt.s32.totalorder %s3682, 1
          %s3684 = scalar_select %p3683, %s3682, 1
          %s3685 = smul.addr %s3684, 2
          %s3686 = smul.addr %s3685, 8
          %s3687 = scalar_lea.vmem %s23, %s3686
        $region132: #{fwd.1} parent=111 // pred_fallthru
          _
      $region112: #{fwd.1} parent=5 // pred_fallthru
        _
      %p3688 = scmp.le.s32.totalorder 2, %s32
      // Predicated region
      $region133: #{fwd.1} parent=5 // pred_check
        %p3689 = pneg %p3688
      $region134: #{fwd.1} parent=5 // pred_check_branch
        %3691 = sbr.rel (%p3689) target = $region136
      $region135: #{fwd.1} parent=5 // pred_region
        %s3692 = ssub.s32 %s32, 2
      $region136: #{fwd.1} parent=5 // pred_fallthru
        _
    $region6: #{fwd.1} parent=1 // loop_footer
      %s36 = sadd.s32 1, %s32
    $region7: #{fwd.1} parent=1 // loop_footer_branch
      %31 = sbr.rel target = $region3
    $region8: #{fwd.1} parent=1 // loop_exit
      _
    %3693 = vsyncpa [#allocation4], 1
    %s3694 = scalar_lea.sflag [#allocation4], 1
    %3695 = vsyncpa %s3694, 1

</llo_original>
